<compile_context>
chip_gen: v6e
topology: v6e:2x2x1
jax: 0.10.0
libtpu: 0.0.40
codegen_flags: <defaults>
</compile_context>

<pallas_src>
import jax
import jax.numpy as jnp
import numpy as np
from jax.experimental import pallas as pl
from jax.experimental.pallas import tpu as pltpu

LN_EPS = 1e-5


def _round_up(x, m):
    return ((x + m - 1) // m) * m


def _device_defaults():
    """Best-effort (hw_tile, vmem_limit_bytes) per TPU generation."""
    try:
        kind = jax.devices()[0].device_kind.lower()
    except Exception:
        return 256, 64 * 1024 * 1024
    if "v5" in kind or "v6" in kind:
        # 128 MiB VMEM: large pipelined blocks amortize the ~0.35 us/step
        # overhead and cut the number of matmul epochs.
        return 512, 96 * 1024 * 1024
    # v7x and anything unknown: 64 MiB per-TC VMEM -> smaller tile, margin.
    return 128, 56 * 1024 * 1024


def _local_temporal_kernel(x_ref, ln_g_ref, ln_b_ref, wd_ref, bd_ref,
                           wc_ref, bc_ref, wu_ref, bu_ref, o_ref, hpad_ref):
    # x_ref block: [T, HWt, C]  (batch dim squeezed by BlockSpec).
    T, HWt, C = x_ref.shape
    Cb = wd_ref.shape[1]

    x = x_ref[...].astype(jnp.float32)

    # ---- LayerNorm over channel dim (lane axis) ----
    mean = jnp.mean(x, axis=-1, keepdims=True)
    centered = x - mean
    var = jnp.mean(centered * centered, axis=-1, keepdims=True)
    xn = centered * jax.lax.rsqrt(var + LN_EPS)
    xn = xn * ln_g_ref[...] + ln_b_ref[...]                    # (1, C) broadcasts

    # ---- down_proj: ONE [T*HWt, C] @ [C, Cb] MXU matmul (f32 accum) ----
    # (HWt % 8 == 0, so merging the leading dims is a free view.)
    wd = wd_ref[...]
    h = (jnp.dot(xn.reshape(T * HWt, C).astype(wd.dtype), wd,
                 preferred_element_type=jnp.float32)
         + bd_ref[...])                                        # [T*HWt, Cb]

    # ---- depthwise temporal conv (k=3, zero pad) via zero-padded scratch ----
    # hpad rows 0 and T+1 are the zero padding; rows 1..T hold h. The three
    # shifted whole-array slices replace the old per-t unrolled loop.
    hpad_ref[0] = jnp.zeros((HWt, Cb), jnp.float32)
    hpad_ref[T + 1] = jnp.zeros((HWt, Cb), jnp.float32)
    hpad_ref[pl.ds(1, T)] = h.reshape(T, HWt, Cb)

    wc = wc_ref[...]                                           # (3, Cb)
    y = (hpad_ref[pl.ds(0, T)] * wc[0]
         + hpad_ref[pl.ds(1, T)] * wc[1]
         + hpad_ref[pl.ds(2, T)] * wc[2]
         + bc_ref[...])                                        # [T, HWt, Cb]
    y = y * jax.nn.sigmoid(1.702 * y)                          # QuickGELU (EUP)

    # ---- up_proj: ONE [T*HWt, Cb] @ [Cb, C] matmul + one lane-dense store ----
    # For tighter bf16 accuracy keep down_proj input f32 and cast only here.
    wu = wu_ref[...]
    out = (jnp.dot(y.reshape(T * HWt, Cb).astype(wu.dtype), wu,
                   preferred_element_type=jnp.float32)
           + bu_ref[...])
    o_ref[...] = out.reshape(T, HWt, C).astype(o_ref.dtype)


def local_temporal_pallas_channels_last(xk, params, *, hw_tile=None,
                                        vmem_limit_bytes=None,
                                        matmul_dtype=jnp.bfloat16):
    """xk: [B, T, HW, C] (channel-last). Returns [B, T, HW, C].

    If the surrounding model runs bf16, pass xk in bf16: activations are
    upcast to f32 inside the kernel for LN/GELU, halving HBM traffic.
    """
    ln_g, ln_b, wd, bd, wc, bc, wu, bu = params
    B, T, HW, C = xk.shape
    Cb = wd.shape[1]

    d_tile, d_vmem = _device_defaults()
    hw_tile = d_tile if hw_tile is None else hw_tile
    vmem_limit_bytes = d_vmem if vmem_limit_bytes is None else vmem_limit_bytes

    # Pre-cast matmul weights; MXU bf16 is native peak on all generations.
    wd = wd.astype(matmul_dtype)
    wu = wu.astype(matmul_dtype)

    # Sublane-aligned spatial tile; pad HW if it does not divide evenly.
    # (Padded rows go through LN with var=0 -> finite rsqrt(eps)-scale values
    # that are sliced off below; the temporal conv never mixes HW positions,
    # so real outputs are exact.)
    # TODO(synk): pad C/Cb to multiples of 128 for lane-dense stores when the
    # model dimension is not already a multiple of 128.
    hw_t = _round_up(min(hw_tile, _round_up(HW, 8)), 8)
    HWp = _round_up(HW, hw_t)
    if HWp != HW:
        xk = jnp.pad(xk, ((0, 0), (0, 0), (0, HWp - HW), (0, 0)))
    S = HWp // hw_t

    # Advisory cost estimate (activation I/O at actual dtype + weights once).
    act_bytes = B * T * HWp * C * xk.dtype.itemsize * 2
    w_bytes = sum(int(np.prod(p.shape)) * p.dtype.itemsize
                  for p in (ln_g, ln_b, wd, bd, wc, bc, wu, bu))
    flops = 4 * B * T * HWp * C * Cb + 10 * B * T * HWp * Cb
    cost = pl.CostEstimate(flops=flops,
                           transcendentals=B * T * HWp * Cb,
                           bytes_accessed=act_bytes + w_bytes)

    def _wspec(shape, buffered):
        # Constant index map -> never re-DMA'd; single-buffer to reclaim the
        # dead second VMEM buffer (matters under v7x's 64 MiB per-TC cap).
        kwargs = {"pipeline_mode": pl.Buffered(1)} if buffered else {}
        return pl.BlockSpec(shape, lambda b, s: (0,) * len(shape), **kwargs)

    def _run(buffered_weights):
        return pl.pallas_call(
            _local_temporal_kernel,
            out_shape=jax.ShapeDtypeStruct((B, T, HWp, C), xk.dtype),
            grid_spec=pltpu.PrefetchScalarGridSpec(
                num_scalar_prefetch=0,
                grid=(B, S),
                in_specs=[
                    pl.BlockSpec((None, T, hw_t, C),
                                 lambda b, s: (b, 0, s, 0)),            # x
                    _wspec((1, C), buffered_weights),                    # ln gamma
                    _wspec((1, C), buffered_weights),                    # ln beta
                    _wspec((C, Cb), buffered_weights),                   # down W
                    _wspec((1, Cb), buffered_weights),                   # down b
                    _wspec((3, Cb), buffered_weights),                   # dw conv W
                    _wspec((1, Cb), buffered_weights),                   # dw conv b
                    _wspec((Cb, C), buffered_weights),                   # up W
                    _wspec((1, C), buffered_weights),                    # up b
                ],
                out_specs=pl.BlockSpec((None, T, hw_t, C),
                                       lambda b, s: (b, 0, s, 0)),
                scratch_shapes=[pltpu.VMEM((T + 2, hw_t, Cb), jnp.float32)],
            ),
            compiler_params=pltpu.CompilerParams(
                dimension_semantics=("parallel", "parallel"),
                vmem_limit_bytes=vmem_limit_bytes,
            ),
            cost_estimate=cost,
        )(xk, ln_g, ln_b, wd, bd, wc, bc, wu, bu)

    try:
        out = _run(buffered_weights=True)
    except Exception:
        # Installed JAX rejects single-buffered weight BlockSpecs; fall back
        # to default double-buffering (only costs dead VMEM, not correctness).
        out = _run(buffered_weights=False)

    if HWp != HW:
        out = out[:, :, :HW, :]
    return out


def local_temporal_pallas(x, params, *, hw_tile=None, vmem_limit_bytes=None,
                          matmul_dtype=jnp.bfloat16):
    """x: [B, C, T, H, W] (PyTorch NCDHW). Returns same shape/dtype."""
    B, C, T, H, W = x.shape
    # TODO(synk): keep activations in [B, T, HW, C] model-wide (use the
    # channels-last entry point above) to drop these two full HBM transposes —
    # the single largest end-to-end win for this mem-bound op.
    xk = jnp.transpose(x, (0, 2, 3, 4, 1)).reshape(B, T, H * W, C)
    out = local_temporal_pallas_channels_last(
        xk, params, hw_tile=hw_tile, vmem_limit_bytes=vmem_limit_bytes,
        matmul_dtype=matmul_dtype)
    return jnp.transpose(out.reshape(B, T, H, W, C), (0, 4, 1, 2, 3))


def local_temporal_reference(x, params):
    """Pure-JAX reference with identical semantics (for verification)."""
    ln_g, ln_b, wd, bd, wc, bc, wu, bu = params
    B, C, T, H, W = x.shape
    xp = jnp.transpose(x, (0, 2, 3, 4, 1))            # [B,T,H,W,C]
    mean = xp.mean(-1, keepdims=True)
    var = ((xp - mean) ** 2).mean(-1, keepdims=True)
    xn = (xp - mean) / jnp.sqrt(var + LN_EPS) * ln_g.reshape(C) + ln_b.reshape(C)
    h = jnp.einsum('bthwc,cd->bthwd', xn, wd) + bd.reshape(-1)
    hp = jnp.pad(h, ((0, 0), (1, 1), (0, 0), (0, 0), (0, 0)))
    y = (hp[:, :-2] * wc[0] + hp[:, 1:-1] * wc[1] + hp[:, 2:] * wc[2]
         + bc.reshape(-1))
    y = y * jax.nn.sigmoid(1.702 * y)
    out = jnp.einsum('bthwd,dc->bthwc', y, wu) + bu.reshape(-1)
    return jnp.transpose(out, (0, 4, 1, 2, 3))


def make_params(key, d_model):
    """Deterministic parameter init (kernel-friendly layouts)."""
    d_bottleneck = d_model // 2
    ks = jax.random.split(key, 8)
    scale = 0.1
    ln_g = 1.0 + scale * jax.random.normal(ks[0], (1, d_model), jnp.float32)
    ln_b = scale * jax.random.normal(ks[1], (1, d_model), jnp.float32)
    # down_proj: Conv3d weight [Cb, C, 1,1,1] -> matmul layout [C, Cb]
    wd = scale * jax.random.normal(ks[2], (d_model, d_bottleneck), jnp.float32)
    bd = scale * jax.random.normal(ks[3], (1, d_bottleneck), jnp.float32)
    # depthwise conv: weight [Cb, 1, 3, 1, 1] -> [3, Cb]
    wc = scale * jax.random.normal(ks[4], (3, d_bottleneck), jnp.float32)
    bc = scale * jax.random.normal(ks[5], (1, d_bottleneck), jnp.float32)
    # up_proj: Conv3d weight [C, Cb, 1,1,1] -> [Cb, C]
    # (module zero-inits this; random here so the kernel path is non-trivial)
    wu = scale * jax.random.normal(ks[6], (d_bottleneck, d_model), jnp.float32)
    bu = scale * jax.random.normal(ks[7], (1, d_model), jnp.float32)
    return (ln_g, ln_b, wd, bd, wc, bc, wu, bu)


if __name__ == "__main__":
    key = jax.random.PRNGKey(0)
    k_x, k_p = jax.random.split(key)

    B, d_model, T, H, W = 2, 32, 8, 4, 4
    x = jax.random.normal(k_x, (B, d_model, T, H, W), jnp.float32)
    params = make_params(k_p, d_model)

    ref = jax.block_until_ready(local_temporal_reference(x, params))

    # Default perf path: bf16 matmul inputs, f32 accumulation/elementwise.
    out_bf16 = jax.block_until_ready(local_temporal_pallas(x, params))
    assert out_bf16.shape == x.shape and out_bf16.dtype == x.dtype
    np.testing.assert_allclose(np.asarray(out_bf16), np.asarray(ref),
                               rtol=2e-2, atol=2e-2)

    # Exact path (f32 matmul inputs): tight tolerance.
    out_f32 = jax.block_until_ready(
        local_temporal_pallas(x, params, matmul_dtype=jnp.float32))
    assert out_f32.shape == x.shape and out_f32.dtype == x.dtype
    np.testing.assert_allclose(np.asarray(out_f32), np.asarray(ref),
                               rtol=1e-4, atol=1e-4)

    print("KERNEL_OK")
</pallas_src>

<mosaic_0001>
module attributes {stable_mosaic.version = 11 : i64} {
  func.func @_local_temporal_kernel(%arg0: i32, %arg1: i32, %arg2: memref<1x8x16x32xf32, #tpu.memory_space<vmem>>, %arg3: memref<1x32xf32, #tpu.memory_space<vmem>>, %arg4: memref<1x32xf32, #tpu.memory_space<vmem>>, %arg5: memref<32x16xbf16, #tpu.memory_space<vmem>>, %arg6: memref<1x16xf32, #tpu.memory_space<vmem>>, %arg7: memref<3x16xf32, #tpu.memory_space<vmem>>, %arg8: memref<1x16xf32, #tpu.memory_space<vmem>>, %arg9: memref<16x32xbf16, #tpu.memory_space<vmem>>, %arg10: memref<1x32xf32, #tpu.memory_space<vmem>>, %arg11: memref<1x8x16x32xf32, #tpu.memory_space<vmem>>, %arg12: memref<10x16x16xf32, #tpu.memory_space<vmem>>) attributes {dimension_semantics = [#tpu.dimension_semantics<parallel>, #tpu.dimension_semantics<parallel>], iteration_bounds = array<i64: 2, 1>, scalar_prefetch = 0 : i64, scratch_operands = 1 : i64, tpu.core_type = #tpu.core_type<tc>, window_params = [{transform_indices = @transform_0, window_bounds = array<i64: 1, 8, 16, 32>}, {pipeline_mode = #tpu.pipeline_mode<synchronous>, transform_indices = @transform_1, window_bounds = array<i64: 1, 32>}, {pipeline_mode = #tpu.pipeline_mode<synchronous>, transform_indices = @transform_2, window_bounds = array<i64: 1, 32>}, {pipeline_mode = #tpu.pipeline_mode<synchronous>, transform_indices = @transform_3, window_bounds = array<i64: 32, 16>}, {pipeline_mode = #tpu.pipeline_mode<synchronous>, transform_indices = @transform_4, window_bounds = array<i64: 1, 16>}, {pipeline_mode = #tpu.pipeline_mode<synchronous>, transform_indices = @transform_5, window_bounds = array<i64: 3, 16>}, {pipeline_mode = #tpu.pipeline_mode<synchronous>, transform_indices = @transform_6, window_bounds = array<i64: 1, 16>}, {pipeline_mode = #tpu.pipeline_mode<synchronous>, transform_indices = @transform_7, window_bounds = array<i64: 16, 32>}, {pipeline_mode = #tpu.pipeline_mode<synchronous>, transform_indices = @transform_8, window_bounds = array<i64: 1, 32>}, {transform_indices = @transform_9, window_bounds = array<i64: 1, 8, 16, 32>}]} {
    %c0 = arith.constant 0 : index
    %c0_0 = arith.constant 0 : index
    %c0_1 = arith.constant 0 : index
    %c0_2 = arith.constant 0 : index
    %0 = vector.load %arg2[%c0, %c0_0, %c0_1, %c0_2] : memref<1x8x16x32xf32, #tpu.memory_space<vmem>>, vector<1x8x16x32xf32>
    %1 = vector.shape_cast %0 : vector<1x8x16x32xf32> to vector<8x16x32xf32>
    %cst = arith.constant dense<0.000000e+00> : vector<8x16xf32>
    %2 = vector.multi_reduction <add>, %1, %cst [2] : vector<8x16x32xf32> to vector<8x16xf32>
    %3 = vector.shape_cast %2 : vector<8x16xf32> to vector<8x16x1xf32>
    %cst_3 = arith.constant 3.200000e+01 : f32
    %4 = vector.broadcast %cst_3 : f32 to vector<8x16x1xf32>
    %5 = arith.divf %3, %4 : vector<8x16x1xf32>
    %6 = vector.broadcast %5 : vector<8x16x1xf32> to vector<8x16x32xf32>
    %7 = arith.subf %1, %6 : vector<8x16x32xf32>
    %8 = arith.mulf %7, %7 : vector<8x16x32xf32>
    %cst_4 = arith.constant dense<0.000000e+00> : vector<8x16xf32>
    %9 = vector.multi_reduction <add>, %8, %cst_4 [2] : vector<8x16x32xf32> to vector<8x16xf32>
    %10 = vector.shape_cast %9 : vector<8x16xf32> to vector<8x16x1xf32>
    %cst_5 = arith.constant 3.200000e+01 : f32
    %11 = vector.broadcast %cst_5 : f32 to vector<8x16x1xf32>
    %12 = arith.divf %10, %11 : vector<8x16x1xf32>
    %cst_6 = arith.constant 9.99999974E-6 : f32
    %13 = vector.broadcast %cst_6 : f32 to vector<8x16x1xf32>
    %14 = arith.addf %12, %13 : vector<8x16x1xf32>
    %15 = math.rsqrt %14 : vector<8x16x1xf32>
    %16 = vector.broadcast %15 : vector<8x16x1xf32> to vector<8x16x32xf32>
    %17 = arith.mulf %7, %16 : vector<8x16x32xf32>
    %c0_7 = arith.constant 0 : index
    %c0_8 = arith.constant 0 : index
    %18 = vector.load %arg3[%c0_7, %c0_8] : memref<1x32xf32, #tpu.memory_space<vmem>>, vector<1x32xf32>
    %19 = vector.shape_cast %18 : vector<1x32xf32> to vector<1x1x32xf32>
    %20 = vector.broadcast %19 : vector<1x1x32xf32> to vector<8x16x32xf32>
    %21 = arith.mulf %17, %20 : vector<8x16x32xf32>
    %c0_9 = arith.constant 0 : index
    %c0_10 = arith.constant 0 : index
    %22 = vector.load %arg4[%c0_9, %c0_10] : memref<1x32xf32, #tpu.memory_space<vmem>>, vector<1x32xf32>
    %23 = vector.shape_cast %22 : vector<1x32xf32> to vector<1x1x32xf32>
    %24 = vector.broadcast %23 : vector<1x1x32xf32> to vector<8x16x32xf32>
    %25 = arith.addf %21, %24 : vector<8x16x32xf32>
    %c0_11 = arith.constant 0 : index
    %c0_12 = arith.constant 0 : index
    %26 = vector.load %arg5[%c0_11, %c0_12] : memref<32x16xbf16, #tpu.memory_space<vmem>>, vector<32x16xbf16>
    %27 = vector.shape_cast %25 : vector<8x16x32xf32> to vector<128x32xf32>
    %28 = arith.truncf %27 : vector<128x32xf32> to vector<128x32xbf16>
    %cst_13 = arith.constant dense<0.000000e+00> : vector<128x16xf32>
    %29 = tpu.matmul %28, %26, %cst_13 {dimension_numbers = #tpu.dot_dimension_numbers<[1], [0], [0], [1], [0, 0, 1, 1], [], []>} : vector<128x32xbf16>, vector<32x16xbf16>, vector<128x16xf32> -> vector<128x16xf32>
    %c0_14 = arith.constant 0 : index
    %c0_15 = arith.constant 0 : index
    %30 = vector.load %arg6[%c0_14, %c0_15] : memref<1x16xf32, #tpu.memory_space<vmem>>, vector<1x16xf32>
    %31 = vector.broadcast %30 : vector<1x16xf32> to vector<128x16xf32>
    %32 = arith.addf %29, %31 : vector<128x16xf32>
    %cst_16 = arith.constant 0.000000e+00 : f32
    %33 = vector.broadcast %cst_16 : f32 to vector<16x16xf32>
    %c0_17 = arith.constant 0 : index
    %c0_18 = arith.constant 0 : index
    %c0_19 = arith.constant 0 : index
    %34 = vector.load %arg12[%c0_17, %c0_18, %c0_19] : memref<10x16x16xf32, #tpu.memory_space<vmem>>, vector<1x16x16xf32>
    %35 = vector.shape_cast %34 : vector<1x16x16xf32> to vector<16x16xf32>
    %36 = vector.shape_cast %33 : vector<16x16xf32> to vector<1x16x16xf32>
    tpu.vector_store %arg12[%c0_17, %c0_18, %c0_19], %36 {strides = array<i32>} : memref<10x16x16xf32, #tpu.memory_space<vmem>>, vector<1x16x16xf32>,
    %cst_20 = arith.constant 0.000000e+00 : f32
    %37 = vector.broadcast %cst_20 : f32 to vector<16x16xf32>
    %c9 = arith.constant 9 : index
    %c0_21 = arith.constant 0 : index
    %c0_22 = arith.constant 0 : index
    %38 = vector.load %arg12[%c9, %c0_21, %c0_22] : memref<10x16x16xf32, #tpu.memory_space<vmem>>, vector<1x16x16xf32>
    %39 = vector.shape_cast %38 : vector<1x16x16xf32> to vector<16x16xf32>
    %40 = vector.shape_cast %37 : vector<16x16xf32> to vector<1x16x16xf32>
    tpu.vector_store %arg12[%c9, %c0_21, %c0_22], %40 {strides = array<i32>} : memref<10x16x16xf32, #tpu.memory_space<vmem>>, vector<1x16x16xf32>,
    %41 = vector.shape_cast %32 : vector<128x16xf32> to vector<8x16x16xf32>
    %c1 = arith.constant 1 : index
    %c0_23 = arith.constant 0 : index
    %c0_24 = arith.constant 0 : index
    %42 = vector.load %arg12[%c1, %c0_23, %c0_24] : memref<10x16x16xf32, #tpu.memory_space<vmem>>, vector<8x16x16xf32>
    tpu.vector_store %arg12[%c1, %c0_23, %c0_24], %41 {strides = array<i32>} : memref<10x16x16xf32, #tpu.memory_space<vmem>>, vector<8x16x16xf32>,
    %c0_25 = arith.constant 0 : index
    %c0_26 = arith.constant 0 : index
    %43 = vector.load %arg7[%c0_25, %c0_26] : memref<3x16xf32, #tpu.memory_space<vmem>>, vector<3x16xf32>
    %c0_27 = arith.constant 0 : index
    %c0_28 = arith.constant 0 : index
    %c0_29 = arith.constant 0 : index
    %44 = vector.load %arg12[%c0_27, %c0_28, %c0_29] : memref<10x16x16xf32, #tpu.memory_space<vmem>>, vector<8x16x16xf32>
    %45 = vector.extract_strided_slice %43 {offsets = [0, 0], sizes = [1, 16], strides = [1, 1]} : vector<3x16xf32> to vector<1x16xf32>
    %46 = vector.shape_cast %45 : vector<1x16xf32> to vector<16xf32>
    %47 = vector.shape_cast %46 : vector<16xf32> to vector<1x1x16xf32>
    %48 = vector.broadcast %47 : vector<1x1x16xf32> to vector<8x16x16xf32>
    %49 = arith.mulf %44, %48 : vector<8x16x16xf32>
    %c1_30 = arith.constant 1 : index
    %c0_31 = arith.constant 0 : index
    %c0_32 = arith.constant 0 : index
    %50 = vector.load %arg12[%c1_30, %c0_31, %c0_32] : memref<10x16x16xf32, #tpu.memory_space<vmem>>, vector<8x16x16xf32>
    %51 = vector.extract_strided_slice %43 {offsets = [1, 0], sizes = [1, 16], strides = [1, 1]} : vector<3x16xf32> to vector<1x16xf32>
    %52 = vector.shape_cast %51 : vector<1x16xf32> to vector<16xf32>
    %53 = vector.shape_cast %52 : vector<16xf32> to vector<1x1x16xf32>
    %54 = vector.broadcast %53 : vector<1x1x16xf32> to vector<8x16x16xf32>
    %55 = arith.mulf %50, %54 : vector<8x16x16xf32>
    %56 = arith.addf %49, %55 : vector<8x16x16xf32>
    %c2 = arith.constant 2 : index
    %c0_33 = arith.constant 0 : index
    %c0_34 = arith.constant 0 : index
    %57 = vector.load %arg12[%c2, %c0_33, %c0_34] : memref<10x16x16xf32, #tpu.memory_space<vmem>>, vector<8x16x16xf32>
    %58 = vector.extract_strided_slice %43 {offsets = [2, 0], sizes = [1, 16], strides = [1, 1]} : vector<3x16xf32> to vector<1x16xf32>
    %59 = vector.shape_cast %58 : vector<1x16xf32> to vector<16xf32>
    %60 = vector.shape_cast %59 : vector<16xf32> to vector<1x1x16xf32>
    %61 = vector.broadcast %60 : vector<1x1x16xf32> to vector<8x16x16xf32>
    %62 = arith.mulf %57, %61 : vector<8x16x16xf32>
    %63 = arith.addf %56, %62 : vector<8x16x16xf32>
    %c0_35 = arith.constant 0 : index
    %c0_36 = arith.constant 0 : index
    %64 = vector.load %arg8[%c0_35, %c0_36] : memref<1x16xf32, #tpu.memory_space<vmem>>, vector<1x16xf32>
    %65 = vector.shape_cast %64 : vector<1x16xf32> to vector<1x1x16xf32>
    %66 = vector.broadcast %65 : vector<1x1x16xf32> to vector<8x16x16xf32>
    %67 = arith.addf %63, %66 : vector<8x16x16xf32>
    %cst_37 = arith.constant 1.702000e+00 : f32
    %68 = vector.broadcast %cst_37 : f32 to vector<8x16x16xf32>
    %69 = arith.mulf %68, %67 : vector<8x16x16xf32>
    %70 = arith.negf %69 : vector<8x16x16xf32>
    %71 = math.exp %70 : vector<8x16x16xf32>
    %cst_38 = arith.constant 1.000000e+00 : f32
    %72 = vector.broadcast %cst_38 : f32 to vector<8x16x16xf32>
    %73 = arith.addf %72, %71 : vector<8x16x16xf32>
    %74 = arith.divf %72, %73 : vector<8x16x16xf32>
    %75 = arith.mulf %67, %74 : vector<8x16x16xf32>
    %c0_39 = arith.constant 0 : index
    %c0_40 = arith.constant 0 : index
    %76 = vector.load %arg9[%c0_39, %c0_40] : memref<16x32xbf16, #tpu.memory_space<vmem>>, vector<16x32xbf16>
    %77 = vector.shape_cast %75 : vector<8x16x16xf32> to vector<128x16xf32>
    %78 = arith.truncf %77 : vector<128x16xf32> to vector<128x16xbf16>
    %cst_41 = arith.constant dense<0.000000e+00> : vector<128x32xf32>
    %79 = tpu.matmul %78, %76, %cst_41 {dimension_numbers = #tpu.dot_dimension_numbers<[1], [0], [0], [1], [0, 0, 1, 1], [], []>} : vector<128x16xbf16>, vector<16x32xbf16>, vector<128x32xf32> -> vector<128x32xf32>
    %c0_42 = arith.constant 0 : index
    %c0_43 = arith.constant 0 : index
    %80 = vector.load %arg10[%c0_42, %c0_43] : memref<1x32xf32, #tpu.memory_space<vmem>>, vector<1x32xf32>
    %81 = vector.broadcast %80 : vector<1x32xf32> to vector<128x32xf32>
    %82 = arith.addf %79, %81 : vector<128x32xf32>
    %83 = vector.shape_cast %82 : vector<128x32xf32> to vector<8x16x32xf32>
    %c0_44 = arith.constant 0 : index
    %c0_45 = arith.constant 0 : index
    %c0_46 = arith.constant 0 : index
    %c0_47 = arith.constant 0 : index
    %84 = vector.load %arg11[%c0_44, %c0_45, %c0_46, %c0_47] : memref<1x8x16x32xf32, #tpu.memory_space<vmem>>, vector<1x8x16x32xf32>
    %85 = vector.shape_cast %84 : vector<1x8x16x32xf32> to vector<8x16x32xf32>
    %86 = vector.shape_cast %83 : vector<8x16x32xf32> to vector<1x8x16x32xf32>
    tpu.vector_store %arg11[%c0_44, %c0_45, %c0_46, %c0_47], %86 {strides = array<i32>} : memref<1x8x16x32xf32, #tpu.memory_space<vmem>>, vector<1x8x16x32xf32>,
    return
  }
  func.func @transform_0(%arg0: i32, %arg1: i32) -> (i32, i32, i32, i32) {
    %c0_i32 = arith.constant 0 : i32
    %c0_i32_0 = arith.constant 0 : i32
    %c0_i32_1 = arith.constant 0 : i32
    return %arg0, %c0_i32, %arg1, %c0_i32_0 : i32, i32, i32, i32
  }
  func.func @transform_1(%arg0: i32, %arg1: i32) -> (i32, i32) {
    %c0_i32 = arith.constant 0 : i32
    %c0_i32_0 = arith.constant 0 : i32
    %c0_i32_1 = arith.constant 0 : i32
    return %c0_i32, %c0_i32_0 : i32, i32
  }
  func.func @transform_2(%arg0: i32, %arg1: i32) -> (i32, i32) {
    %c0_i32 = arith.constant 0 : i32
    %c0_i32_0 = arith.constant 0 : i32
    %c0_i32_1 = arith.constant 0 : i32
    return %c0_i32, %c0_i32_0 : i32, i32
  }
  func.func @transform_3(%arg0: i32, %arg1: i32) -> (i32, i32) {
    %c0_i32 = arith.constant 0 : i32
    %c0_i32_0 = arith.constant 0 : i32
    %c0_i32_1 = arith.constant 0 : i32
    return %c0_i32, %c0_i32_0 : i32, i32
  }
  func.func @transform_4(%arg0: i32, %arg1: i32) -> (i32, i32) {
    %c0_i32 = arith.constant 0 : i32
    %c0_i32_0 = arith.constant 0 : i32
    %c0_i32_1 = arith.constant 0 : i32
    return %c0_i32, %c0_i32_0 : i32, i32
  }
  func.func @transform_5(%arg0: i32, %arg1: i32) -> (i32, i32) {
    %c0_i32 = arith.constant 0 : i32
    %c0_i32_0 = arith.constant 0 : i32
    %c0_i32_1 = arith.constant 0 : i32
    return %c0_i32, %c0_i32_0 : i32, i32
  }
  func.func @transform_6(%arg0: i32, %arg1: i32) -> (i32, i32) {
    %c0_i32 = arith.constant 0 : i32
    %c0_i32_0 = arith.constant 0 : i32
    %c0_i32_1 = arith.constant 0 : i32
    return %c0_i32, %c0_i32_0 : i32, i32
  }
  func.func @transform_7(%arg0: i32, %arg1: i32) -> (i32, i32) {
    %c0_i32 = arith.constant 0 : i32
    %c0_i32_0 = arith.constant 0 : i32
    %c0_i32_1 = arith.constant 0 : i32
    return %c0_i32, %c0_i32_0 : i32, i32
  }
  func.func @transform_8(%arg0: i32, %arg1: i32) -> (i32, i32) {
    %c0_i32 = arith.constant 0 : i32
    %c0_i32_0 = arith.constant 0 : i32
    %c0_i32_1 = arith.constant 0 : i32
    return %c0_i32, %c0_i32_0 : i32, i32
  }
  func.func @transform_9(%arg0: i32, %arg1: i32) -> (i32, i32, i32, i32) {
    %c0_i32 = arith.constant 0 : i32
    %c0_i32_0 = arith.constant 0 : i32
    %c0_i32_1 = arith.constant 0 : i32
    return %arg0, %c0_i32, %arg1, %c0_i32_0 : i32, i32, i32, i32
  }
}

module attributes {stable_mosaic.version = 11 : i64} {
  func.func @_local_temporal_kernel(%arg0: i32, %arg1: i32, %arg2: memref<1x8x16x32xf32, #tpu.memory_space<vmem>>, %arg3: memref<1x32xf32, #tpu.memory_space<vmem>>, %arg4: memref<1x32xf32, #tpu.memory_space<vmem>>, %arg5: memref<32x16xbf16, #tpu.memory_space<vmem>>, %arg6: memref<1x16xf32, #tpu.memory_space<vmem>>, %arg7: memref<3x16xf32, #tpu.memory_space<vmem>>, %arg8: memref<1x16xf32, #tpu.memory_space<vmem>>, %arg9: memref<16x32xbf16, #tpu.memory_space<vmem>>, %arg10: memref<1x32xf32, #tpu.memory_space<vmem>>, %arg11: memref<1x8x16x32xf32, #tpu.memory_space<vmem>>, %arg12: memref<10x16x16xf32, #tpu.memory_space<vmem>>) attributes {dimension_semantics = [#tpu.dimension_semantics<parallel>, #tpu.dimension_semantics<parallel>], iteration_bounds = array<i64: 2, 1>, scalar_prefetch = 0 : i64, scratch_operands = 1 : i64, tpu.core_type = #tpu.core_type<tc>, window_params = [{transform_indices = @transform_0, window_bounds = array<i64: 1, 8, 16, 32>}, {pipeline_mode = #tpu.pipeline_mode<synchronous>, transform_indices = @transform_1, window_bounds = array<i64: 1, 32>}, {pipeline_mode = #tpu.pipeline_mode<synchronous>, transform_indices = @transform_2, window_bounds = array<i64: 1, 32>}, {pipeline_mode = #tpu.pipeline_mode<synchronous>, transform_indices = @transform_3, window_bounds = array<i64: 32, 16>}, {pipeline_mode = #tpu.pipeline_mode<synchronous>, transform_indices = @transform_4, window_bounds = array<i64: 1, 16>}, {pipeline_mode = #tpu.pipeline_mode<synchronous>, transform_indices = @transform_5, window_bounds = array<i64: 3, 16>}, {pipeline_mode = #tpu.pipeline_mode<synchronous>, transform_indices = @transform_6, window_bounds = array<i64: 1, 16>}, {pipeline_mode = #tpu.pipeline_mode<synchronous>, transform_indices = @transform_7, window_bounds = array<i64: 16, 32>}, {pipeline_mode = #tpu.pipeline_mode<synchronous>, transform_indices = @transform_8, window_bounds = array<i64: 1, 32>}, {transform_indices = @transform_9, window_bounds = array<i64: 1, 8, 16, 32>}]} {
    %c0 = arith.constant 0 : index
    %c0_0 = arith.constant 0 : index
    %c0_1 = arith.constant 0 : index
    %c0_2 = arith.constant 0 : index
    %0 = vector.load %arg2[%c0, %c0_0, %c0_1, %c0_2] : memref<1x8x16x32xf32, #tpu.memory_space<vmem>>, vector<1x8x16x32xf32>
    %1 = vector.shape_cast %0 : vector<1x8x16x32xf32> to vector<8x16x32xf32>
    %cst = arith.constant dense<0.000000e+00> : vector<8x16xf32>
    %2 = vector.multi_reduction <add>, %1, %cst [2] : vector<8x16x32xf32> to vector<8x16xf32>
    %3 = vector.shape_cast %2 : vector<8x16xf32> to vector<8x16x1xf32>
    %cst_3 = arith.constant 3.200000e+01 : f32
    %4 = vector.broadcast %cst_3 : f32 to vector<8x16x1xf32>
    %5 = arith.divf %3, %4 : vector<8x16x1xf32>
    %6 = vector.broadcast %5 : vector<8x16x1xf32> to vector<8x16x32xf32>
    %7 = arith.subf %1, %6 : vector<8x16x32xf32>
    %8 = arith.mulf %7, %7 : vector<8x16x32xf32>
    %cst_4 = arith.constant dense<0.000000e+00> : vector<8x16xf32>
    %9 = vector.multi_reduction <add>, %8, %cst_4 [2] : vector<8x16x32xf32> to vector<8x16xf32>
    %10 = vector.shape_cast %9 : vector<8x16xf32> to vector<8x16x1xf32>
    %cst_5 = arith.constant 3.200000e+01 : f32
    %11 = vector.broadcast %cst_5 : f32 to vector<8x16x1xf32>
    %12 = arith.divf %10, %11 : vector<8x16x1xf32>
    %cst_6 = arith.constant 9.99999974E-6 : f32
    %13 = vector.broadcast %cst_6 : f32 to vector<8x16x1xf32>
    %14 = arith.addf %12, %13 : vector<8x16x1xf32>
    %15 = math.rsqrt %14 : vector<8x16x1xf32>
    %16 = vector.broadcast %15 : vector<8x16x1xf32> to vector<8x16x32xf32>
    %17 = arith.mulf %7, %16 : vector<8x16x32xf32>
    %c0_7 = arith.constant 0 : index
    %c0_8 = arith.constant 0 : index
    %18 = vector.load %arg3[%c0_7, %c0_8] : memref<1x32xf32, #tpu.memory_space<vmem>>, vector<1x32xf32>
    %19 = vector.shape_cast %18 : vector<1x32xf32> to vector<1x1x32xf32>
    %20 = vector.broadcast %19 : vector<1x1x32xf32> to vector<8x16x32xf32>
    %21 = arith.mulf %17, %20 : vector<8x16x32xf32>
    %c0_9 = arith.constant 0 : index
    %c0_10 = arith.constant 0 : index
    %22 = vector.load %arg4[%c0_9, %c0_10] : memref<1x32xf32, #tpu.memory_space<vmem>>, vector<1x32xf32>
    %23 = vector.shape_cast %22 : vector<1x32xf32> to vector<1x1x32xf32>
    %24 = vector.broadcast %23 : vector<1x1x32xf32> to vector<8x16x32xf32>
    %25 = arith.addf %21, %24 : vector<8x16x32xf32>
    %c0_11 = arith.constant 0 : index
    %c0_12 = arith.constant 0 : index
    %26 = vector.load %arg5[%c0_11, %c0_12] : memref<32x16xbf16, #tpu.memory_space<vmem>>, vector<32x16xbf16>
    %27 = vector.shape_cast %25 : vector<8x16x32xf32> to vector<128x32xf32>
    %28 = arith.truncf %27 : vector<128x32xf32> to vector<128x32xbf16>
    %cst_13 = arith.constant dense<0.000000e+00> : vector<128x16xf32>
    %29 = tpu.matmul %28, %26, %cst_13 {dimension_numbers = #tpu.dot_dimension_numbers<[1], [0], [0], [1], [0, 0, 1, 1], [], []>} : vector<128x32xbf16>, vector<32x16xbf16>, vector<128x16xf32> -> vector<128x16xf32>
    %c0_14 = arith.constant 0 : index
    %c0_15 = arith.constant 0 : index
    %30 = vector.load %arg6[%c0_14, %c0_15] : memref<1x16xf32, #tpu.memory_space<vmem>>, vector<1x16xf32>
    %31 = vector.broadcast %30 : vector<1x16xf32> to vector<128x16xf32>
    %32 = arith.addf %29, %31 : vector<128x16xf32>
    %cst_16 = arith.constant 0.000000e+00 : f32
    %33 = vector.broadcast %cst_16 : f32 to vector<16x16xf32>
    %c0_17 = arith.constant 0 : index
    %c0_18 = arith.constant 0 : index
    %c0_19 = arith.constant 0 : index
    %34 = vector.load %arg12[%c0_17, %c0_18, %c0_19] : memref<10x16x16xf32, #tpu.memory_space<vmem>>, vector<1x16x16xf32>
    %35 = vector.shape_cast %34 : vector<1x16x16xf32> to vector<16x16xf32>
    %36 = vector.shape_cast %33 : vector<16x16xf32> to vector<1x16x16xf32>
    tpu.vector_store %arg12[%c0_17, %c0_18, %c0_19], %36 {strides = array<i32>} : memref<10x16x16xf32, #tpu.memory_space<vmem>>, vector<1x16x16xf32>,
    %cst_20 = arith.constant 0.000000e+00 : f32
    %37 = vector.broadcast %cst_20 : f32 to vector<16x16xf32>
    %c9 = arith.constant 9 : index
    %c0_21 = arith.constant 0 : index
    %c0_22 = arith.constant 0 : index
    %38 = vector.load %arg12[%c9, %c0_21, %c0_22] : memref<10x16x16xf32, #tpu.memory_space<vmem>>, vector<1x16x16xf32>
    %39 = vector.shape_cast %38 : vector<1x16x16xf32> to vector<16x16xf32>
    %40 = vector.shape_cast %37 : vector<16x16xf32> to vector<1x16x16xf32>
    tpu.vector_store %arg12[%c9, %c0_21, %c0_22], %40 {strides = array<i32>} : memref<10x16x16xf32, #tpu.memory_space<vmem>>, vector<1x16x16xf32>,
    %41 = vector.shape_cast %32 : vector<128x16xf32> to vector<8x16x16xf32>
    %c1 = arith.constant 1 : index
    %c0_23 = arith.constant 0 : index
    %c0_24 = arith.constant 0 : index
    %42 = vector.load %arg12[%c1, %c0_23, %c0_24] : memref<10x16x16xf32, #tpu.memory_space<vmem>>, vector<8x16x16xf32>
    tpu.vector_store %arg12[%c1, %c0_23, %c0_24], %41 {strides = array<i32>} : memref<10x16x16xf32, #tpu.memory_space<vmem>>, vector<8x16x16xf32>,
    %c0_25 = arith.constant 0 : index
    %c0_26 = arith.constant 0 : index
    %43 = vector.load %arg7[%c0_25, %c0_26] : memref<3x16xf32, #tpu.memory_space<vmem>>, vector<3x16xf32>
    %c0_27 = arith.constant 0 : index
    %c0_28 = arith.constant 0 : index
    %c0_29 = arith.constant 0 : index
    %44 = vector.load %arg12[%c0_27, %c0_28, %c0_29] : memref<10x16x16xf32, #tpu.memory_space<vmem>>, vector<8x16x16xf32>
    %45 = vector.extract_strided_slice %43 {offsets = [0, 0], sizes = [1, 16], strides = [1, 1]} : vector<3x16xf32> to vector<1x16xf32>
    %46 = vector.shape_cast %45 : vector<1x16xf32> to vector<16xf32>
    %47 = vector.shape_cast %46 : vector<16xf32> to vector<1x1x16xf32>
    %48 = vector.broadcast %47 : vector<1x1x16xf32> to vector<8x16x16xf32>
    %49 = arith.mulf %44, %48 : vector<8x16x16xf32>
    %c1_30 = arith.constant 1 : index
    %c0_31 = arith.constant 0 : index
    %c0_32 = arith.constant 0 : index
    %50 = vector.load %arg12[%c1_30, %c0_31, %c0_32] : memref<10x16x16xf32, #tpu.memory_space<vmem>>, vector<8x16x16xf32>
    %51 = vector.extract_strided_slice %43 {offsets = [1, 0], sizes = [1, 16], strides = [1, 1]} : vector<3x16xf32> to vector<1x16xf32>
    %52 = vector.shape_cast %51 : vector<1x16xf32> to vector<16xf32>
    %53 = vector.shape_cast %52 : vector<16xf32> to vector<1x1x16xf32>
    %54 = vector.broadcast %53 : vector<1x1x16xf32> to vector<8x16x16xf32>
    %55 = arith.mulf %50, %54 : vector<8x16x16xf32>
    %56 = arith.addf %49, %55 : vector<8x16x16xf32>
    %c2 = arith.constant 2 : index
    %c0_33 = arith.constant 0 : index
    %c0_34 = arith.constant 0 : index
    %57 = vector.load %arg12[%c2, %c0_33, %c0_34] : memref<10x16x16xf32, #tpu.memory_space<vmem>>, vector<8x16x16xf32>
    %58 = vector.extract_strided_slice %43 {offsets = [2, 0], sizes = [1, 16], strides = [1, 1]} : vector<3x16xf32> to vector<1x16xf32>
    %59 = vector.shape_cast %58 : vector<1x16xf32> to vector<16xf32>
    %60 = vector.shape_cast %59 : vector<16xf32> to vector<1x1x16xf32>
    %61 = vector.broadcast %60 : vector<1x1x16xf32> to vector<8x16x16xf32>
    %62 = arith.mulf %57, %61 : vector<8x16x16xf32>
    %63 = arith.addf %56, %62 : vector<8x16x16xf32>
    %c0_35 = arith.constant 0 : index
    %c0_36 = arith.constant 0 : index
    %64 = vector.load %arg8[%c0_35, %c0_36] : memref<1x16xf32, #tpu.memory_space<vmem>>, vector<1x16xf32>
    %65 = vector.shape_cast %64 : vector<1x16xf32> to vector<1x1x16xf32>
    %66 = vector.broadcast %65 : vector<1x1x16xf32> to vector<8x16x16xf32>
    %67 = arith.addf %63, %66 : vector<8x16x16xf32>
    %cst_37 = arith.constant 1.702000e+00 : f32
    %68 = vector.broadcast %cst_37 : f32 to vector<8x16x16xf32>
    %69 = arith.mulf %68, %67 : vector<8x16x16xf32>
    %70 = arith.negf %69 : vector<8x16x16xf32>
    %71 = math.exp %70 : vector<8x16x16xf32>
    %cst_38 = arith.constant 1.000000e+00 : f32
    %72 = vector.broadcast %cst_38 : f32 to vector<8x16x16xf32>
    %73 = arith.addf %72, %71 : vector<8x16x16xf32>
    %74 = arith.divf %72, %73 : vector<8x16x16xf32>
    %75 = arith.mulf %67, %74 : vector<8x16x16xf32>
    %c0_39 = arith.constant 0 : index
    %c0_40 = arith.constant 0 : index
    %76 = vector.load %arg9[%c0_39, %c0_40] : memref<16x32xbf16, #tpu.memory_space<vmem>>, vector<16x32xbf16>
    %77 = vector.shape_cast %75 : vector<8x16x16xf32> to vector<128x16xf32>
    %78 = arith.truncf %77 : vector<128x16xf32> to vector<128x16xbf16>
    %cst_41 = arith.constant dense<0.000000e+00> : vector<128x32xf32>
    %79 = tpu.matmul %78, %76, %cst_41 {dimension_numbers = #tpu.dot_dimension_numbers<[1], [0], [0], [1], [0, 0, 1, 1], [], []>} : vector<128x16xbf16>, vector<16x32xbf16>, vector<128x32xf32> -> vector<128x32xf32>
    %c0_42 = arith.constant 0 : index
    %c0_43 = arith.constant 0 : index
    %80 = vector.load %arg10[%c0_42, %c0_43] : memref<1x32xf32, #tpu.memory_space<vmem>>, vector<1x32xf32>
    %81 = vector.broadcast %80 : vector<1x32xf32> to vector<128x32xf32>
    %82 = arith.addf %79, %81 : vector<128x32xf32>
    %83 = vector.shape_cast %82 : vector<128x32xf32> to vector<8x16x32xf32>
    %c0_44 = arith.constant 0 : index
    %c0_45 = arith.constant 0 : index
    %c0_46 = arith.constant 0 : index
    %c0_47 = arith.constant 0 : index
    %84 = vector.load %arg11[%c0_44, %c0_45, %c0_46, %c0_47] : memref<1x8x16x32xf32, #tpu.memory_space<vmem>>, vector<1x8x16x32xf32>
    %85 = vector.shape_cast %84 : vector<1x8x16x32xf32> to vector<8x16x32xf32>
    %86 = vector.shape_cast %83 : vector<8x16x32xf32> to vector<1x8x16x32xf32>
    tpu.vector_store %arg11[%c0_44, %c0_45, %c0_46, %c0_47], %86 {strides = array<i32>} : memref<1x8x16x32xf32, #tpu.memory_space<vmem>>, vector<1x8x16x32xf32>,
    return
  }
  func.func @transform_0(%arg0: i32, %arg1: i32) -> (i32, i32, i32, i32) {
    %c0_i32 = arith.constant 0 : i32
    %c0_i32_0 = arith.constant 0 : i32
    %c0_i32_1 = arith.constant 0 : i32
    return %arg0, %c0_i32, %arg1, %c0_i32_0 : i32, i32, i32, i32
  }
  func.func @transform_1(%arg0: i32, %arg1: i32) -> (i32, i32) {
    %c0_i32 = arith.constant 0 : i32
    %c0_i32_0 = arith.constant 0 : i32
    %c0_i32_1 = arith.constant 0 : i32
    return %c0_i32, %c0_i32_0 : i32, i32
  }
  func.func @transform_2(%arg0: i32, %arg1: i32) -> (i32, i32) {
    %c0_i32 = arith.constant 0 : i32
    %c0_i32_0 = arith.constant 0 : i32
    %c0_i32_1 = arith.constant 0 : i32
    return %c0_i32, %c0_i32_0 : i32, i32
  }
  func.func @transform_3(%arg0: i32, %arg1: i32) -> (i32, i32) {
    %c0_i32 = arith.constant 0 : i32
    %c0_i32_0 = arith.constant 0 : i32
    %c0_i32_1 = arith.constant 0 : i32
    return %c0_i32, %c0_i32_0 : i32, i32
  }
  func.func @transform_4(%arg0: i32, %arg1: i32) -> (i32, i32) {
    %c0_i32 = arith.constant 0 : i32
    %c0_i32_0 = arith.constant 0 : i32
    %c0_i32_1 = arith.constant 0 : i32
    return %c0_i32, %c0_i32_0 : i32, i32
  }
  func.func @transform_5(%arg0: i32, %arg1: i32) -> (i32, i32) {
    %c0_i32 = arith.constant 0 : i32
    %c0_i32_0 = arith.constant 0 : i32
    %c0_i32_1 = arith.constant 0 : i32
    return %c0_i32, %c0_i32_0 : i32, i32
  }
  func.func @transform_6(%arg0: i32, %arg1: i32) -> (i32, i32) {
    %c0_i32 = arith.constant 0 : i32
    %c0_i32_0 = arith.constant 0 : i32
    %c0_i32_1 = arith.constant 0 : i32
    return %c0_i32, %c0_i32_0 : i32, i32
  }
  func.func @transform_7(%arg0: i32, %arg1: i32) -> (i32, i32) {
    %c0_i32 = arith.constant 0 : i32
    %c0_i32_0 = arith.constant 0 : i32
    %c0_i32_1 = arith.constant 0 : i32
    return %c0_i32, %c0_i32_0 : i32, i32
  }
  func.func @transform_8(%arg0: i32, %arg1: i32) -> (i32, i32) {
    %c0_i32 = arith.constant 0 : i32
    %c0_i32_0 = arith.constant 0 : i32
    %c0_i32_1 = arith.constant 0 : i32
    return %c0_i32, %c0_i32_0 : i32, i32
  }
  func.func @transform_9(%arg0: i32, %arg1: i32) -> (i32, i32, i32, i32) {
    %c0_i32 = arith.constant 0 : i32
    %c0_i32_0 = arith.constant 0 : i32
    %c0_i32_1 = arith.constant 0 : i32
    return %arg0, %c0_i32, %arg1, %c0_i32_0 : i32, i32, i32, i32
  }
}

</mosaic_0001>

<llo_original>
// kernel: tpu_custom_call.1
$region0: #{tpu_custom_call.1}
  #allocation0 [shape = 'u32[]', space=smem, size = 0x4, offset = 0x4, fixed_abs, tag = 'smem constant byte address 0x4 - core index']
  #allocation1 [shape = 'u32[144,128]{1,0:T(1,128)}', space=vmem, size = 0x12000, scoped, tag = 'internal scratch']
  #allocation2 [shape = 'f32[10,16,16]{2,1,0:T(8,128)}', space=vmem, size = 0x14000, scoped, tag = 'scratch operand']
  %s0 = inlined_call_operand.hbm [shape: f32[2,8,16,32], index: 0, kind: input, shape index: {}]
  %s1 = inlined_call_operand.vmem [shape: f32[1,32], index: 1, kind: input, shape index: {}]
  %s2 = inlined_call_operand.vmem [shape: f32[1,32], index: 2, kind: input, shape index: {}]
  %s3 = inlined_call_operand.vmem [shape: bf16[32,16], index: 3, kind: input, shape index: {}]
  %s4 = inlined_call_operand.vmem [shape: f32[1,16], index: 4, kind: input, shape index: {}]
  %s5 = inlined_call_operand.vmem [shape: f32[3,16], index: 5, kind: input, shape index: {}]
  %s6 = inlined_call_operand.vmem [shape: f32[1,16], index: 6, kind: input, shape index: {}]
  %s7 = inlined_call_operand.vmem [shape: bf16[16,32], index: 7, kind: input, shape index: {}]
  %s8 = inlined_call_operand.vmem [shape: f32[1,32], index: 8, kind: input, shape index: {}]
  %s9 = inlined_call_operand.hbm [shape: f32[2,8,16,32], index: 9, kind: output, shape index: {}]
  %s10 = sld [smem:[#allocation0]]
  $region73: #{tpu_custom_call.1} parent=0
    _
  %s12 = ssub.s32 1, %s10
  %s13 = scalar_select 0, %s12, %s10
  $region1: #{tpu_custom_call.1} parent=0
    #allocation3 [shape = 'u8[131072]{0}', space=vmem, size = 0x20000, scoped, tag = 'input window, operand 0']
    #allocation4 [shape = 's32[2]{0}', space=sflag, size = 0x8, scoped, tag = 'scoped memory for tpu_custom_call.1']
    #allocation5 [shape = 's32[2]{0}', space=sflag, size = 0x8, scoped, tag = 'scoped memory for tpu_custom_call.1']
    #allocation6 [shape = 'u8[131072]{0}', space=vmem, size = 0x20000, scoped, tag = 'output window, operand 0']
    %14 = vsyncpa [#allocation4], 0
    %s15 = scalar_lea.sflag [#allocation4], 1
    %16 = vsyncpa %s15, 0
    %17 = vsyncpa [#allocation5], 0
    %s18 = scalar_lea.sflag [#allocation5], 1
    %19 = vsyncpa %s18, 0
    loop: start=0, step=1, limit=4
    $region2: #{tpu_custom_call.1} parent=1 // loop_pre_header
      _
    $region3: #{tpu_custom_call.1} parent=1 // loop_header
      %s21 = sphi 0, %s25
      %p22 = scmp.ge.s32.totalorder %s21, 4
      %s28 = sphi 0, %s40
      %s29 = sphi 0, %s36
      %s30 = sphi 0, %s28
      %s31 = sphi 0, %s29
      %s32 = sphi 0, %s30
      %s33 = sphi 0, %s31
      %s45 = sphi 0, %s47
      %s48 = sphi 0, %s45
      %s49 = sphi 0, %s48
      %s65 = sphi 0, %s49
      %s69 = sphi 0, %s69
      %s71 = sphi 0, %s69
      %s72 = sphi 0, %s71
      %s86 = sphi 0, %s72
      %s90 = sphi 0, %s90
      %s92 = sphi 0, %s90
      %s93 = sphi 0, %s92
      %s107 = sphi 0, %s93
      %s111 = sphi 0, %s111
      %s113 = sphi 0, %s111
      %s114 = sphi 0, %s113
      %s128 = sphi 0, %s114
      %s132 = sphi 0, %s132
      %s134 = sphi 0, %s132
      %s135 = sphi 0, %s134
      %s149 = sphi 0, %s135
      %s153 = sphi 0, %s153
      %s155 = sphi 0, %s153
      %s156 = sphi 0, %s155
      %s170 = sphi 0, %s156
      %s174 = sphi 0, %s174
      %s176 = sphi 0, %s174
      %s177 = sphi 0, %s176
      %s191 = sphi 0, %s177
      %s195 = sphi 0, %s195
      %s197 = sphi 0, %s195
      %s198 = sphi 0, %s197
      %s212 = sphi 0, %s198
      %s216 = sphi 0, %s216
      %s218 = sphi 0, %s216
      %s219 = sphi 0, %s218
      %s233 = sphi 0, %s219
      %s241 = sphi 0, %s243
      %s244 = sphi 0, %s241
      %s245 = sphi 0, %s244
      %s261 = sphi 0, %s245
    $region4: #{tpu_custom_call.1} parent=1 // loop_header_branch
      %24 = sbr.rel (%p22) target = $region8
    $region5: #{tpu_custom_call.1} parent=1 // loop_body
      %s26 = ssub.s32 %s21, 1
      %s27 = ssub.s32 %s21, 2
      %s34 = sadd.s32 1, %s29
      %p35 = scmp.ge.s32.totalorder %s34, 1
      %s36 = scalar_select %p35, 0, %s34
      %s37 = sadd.s32 1, %s28
      %s38 = scalar_select %p35, %s37, %s28
      %p39 = scmp.ge.s32.totalorder %s38, 2
      %s40 = scalar_select %p39, 0, %s38
      %s41 = ssub.s32 %s28, %s40
      %s42 = ssub.s32 %s29, %s36
      %s43 = sor.u32 %s41, %s42
      %p44 = scmp.eq.s32.totalorder %s43, 0
      %s46 = sadd.s32 %s45, 1
      %s47 = scalar_select %p44, %s45, %s46
      %p50 = pneg %p44
      %p51 = scmp.eq.s32.totalorder %s21, 1
      %p52 = por %p50, %p51
      %p53 = scmp.ne.s32.totalorder %s45, %s48
      %p54 = scmp.eq.s32.totalorder %s21, 0
      %p55 = por %p53, %p54
      %p56 = scmp.ne.s32.totalorder %s45, %s48
      %p57 = scmp.eq.s32.totalorder %s26, 1
      %p58 = por %p56, %p57
      %p59 = scmp.ne.s32.totalorder %s48, %s49
      %p60 = scmp.eq.s32.totalorder %s26, 0
      %p61 = por %p59, %p60
      %p62 = scmp.ne.s32.totalorder %s48, %s49
      %p63 = scmp.eq.s32.totalorder %s27, 1
      %p64 = por %p62, %p63
      %p66 = scmp.ne.s32.totalorder %s49, %s65
      %p67 = scmp.eq.s32.totalorder %s27, 0
      %p68 = por %p66, %p67
      %s70 = sadd.s32 %s69, 1
      %p73 = scmp.eq.s32.totalorder %s21, 1
      %p74 = scmp.ne.s32.totalorder %s69, %s71
      %p75 = scmp.eq.s32.totalorder %s21, 0
      %p76 = por %p74, %p75
      %p77 = scmp.ne.s32.totalorder %s69, %s71
      %p78 = scmp.eq.s32.totalorder %s26, 1
      %p79 = por %p77, %p78
      %p80 = scmp.ne.s32.totalorder %s71, %s72
      %p81 = scmp.eq.s32.totalorder %s26, 0
      %p82 = por %p80, %p81
      %p83 = scmp.ne.s32.totalorder %s71, %s72
      %p84 = scmp.eq.s32.totalorder %s27, 1
      %p85 = por %p83, %p84
      %p87 = scmp.ne.s32.totalorder %s72, %s86
      %p88 = scmp.eq.s32.totalorder %s27, 0
      %p89 = por %p87, %p88
      %s91 = sadd.s32 %s90, 1
      %p94 = scmp.eq.s32.totalorder %s21, 1
      %p95 = scmp.ne.s32.totalorder %s90, %s92
      %p96 = scmp.eq.s32.totalorder %s21, 0
      %p97 = por %p95, %p96
      %p98 = scmp.ne.s32.totalorder %s90, %s92
      %p99 = scmp.eq.s32.totalorder %s26, 1
      %p100 = por %p98, %p99
      %p101 = scmp.ne.s32.totalorder %s92, %s93
      %p102 = scmp.eq.s32.totalorder %s26, 0
      %p103 = por %p101, %p102
      %p104 = scmp.ne.s32.totalorder %s92, %s93
      %p105 = scmp.eq.s32.totalorder %s27, 1
      %p106 = por %p104, %p105
      %p108 = scmp.ne.s32.totalorder %s93, %s107
      %p109 = scmp.eq.s32.totalorder %s27, 0
      %p110 = por %p108, %p109
      %s112 = sadd.s32 %s111, 1
      %p115 = scmp.eq.s32.totalorder %s21, 1
      %p116 = scmp.ne.s32.totalorder %s111, %s113
      %p117 = scmp.eq.s32.totalorder %s21, 0
      %p118 = por %p116, %p117
      %p119 = scmp.ne.s32.totalorder %s111, %s113
      %p120 = scmp.eq.s32.totalorder %s26, 1
      %p121 = por %p119, %p120
      %p122 = scmp.ne.s32.totalorder %s113, %s114
      %p123 = scmp.eq.s32.totalorder %s26, 0
      %p124 = por %p122, %p123
      %p125 = scmp.ne.s32.totalorder %s113, %s114
      %p126 = scmp.eq.s32.totalorder %s27, 1
      %p127 = por %p125, %p126
      %p129 = scmp.ne.s32.totalorder %s114, %s128
      %p130 = scmp.eq.s32.totalorder %s27, 0
      %p131 = por %p129, %p130
      %s133 = sadd.s32 %s132, 1
      %p136 = scmp.eq.s32.totalorder %s21, 1
      %p137 = scmp.ne.s32.totalorder %s132, %s134
      %p138 = scmp.eq.s32.totalorder %s21, 0
      %p139 = por %p137, %p138
      %p140 = scmp.ne.s32.totalorder %s132, %s134
      %p141 = scmp.eq.s32.totalorder %s26, 1
      %p142 = por %p140, %p141
      %p143 = scmp.ne.s32.totalorder %s134, %s135
      %p144 = scmp.eq.s32.totalorder %s26, 0
      %p145 = por %p143, %p144
      %p146 = scmp.ne.s32.totalorder %s134, %s135
      %p147 = scmp.eq.s32.totalorder %s27, 1
      %p148 = por %p146, %p147
      %p150 = scmp.ne.s32.totalorder %s135, %s149
      %p151 = scmp.eq.s32.totalorder %s27, 0
      %p152 = por %p150, %p151
      %s154 = sadd.s32 %s153, 1
      %p157 = scmp.eq.s32.totalorder %s21, 1
      %p158 = scmp.ne.s32.totalorder %s153, %s155
      %p159 = scmp.eq.s32.totalorder %s21, 0
      %p160 = por %p158, %p159
      %p161 = scmp.ne.s32.totalorder %s153, %s155
      %p162 = scmp.eq.s32.totalorder %s26, 1
      %p163 = por %p161, %p162
      %p164 = scmp.ne.s32.totalorder %s155, %s156
      %p165 = scmp.eq.s32.totalorder %s26, 0
      %p166 = por %p164, %p165
      %p167 = scmp.ne.s32.totalorder %s155, %s156
      %p168 = scmp.eq.s32.totalorder %s27, 1
      %p169 = por %p167, %p168
      %p171 = scmp.ne.s32.totalorder %s156, %s170
      %p172 = scmp.eq.s32.totalorder %s27, 0
      %p173 = por %p171, %p172
      %s175 = sadd.s32 %s174, 1
      %p178 = scmp.eq.s32.totalorder %s21, 1
      %p179 = scmp.ne.s32.totalorder %s174, %s176
      %p180 = scmp.eq.s32.totalorder %s21, 0
      %p181 = por %p179, %p180
      %p182 = scmp.ne.s32.totalorder %s174, %s176
      %p183 = scmp.eq.s32.totalorder %s26, 1
      %p184 = por %p182, %p183
      %p185 = scmp.ne.s32.totalorder %s176, %s177
      %p186 = scmp.eq.s32.totalorder %s26, 0
      %p187 = por %p185, %p186
      %p188 = scmp.ne.s32.totalorder %s176, %s177
      %p189 = scmp.eq.s32.totalorder %s27, 1
      %p190 = por %p188, %p189
      %p192 = scmp.ne.s32.totalorder %s177, %s191
      %p193 = scmp.eq.s32.totalorder %s27, 0
      %p194 = por %p192, %p193
      %s196 = sadd.s32 %s195, 1
      %p199 = scmp.eq.s32.totalorder %s21, 1
      %p200 = scmp.ne.s32.totalorder %s195, %s197
      %p201 = scmp.eq.s32.totalorder %s21, 0
      %p202 = por %p200, %p201
      %p203 = scmp.ne.s32.totalorder %s195, %s197
      %p204 = scmp.eq.s32.totalorder %s26, 1
      %p205 = por %p203, %p204
      %p206 = scmp.ne.s32.totalorder %s197, %s198
      %p207 = scmp.eq.s32.totalorder %s26, 0
      %p208 = por %p206, %p207
      %p209 = scmp.ne.s32.totalorder %s197, %s198
      %p210 = scmp.eq.s32.totalorder %s27, 1
      %p211 = por %p209, %p210
      %p213 = scmp.ne.s32.totalorder %s198, %s212
      %p214 = scmp.eq.s32.totalorder %s27, 0
      %p215 = por %p213, %p214
      %s217 = sadd.s32 %s216, 1
      %p220 = scmp.eq.s32.totalorder %s21, 1
      %p221 = scmp.ne.s32.totalorder %s216, %s218
      %p222 = scmp.eq.s32.totalorder %s21, 0
      %p223 = por %p221, %p222
      %p224 = scmp.ne.s32.totalorder %s216, %s218
      %p225 = scmp.eq.s32.totalorder %s26, 1
      %p226 = por %p224, %p225
      %p227 = scmp.ne.s32.totalorder %s218, %s219
      %p228 = scmp.eq.s32.totalorder %s26, 0
      %p229 = por %p227, %p228
      %p230 = scmp.ne.s32.totalorder %s218, %s219
      %p231 = scmp.eq.s32.totalorder %s27, 1
      %p232 = por %p230, %p231
      %p234 = scmp.ne.s32.totalorder %s219, %s233
      %p235 = scmp.eq.s32.totalorder %s27, 0
      %p236 = por %p234, %p235
      %s237 = ssub.s32 %s28, %s40
      %s238 = ssub.s32 %s29, %s36
      %s239 = sor.u32 %s237, %s238
      %p240 = scmp.eq.s32.totalorder %s239, 0
      %s242 = sadd.s32 %s241, 1
      %s243 = scalar_select %p240, %s241, %s242
      %p246 = pneg %p240
      %p247 = scmp.eq.s32.totalorder %s21, 1
      %p248 = por %p246, %p247
      %p249 = scmp.ne.s32.totalorder %s241, %s244
      %p250 = scmp.eq.s32.totalorder %s21, 0
      %p251 = por %p249, %p250
      %p252 = scmp.ne.s32.totalorder %s241, %s244
      %p253 = scmp.eq.s32.totalorder %s26, 1
      %p254 = por %p252, %p253
      %p255 = scmp.ne.s32.totalorder %s244, %s245
      %p256 = scmp.eq.s32.totalorder %s26, 0
      %p257 = por %p255, %p256
      %p258 = scmp.ne.s32.totalorder %s244, %s245
      %p259 = scmp.eq.s32.totalorder %s27, 1
      %p260 = por %p258, %p259
      %p262 = scmp.ne.s32.totalorder %s245, %s261
      %p263 = scmp.eq.s32.totalorder %s27, 0
      %p264 = por %p262, %p263
      %p265 = scmp.le.s32.totalorder 1, %s21
      %p266 = scmp.lt.s32.totalorder %s21, 3
      %p267 = pnand %p265, %p266
      %p268 = pneg %p267
      // Predicated region
      $region9: #{tpu_custom_call.1} parent=5 // pred_check
        _
      $region10: #{tpu_custom_call.1} parent=5 // pred_check_branch
        %270 = sbr.rel (%p267) target = $region12
      $region11: #{tpu_custom_call.1} parent=5 // pred_region
        %s271 = ssub.s32 %s21, 1
        // Predicated region
        $region13: #{tpu_custom_call.1} parent=11 // pred_check
          %p272 = pneg %p82
        $region14: #{tpu_custom_call.1} parent=11 // pred_check_branch
          %274 = sbr.rel (%p272) target = $region16
        $region15: #{tpu_custom_call.1} parent=11 // pred_region
          _
        $region16: #{tpu_custom_call.1} parent=11 // pred_fallthru
          _
        // Predicated region
        $region17: #{tpu_custom_call.1} parent=11 // pred_check
          %p275 = pneg %p103
        $region18: #{tpu_custom_call.1} parent=11 // pred_check_branch
          %277 = sbr.rel (%p275) target = $region20
        $region19: #{tpu_custom_call.1} parent=11 // pred_region
          _
        $region20: #{tpu_custom_call.1} parent=11 // pred_fallthru
          _
        // Predicated region
        $region21: #{tpu_custom_call.1} parent=11 // pred_check
          %p278 = pneg %p124
        $region22: #{tpu_custom_call.1} parent=11 // pred_check_branch
          %280 = sbr.rel (%p278) target = $region24
        $region23: #{tpu_custom_call.1} parent=11 // pred_region
          _
        $region24: #{tpu_custom_call.1} parent=11 // pred_fallthru
          _
        // Predicated region
        $region25: #{tpu_custom_call.1} parent=11 // pred_check
          %p281 = pneg %p145
        $region26: #{tpu_custom_call.1} parent=11 // pred_check_branch
          %283 = sbr.rel (%p281) target = $region28
        $region27: #{tpu_custom_call.1} parent=11 // pred_region
          _
        $region28: #{tpu_custom_call.1} parent=11 // pred_fallthru
          _
        // Predicated region
        $region29: #{tpu_custom_call.1} parent=11 // pred_check
          %p284 = pneg %p166
        $region30: #{tpu_custom_call.1} parent=11 // pred_check_branch
          %286 = sbr.rel (%p284) target = $region32
        $region31: #{tpu_custom_call.1} parent=11 // pred_region
          _
        $region32: #{tpu_custom_call.1} parent=11 // pred_fallthru
          _
        // Predicated region
        $region33: #{tpu_custom_call.1} parent=11 // pred_check
          %p287 = pneg %p187
        $region34: #{tpu_custom_call.1} parent=11 // pred_check_branch
          %289 = sbr.rel (%p287) target = $region36
        $region35: #{tpu_custom_call.1} parent=11 // pred_region
          _
        $region36: #{tpu_custom_call.1} parent=11 // pred_fallthru
          _
        // Predicated region
        $region37: #{tpu_custom_call.1} parent=11 // pred_check
          %p290 = pneg %p208
        $region38: #{tpu_custom_call.1} parent=11 // pred_check_branch
          %292 = sbr.rel (%p290) target = $region40
        $region39: #{tpu_custom_call.1} parent=11 // pred_region
          _
        $region40: #{tpu_custom_call.1} parent=11 // pred_fallthru
          _
        // Predicated region
        $region41: #{tpu_custom_call.1} parent=11 // pred_check
          %p293 = pneg %p229
        $region42: #{tpu_custom_call.1} parent=11 // pred_check_branch
          %295 = sbr.rel (%p293) target = $region44
        $region43: #{tpu_custom_call.1} parent=11 // pred_region
          _
        $region44: #{tpu_custom_call.1} parent=11 // pred_fallthru
          _
      $region12: #{tpu_custom_call.1} parent=5 // pred_fallthru
        _
      %p296 = scmp.lt.s32.totalorder %s21, 2
      // Predicated region
      $region45: #{tpu_custom_call.1} parent=5 // pred_check
        %p297 = pneg %p296
      $region46: #{tpu_custom_call.1} parent=5 // pred_check_branch
        %299 = sbr.rel (%p297) target = $region48
      $region47: #{tpu_custom_call.1} parent=5 // pred_region
        // Predicated region
        $region49: #{tpu_custom_call.1} parent=47 // pred_check
          %p300 = pneg %p55
        $region50: #{tpu_custom_call.1} parent=47 // pred_check_branch
          %302 = sbr.rel (%p300) target = $region52
        $region51: #{tpu_custom_call.1} parent=47 // pred_region
          %s303 = sand.u32 %s45, 1
          %s304 = scalar_lea.sflag [#allocation4], %s303
          %s305 = sand.u32 %s45, 1
          %s306 = smul.addr %s305, 128
          %s307 = scalar_lea.vmem [#allocation3], %s306
          %s308 = smul.u32 2, %s29
          %s310 = ssub.s32 2048, 2048
          %311 = vsyncadd %s304, %s310
          %s312 = smul.addr %s28, 16
          %s313 = sadd.s32 %s308, %s312
          %s314 = smul.addr %s313, 128
          %s315 = scalar_lea.hbm %s0, %s314
          %s316 = sshll.u32 %s307, 4
          %s317 = int_to_ptr.vmem [resolvable:$true] %s316
          %322 = dma.hbm_to_vmem [thread:$0]  %s315, 2048, %s317, %s304, 128, 128, 8
        $region52: #{tpu_custom_call.1} parent=47 // pred_fallthru
          _
      $region48: #{tpu_custom_call.1} parent=5 // pred_fallthru
        _
      %p323 = scmp.le.s32.totalorder 1, %s21
      %p324 = scmp.lt.s32.totalorder %s21, 3
      %p325 = pnand %p323, %p324
      %p326 = pneg %p325
      // Predicated region
      $region53: #{tpu_custom_call.1} parent=5 // pred_check
        _
      $region54: #{tpu_custom_call.1} parent=5 // pred_check_branch
        %328 = sbr.rel (%p325) target = $region56
      $region55: #{tpu_custom_call.1} parent=5 // pred_region
        %s329 = ssub.s32 %s21, 1
        %s330 = sand.u32 %s48, 1
        %s331 = scalar_lea.sflag [#allocation4], %s330
        %s332 = sand.u32 %s48, 1
        %s333 = smul.addr %s332, 128
        %s334 = scalar_lea.vmem [#allocation3], %s333
        // Predicated region
        $region57: #{tpu_custom_call.1} parent=55 // pred_check
          %p335 = pneg %p61
        $region58: #{tpu_custom_call.1} parent=55 // pred_check_branch
          %337 = sbr.rel (%p335) target = $region60
        $region59: #{tpu_custom_call.1} parent=55 // pred_region
          %338 = dma.done %s331, 2048
        $region60: #{tpu_custom_call.1} parent=55 // pred_fallthru
          _
        %s339 = sand.u32 %s48, 1
        %s340 = scalar_lea.sflag [#allocation4], %s339
        %s341 = sand.u32 %s48, 1
        %s342 = smul.addr %s341, 128
        %s343 = scalar_lea.vmem [#allocation3], %s342
        %p344 = pneg %p61
        %p345 = pneg %p58
        %p346 = pneg %p82
        %p347 = pneg %p79
        %p348 = pneg %p103
        %p349 = pneg %p100
        %p350 = pneg %p124
        %p351 = pneg %p121
        %p352 = pneg %p145
        %p353 = pneg %p142
        %p354 = pneg %p166
        %p355 = pneg %p163
        %p356 = pneg %p187
        %p357 = pneg %p184
        %p358 = pneg %p208
        %p359 = pneg %p205
        %p360 = pneg %p229
        %p361 = pneg %p226
        %p362 = pneg %p257
        %p363 = pneg %p254
        %s364 = sand.u32 %s244, 1
        %s365 = scalar_lea.sflag [#allocation5], %s364
        %s366 = sand.u32 %s244, 1
        %s367 = smul.addr %s366, 128
        %s368 = scalar_lea.vmem [#allocation6], %s367
        %s369 = smul.u32 2, %s31
        %s370 = smul.u32 2, %s31
        %v372 = vld [vmem:[%s334] sm:$0xff]
        %v373 = vld [vmem:[%s334 + $0x8] sm:$0xff]
        %v374 = vld [vmem:[%s334 + $0x10] sm:$0xff]
        %v375 = vld [vmem:[%s334 + $0x18] sm:$0xff]
        %v376 = vld [vmem:[%s334 + $0x20] sm:$0xff]
        %v377 = vld [vmem:[%s334 + $0x28] sm:$0xff]
        %v378 = vld [vmem:[%s334 + $0x30] sm:$0xff]
        %v379 = vld [vmem:[%s334 + $0x38] sm:$0xff]
        %v380 = vld [vmem:[%s334 + $0x40] sm:$0xff]
        %v381 = vld [vmem:[%s334 + $0x48] sm:$0xff]
        %v382 = vld [vmem:[%s334 + $0x50] sm:$0xff]
        %v383 = vld [vmem:[%s334 + $0x58] sm:$0xff]
        %v384 = vld [vmem:[%s334 + $0x60] sm:$0xff]
        %v385 = vld [vmem:[%s334 + $0x68] sm:$0xff]
        %v386 = vld [vmem:[%s334 + $0x70] sm:$0xff]
        %v387 = vld [vmem:[%s334 + $0x78] sm:$0xff]
        %vm388 = vcmask 261120
        %v389 = vsel %vm388, %v372, 0.0
        %390 = vadd.xlane.f32.xlu0 %v389
        %v391 = vpop.xlane.xlu0 %390
        %v392 = vsel %vm388, %v373, 0.0
        %393 = vadd.xlane.f32.xlu0 %v392
        %v394 = vpop.xlane.xlu0 %393
        %v395 = vsel %vm388, %v374, 0.0
        %396 = vadd.xlane.f32.xlu0 %v395
        %v397 = vpop.xlane.xlu0 %396
        %v398 = vsel %vm388, %v375, 0.0
        %399 = vadd.xlane.f32.xlu0 %v398
        %v400 = vpop.xlane.xlu0 %399
        %v401 = vsel %vm388, %v376, 0.0
        %402 = vadd.xlane.f32.xlu0 %v401
        %v403 = vpop.xlane.xlu0 %402
        %v404 = vsel %vm388, %v377, 0.0
        %405 = vadd.xlane.f32.xlu0 %v404
        %v406 = vpop.xlane.xlu0 %405
        %v407 = vsel %vm388, %v378, 0.0
        %408 = vadd.xlane.f32.xlu0 %v407
        %v409 = vpop.xlane.xlu0 %408
        %v410 = vsel %vm388, %v379, 0.0
        %411 = vadd.xlane.f32.xlu0 %v410
        %v412 = vpop.xlane.xlu0 %411
        %v413 = vsel %vm388, %v380, 0.0
        %414 = vadd.xlane.f32.xlu0 %v413
        %v415 = vpop.xlane.xlu0 %414
        %v416 = vsel %vm388, %v381, 0.0
        %417 = vadd.xlane.f32.xlu0 %v416
        %v418 = vpop.xlane.xlu0 %417
        %v419 = vsel %vm388, %v382, 0.0
        %420 = vadd.xlane.f32.xlu0 %v419
        %v421 = vpop.xlane.xlu0 %420
        %v422 = vsel %vm388, %v383, 0.0
        %423 = vadd.xlane.f32.xlu0 %v422
        %v424 = vpop.xlane.xlu0 %423
        %v425 = vsel %vm388, %v384, 0.0
        %426 = vadd.xlane.f32.xlu0 %v425
        %v427 = vpop.xlane.xlu0 %426
        %v428 = vsel %vm388, %v385, 0.0
        %429 = vadd.xlane.f32.xlu0 %v428
        %v430 = vpop.xlane.xlu0 %429
        %v431 = vsel %vm388, %v386, 0.0
        %432 = vadd.xlane.f32.xlu0 %v431
        %v433 = vpop.xlane.xlu0 %432
        %v434 = vsel %vm388, %v387, 0.0
        %435 = vadd.xlane.f32.xlu0 %v434
        %v436 = vpop.xlane.xlu0 %435
        %v437 = vrcp.pop 32.0
        %v438 = vmul.f32 %v391, %v437
        %v439 = vmul.f32 %v394, %v437
        %v440 = vmul.f32 %v397, %v437
        %v441 = vmul.f32 %v400, %v437
        %v442 = vmul.f32 %v403, %v437
        %v443 = vmul.f32 %v406, %v437
        %v444 = vmul.f32 %v409, %v437
        %v445 = vmul.f32 %v412, %v437
        %v446 = vmul.f32 %v415, %v437
        %v447 = vmul.f32 %v418, %v437
        %v448 = vmul.f32 %v421, %v437
        %v449 = vmul.f32 %v424, %v437
        %v450 = vmul.f32 %v427, %v437
        %v451 = vmul.f32 %v430, %v437
        %v452 = vmul.f32 %v433, %v437
        %v453 = vmul.f32 %v436, %v437
        %v454 = vsub.f32 %v372, %v438
        %v455 = vsub.f32 %v373, %v439
        %v456 = vsub.f32 %v374, %v440
        %v457 = vsub.f32 %v375, %v441
        %v458 = vsub.f32 %v376, %v442
        %v459 = vsub.f32 %v377, %v443
        %v460 = vsub.f32 %v378, %v444
        %v461 = vsub.f32 %v379, %v445
        %v462 = vsub.f32 %v380, %v446
        %v463 = vsub.f32 %v381, %v447
        %v464 = vsub.f32 %v382, %v448
        %v465 = vsub.f32 %v383, %v449
        %v466 = vsub.f32 %v384, %v450
        %v467 = vsub.f32 %v385, %v451
        %v468 = vsub.f32 %v386, %v452
        %v469 = vsub.f32 %v387, %v453
        %v470 = vmul.f32 %v454, %v454
        %v471 = vmul.f32 %v455, %v455
        %v472 = vmul.f32 %v456, %v456
        %v473 = vmul.f32 %v457, %v457
        %v474 = vmul.f32 %v458, %v458
        %v475 = vmul.f32 %v459, %v459
        %v476 = vmul.f32 %v460, %v460
        %v477 = vmul.f32 %v461, %v461
        %v478 = vmul.f32 %v462, %v462
        %v479 = vmul.f32 %v463, %v463
        %v480 = vmul.f32 %v464, %v464
        %v481 = vmul.f32 %v465, %v465
        %v482 = vmul.f32 %v466, %v466
        %v483 = vmul.f32 %v467, %v467
        %v484 = vmul.f32 %v468, %v468
        %v485 = vmul.f32 %v469, %v469
        %v486 = vsel %vm388, %v470, 0.0
        %487 = vadd.xlane.f32.xlu0 %v486
        %v488 = vpop.xlane.xlu0 %487
        %v489 = vsel %vm388, %v471, 0.0
        %490 = vadd.xlane.f32.xlu0 %v489
        %v491 = vpop.xlane.xlu0 %490
        %v492 = vsel %vm388, %v472, 0.0
        %493 = vadd.xlane.f32.xlu0 %v492
        %v494 = vpop.xlane.xlu0 %493
        %v495 = vsel %vm388, %v473, 0.0
        %496 = vadd.xlane.f32.xlu0 %v495
        %v497 = vpop.xlane.xlu0 %496
        %v498 = vsel %vm388, %v474, 0.0
        %499 = vadd.xlane.f32.xlu0 %v498
        %v500 = vpop.xlane.xlu0 %499
        %v501 = vsel %vm388, %v475, 0.0
        %502 = vadd.xlane.f32.xlu0 %v501
        %v503 = vpop.xlane.xlu0 %502
        %v504 = vsel %vm388, %v476, 0.0
        %505 = vadd.xlane.f32.xlu0 %v504
        %v506 = vpop.xlane.xlu0 %505
        %v507 = vsel %vm388, %v477, 0.0
        %508 = vadd.xlane.f32.xlu0 %v507
        %v509 = vpop.xlane.xlu0 %508
        %v510 = vsel %vm388, %v478, 0.0
        %511 = vadd.xlane.f32.xlu0 %v510
        %v512 = vpop.xlane.xlu0 %511
        %v513 = vsel %vm388, %v479, 0.0
        %514 = vadd.xlane.f32.xlu0 %v513
        %v515 = vpop.xlane.xlu0 %514
        %v516 = vsel %vm388, %v480, 0.0
        %517 = vadd.xlane.f32.xlu0 %v516
        %v518 = vpop.xlane.xlu0 %517
        %v519 = vsel %vm388, %v481, 0.0
        %520 = vadd.xlane.f32.xlu0 %v519
        %v521 = vpop.xlane.xlu0 %520
        %v522 = vsel %vm388, %v482, 0.0
        %523 = vadd.xlane.f32.xlu0 %v522
        %v524 = vpop.xlane.xlu0 %523
        %v525 = vsel %vm388, %v483, 0.0
        %526 = vadd.xlane.f32.xlu0 %v525
        %v527 = vpop.xlane.xlu0 %526
        %v528 = vsel %vm388, %v484, 0.0
        %529 = vadd.xlane.f32.xlu0 %v528
        %v530 = vpop.xlane.xlu0 %529
        %v531 = vsel %vm388, %v485, 0.0
        %532 = vadd.xlane.f32.xlu0 %v531
        %v533 = vpop.xlane.xlu0 %532
        %v534 = vmul.f32 %v488, %v437
        %v535 = vmul.f32 %v491, %v437
        %v536 = vmul.f32 %v494, %v437
        %v537 = vmul.f32 %v497, %v437
        %v538 = vmul.f32 %v500, %v437
        %v539 = vmul.f32 %v503, %v437
        %v540 = vmul.f32 %v506, %v437
        %v541 = vmul.f32 %v509, %v437
        %v542 = vmul.f32 %v512, %v437
        %v543 = vmul.f32 %v515, %v437
        %v544 = vmul.f32 %v518, %v437
        %v545 = vmul.f32 %v521, %v437
        %v546 = vmul.f32 %v524, %v437
        %v547 = vmul.f32 %v527, %v437
        %v548 = vmul.f32 %v530, %v437
        %v549 = vmul.f32 %v533, %v437
        %v550 = vadd.f32 %v534, 1e-05
        %v551 = vadd.f32 %v535, 1e-05
        %v552 = vadd.f32 %v536, 1e-05
        %v553 = vadd.f32 %v537, 1e-05
        %v554 = vadd.f32 %v538, 1e-05
        %v555 = vadd.f32 %v539, 1e-05
        %v556 = vadd.f32 %v540, 1e-05
        %v557 = vadd.f32 %v541, 1e-05
        %v558 = vadd.f32 %v542, 1e-05
        %v559 = vadd.f32 %v543, 1e-05
        %v560 = vadd.f32 %v544, 1e-05
        %v561 = vadd.f32 %v545, 1e-05
        %v562 = vadd.f32 %v546, 1e-05
        %v563 = vadd.f32 %v547, 1e-05
        %v564 = vadd.f32 %v548, 1e-05
        %v565 = vadd.f32 %v549, 1e-05
        %v566 = vrsqrt.pop %v550
        %v567 = vrsqrt.pop %v551
        %v568 = vrsqrt.pop %v552
        %v569 = vrsqrt.pop %v553
        %v570 = vrsqrt.pop %v554
        %v571 = vrsqrt.pop %v555
        %v572 = vrsqrt.pop %v556
        %v573 = vrsqrt.pop %v557
        %v574 = vrsqrt.pop %v558
        %v575 = vrsqrt.pop %v559
        %v576 = vrsqrt.pop %v560
        %v577 = vrsqrt.pop %v561
        %v578 = vrsqrt.pop %v562
        %v579 = vrsqrt.pop %v563
        %v580 = vrsqrt.pop %v564
        %v581 = vrsqrt.pop %v565
        %v582 = vmul.f32 %v454, %v566
        %v583 = vmul.f32 %v455, %v567
        %v584 = vmul.f32 %v456, %v568
        %v585 = vmul.f32 %v457, %v569
        %v586 = vmul.f32 %v458, %v570
        %v587 = vmul.f32 %v459, %v571
        %v588 = vmul.f32 %v460, %v572
        %v589 = vmul.f32 %v461, %v573
        %v590 = vmul.f32 %v462, %v574
        %v591 = vmul.f32 %v463, %v575
        %v592 = vmul.f32 %v464, %v576
        %v593 = vmul.f32 %v465, %v577
        %v594 = vmul.f32 %v466, %v578
        %v595 = vmul.f32 %v467, %v579
        %v596 = vmul.f32 %v468, %v580
        %v597 = vmul.f32 %v469, %v581
        %v598 = vld [vmem:[%s1] sm:$0x1]
        %v600 = vlaneseq
        %v601 = vshrl.u32 %v600, 7
        %v602 = vsub.s32 0, %v601
        %v603 = vrot.slane %v598, %v602
        %v605 = vmul.f32 %v582, %v603
        %v606 = vmul.f32 %v583, %v603
        %v607 = vmul.f32 %v584, %v603
        %v608 = vmul.f32 %v585, %v603
        %v609 = vmul.f32 %v586, %v603
        %v610 = vmul.f32 %v587, %v603
        %v611 = vmul.f32 %v588, %v603
        %v612 = vmul.f32 %v589, %v603
        %v613 = vmul.f32 %v590, %v603
        %v614 = vmul.f32 %v591, %v603
        %v615 = vmul.f32 %v592, %v603
        %v616 = vmul.f32 %v593, %v603
        %v617 = vmul.f32 %v594, %v603
        %v618 = vmul.f32 %v595, %v603
        %v619 = vmul.f32 %v596, %v603
        %v620 = vmul.f32 %v597, %v603
        %v621 = vld [vmem:[%s2] sm:$0x1]
        %v623 = vlaneseq
        %v624 = vshrl.u32 %v623, 7
        %v625 = vsub.s32 0, %v624
        %v626 = vrot.slane %v621, %v625
        %v628 = vadd.f32 %v605, %v626
        %v629 = vadd.f32 %v606, %v626
        %v630 = vadd.f32 %v607, %v626
        %v631 = vadd.f32 %v608, %v626
        %v632 = vadd.f32 %v609, %v626
        %v633 = vadd.f32 %v610, %v626
        %v634 = vadd.f32 %v611, %v626
        %v635 = vadd.f32 %v612, %v626
        %v636 = vadd.f32 %v613, %v626
        %v637 = vadd.f32 %v614, %v626
        %v638 = vadd.f32 %v615, %v626
        %v639 = vadd.f32 %v616, %v626
        %v640 = vadd.f32 %v617, %v626
        %v641 = vadd.f32 %v618, %v626
        %v642 = vadd.f32 %v619, %v626
        %v643 = vadd.f32 %v620, %v626
        %v644 = vld [vmem:[%s3] sm:$0xf]
        %v645 = vld [vmem:[%s3 + $0x4] sm:$0xf]
        %v646 = vld [vmem:[%s3 + $0x8] sm:$0xf]
        %v647 = vld [vmem:[%s3 + $0xc] sm:$0xf]
        %v648 = vpack.c.bf16 %v629, %v628
        %v649 = vpack.c.bf16 %v631, %v630
        %v650 = vpack.c.bf16 %v633, %v632
        %v651 = vpack.c.bf16 %v635, %v634
        %v652 = vpack.c.bf16 %v637, %v636
        %v653 = vpack.c.bf16 %v639, %v638
        %v654 = vpack.c.bf16 %v641, %v640
        %v655 = vpack.c.bf16 %v643, %v642
        %v656 = vld [vmem:[%s4] sm:$0x1]
        %v658 = vlaneseq
        %v659 = vshrl.u32 %v658, 7
        %v660 = vsub.s32 0, %v659
        %v661 = vrot.slane %v656, %v660
        %v667 = vunpack.c.l.b16 %v644
        %v668 = vunpack.c.l.b16 %v645
        %v669 = vunpack.c.l.b16 %v646
        %v670 = vunpack.c.l.b16 %v647
        %v671 = vpack.c.b16 %v668, %v667
        %v672 = vpack.c.b16 %v670, %v669
        %v676 = vsel %vm388, %v648, 0
        %v679 = vsel %vm388, %v649, 0
        %v682 = vsel %vm388, %v650, 0
        %v685 = vsel %vm388, %v651, 0
        %v688 = vsel %vm388, %v652, 0
        %v691 = vsel %vm388, %v653, 0
        %v694 = vsel %vm388, %v654, 0
        %v697 = vsel %vm388, %v655, 0
        %699 = vmatprep.subr.bf16.mxu0 0
        %700 = vmatpush1.bf16.msra.mxu0 0
        %701 = vmatprep.subr.bf16.mxu0 0
        %702 = vmatpush1.bf16.msra.mxu0 0
        %703 = vmatprep.subr.bf16.mxu0 0
        %704 = vmatpush1.bf16.msra.mxu0 0
        %705 = vmatprep.subr.bf16.mxu0 0
        %706 = vmatpush1.bf16.msra.mxu0 0
        %707 = vmatprep.subr.bf16.mxu0 0
        %708 = vmatpush1.bf16.msra.mxu0 0
        %709 = vmatprep.subr.bf16.mxu0 0
        %710 = vmatpush1.bf16.msra.mxu0 0
        %711 = vmatprep.subr.bf16.mxu0 0
        %712 = vmatpush1.bf16.msra.mxu0 %v672
        %713 = vmatprep.subr.bf16.mxu0 0
        %714 = vmatpush1.bf16.msra.mxu0 %v671
        %715 = vmatprep.subr.bf16.mxu0 0
        %716 = vmatpush2.bf16.msra.mxu0 0
        %717 = vmatprep.subr.bf16.mxu0 0
        %718 = vmatpush2.bf16.msra.mxu0 0
        %719 = vmatprep.subr.bf16.mxu0 0
        %720 = vmatpush2.bf16.msra.mxu0 0
        %721 = vmatprep.subr.bf16.mxu0 0
        %722 = vmatpush2.bf16.msra.mxu0 0
        %723 = vmatprep.subr.bf16.mxu0 0
        %724 = vmatpush2.bf16.msra.mxu0 0
        %725 = vmatprep.subr.bf16.mxu0 0
        %726 = vmatpush2.bf16.msra.mxu0 0
        %727 = vmatprep.subr.bf16.mxu0 0
        %728 = vmatpush2.bf16.msra.mxu0 0
        %729 = vmatprep.subr.bf16.mxu0 0
        %730 = vmatpush2.bf16.msra.mxu0 0
        %731 = vmatprep.mubr.bf16.mxu0 0
        %732 = vmatmul.mubr.bf16.gmra.mxu0 %v676
        %v733 = vpop.f32.mrf.mxu0
        %v734 = vadd.f32 %v661, %v733
        %v735 = vpop.f32.mrf.mxu0
        %v736 = vpop.f32.mrf.mxu0
        %v737 = vadd.f32 %v661, %v736
        %v738 = vpop.f32.mrf.mxu0
        %739 = vmatprep.mubr.bf16.mxu0 0
        %740 = vmatmul.mubr.bf16.gmra.mxu0 %v679
        %v741 = vpop.f32.mrf.mxu0
        %v742 = vadd.f32 %v661, %v741
        %v743 = vpop.f32.mrf.mxu0
        %v744 = vpop.f32.mrf.mxu0
        %v745 = vadd.f32 %v661, %v744
        %v746 = vpop.f32.mrf.mxu0
        %747 = vmatprep.mubr.bf16.mxu0 0
        %748 = vmatmul.mubr.bf16.gmra.mxu0 %v682
        %v749 = vpop.f32.mrf.mxu0
        %v750 = vadd.f32 %v661, %v749
        %v751 = vpop.f32.mrf.mxu0
        %v752 = vpop.f32.mrf.mxu0
        %v753 = vadd.f32 %v661, %v752
        %v754 = vpop.f32.mrf.mxu0
        %755 = vmatprep.mubr.bf16.mxu0 0
        %756 = vmatmul.mubr.bf16.gmra.mxu0 %v685
        %v757 = vpop.f32.mrf.mxu0
        %v758 = vadd.f32 %v661, %v757
        %v759 = vpop.f32.mrf.mxu0
        %v760 = vpop.f32.mrf.mxu0
        %v761 = vadd.f32 %v661, %v760
        %v762 = vpop.f32.mrf.mxu0
        %763 = vmatprep.mubr.bf16.mxu0 0
        %764 = vmatmul.mubr.bf16.gmra.mxu0 %v688
        %v765 = vpop.f32.mrf.mxu0
        %v766 = vadd.f32 %v661, %v765
        %v767 = vpop.f32.mrf.mxu0
        %v768 = vpop.f32.mrf.mxu0
        %v769 = vadd.f32 %v661, %v768
        %v770 = vpop.f32.mrf.mxu0
        %771 = vmatprep.mubr.bf16.mxu0 0
        %772 = vmatmul.mubr.bf16.gmra.mxu0 %v691
        %v773 = vpop.f32.mrf.mxu0
        %v774 = vadd.f32 %v661, %v773
        %v775 = vpop.f32.mrf.mxu0
        %v776 = vpop.f32.mrf.mxu0
        %v777 = vadd.f32 %v661, %v776
        %v778 = vpop.f32.mrf.mxu0
        %779 = vmatprep.mubr.bf16.mxu0 0
        %780 = vmatmul.mubr.bf16.gmra.mxu0 %v694
        %v781 = vpop.f32.mrf.mxu0
        %v782 = vadd.f32 %v661, %v781
        %v783 = vpop.f32.mrf.mxu0
        %v784 = vpop.f32.mrf.mxu0
        %v785 = vadd.f32 %v661, %v784
        %v786 = vpop.f32.mrf.mxu0
        %787 = vmatprep.mubr.bf16.mxu0 0
        %788 = vmatmul.mubr.bf16.gmra.mxu0 %v697
        %v789 = vpop.f32.mrf.mxu0
        %v790 = vadd.f32 %v661, %v789
        %v791 = vpop.f32.mrf.mxu0
        %v792 = vpop.f32.mrf.mxu0
        %v793 = vadd.f32 %v661, %v792
        %v794 = vpop.f32.mrf.mxu0
        %795 = vdwg.mxu0
        %vm796 = vcmask 130048
        %797 = vst.msk [vmem:[#allocation2] sm:$0xff] %vm796, 0.0
        %798 = vst.msk [vmem:[#allocation2 + $0x8] sm:$0xff] %vm796, 0.0
        %s799 = scalar_lea.vmem [#allocation2], 144
        %800 = vst.msk [vmem:[%s799] sm:$0xff] %vm796, 0.0
        %801 = vst.msk [vmem:[%s799 + $0x8] sm:$0xff] %vm796, 0.0
        %s802 = scalar_lea.vmem [#allocation2], 16
        %803 = vst.msk [vmem:[%s802] sm:$0xff] %vm796, %v734
        %804 = vst.msk [vmem:[%s802 + $0x8] sm:$0xff] %vm796, %v737
        %805 = vst.msk [vmem:[%s802 + $0x10] sm:$0xff] %vm796, %v742
        %806 = vst.msk [vmem:[%s802 + $0x18] sm:$0xff] %vm796, %v745
        %807 = vst.msk [vmem:[%s802 + $0x20] sm:$0xff] %vm796, %v750
        %808 = vst.msk [vmem:[%s802 + $0x28] sm:$0xff] %vm796, %v753
        %809 = vst.msk [vmem:[%s802 + $0x30] sm:$0xff] %vm796, %v758
        %810 = vst.msk [vmem:[%s802 + $0x38] sm:$0xff] %vm796, %v761
        %811 = vst.msk [vmem:[%s802 + $0x40] sm:$0xff] %vm796, %v766
        %812 = vst.msk [vmem:[%s802 + $0x48] sm:$0xff] %vm796, %v769
        %813 = vst.msk [vmem:[%s802 + $0x50] sm:$0xff] %vm796, %v774
        %814 = vst.msk [vmem:[%s802 + $0x58] sm:$0xff] %vm796, %v777
        %815 = vst.msk [vmem:[%s802 + $0x60] sm:$0xff] %vm796, %v782
        %816 = vst.msk [vmem:[%s802 + $0x68] sm:$0xff] %vm796, %v785
        %817 = vst.msk [vmem:[%s802 + $0x70] sm:$0xff] %vm796, %v790
        %818 = vst.msk [vmem:[%s802 + $0x78] sm:$0xff] %vm796, %v793
        %v819 = vld [vmem:[%s5] sm:$0x7]
        %v820 = vld [vmem:[#allocation2] sm:$0xff]
        %v821 = vld [vmem:[#allocation2 + $0x8] sm:$0xff]
        %v822 = vld [vmem:[#allocation2 + $0x10] sm:$0xff]
        %v823 = vld [vmem:[#allocation2 + $0x18] sm:$0xff]
        %v824 = vld [vmem:[#allocation2 + $0x20] sm:$0xff]
        %v825 = vld [vmem:[#allocation2 + $0x28] sm:$0xff]
        %v826 = vld [vmem:[#allocation2 + $0x30] sm:$0xff]
        %v827 = vld [vmem:[#allocation2 + $0x38] sm:$0xff]
        %v828 = vld [vmem:[#allocation2 + $0x40] sm:$0xff]
        %v829 = vld [vmem:[#allocation2 + $0x48] sm:$0xff]
        %v830 = vld [vmem:[#allocation2 + $0x50] sm:$0xff]
        %v831 = vld [vmem:[#allocation2 + $0x58] sm:$0xff]
        %v832 = vld [vmem:[#allocation2 + $0x60] sm:$0xff]
        %v833 = vld [vmem:[#allocation2 + $0x68] sm:$0xff]
        %v834 = vld [vmem:[#allocation2 + $0x70] sm:$0xff]
        %v835 = vld [vmem:[#allocation2 + $0x78] sm:$0xff]
        %v836 = vlaneseq
        %v837 = vshrl.u32 %v836, 7
        %v838 = vsub.s32 0, %v837
        %v839 = vrot.slane %v819, %v838
        %v840 = vmul.f32 %v820, %v839
        %v841 = vmul.f32 %v821, %v839
        %v842 = vmul.f32 %v822, %v839
        %v843 = vmul.f32 %v823, %v839
        %v844 = vmul.f32 %v824, %v839
        %v845 = vmul.f32 %v825, %v839
        %v846 = vmul.f32 %v826, %v839
        %v847 = vmul.f32 %v827, %v839
        %v848 = vmul.f32 %v828, %v839
        %v849 = vmul.f32 %v829, %v839
        %v850 = vmul.f32 %v830, %v839
        %v851 = vmul.f32 %v831, %v839
        %v852 = vmul.f32 %v832, %v839
        %v853 = vmul.f32 %v833, %v839
        %v854 = vmul.f32 %v834, %v839
        %v855 = vmul.f32 %v835, %v839
        %v856 = vld [vmem:[%s802] sm:$0xff]
        %v857 = vld [vmem:[%s802 + $0x8] sm:$0xff]
        %v858 = vld [vmem:[%s802 + $0x10] sm:$0xff]
        %v859 = vld [vmem:[%s802 + $0x18] sm:$0xff]
        %v860 = vld [vmem:[%s802 + $0x20] sm:$0xff]
        %v861 = vld [vmem:[%s802 + $0x28] sm:$0xff]
        %v862 = vld [vmem:[%s802 + $0x30] sm:$0xff]
        %v863 = vld [vmem:[%s802 + $0x38] sm:$0xff]
        %v864 = vld [vmem:[%s802 + $0x40] sm:$0xff]
        %v865 = vld [vmem:[%s802 + $0x48] sm:$0xff]
        %v866 = vld [vmem:[%s802 + $0x50] sm:$0xff]
        %v867 = vld [vmem:[%s802 + $0x58] sm:$0xff]
        %v868 = vld [vmem:[%s802 + $0x60] sm:$0xff]
        %v869 = vld [vmem:[%s802 + $0x68] sm:$0xff]
        %v870 = vld [vmem:[%s802 + $0x70] sm:$0xff]
        %v871 = vld [vmem:[%s802 + $0x78] sm:$0xff]
        %v872 = vlaneseq
        %v873 = vshrl.u32 %v872, 7
        %v874 = vsub.s32 1, %v873
        %v875 = vrot.slane %v819, %v874
        %v876 = vmul.f32 %v856, %v875
        %v877 = vmul.f32 %v857, %v875
        %v878 = vmul.f32 %v858, %v875
        %v879 = vmul.f32 %v859, %v875
        %v880 = vmul.f32 %v860, %v875
        %v881 = vmul.f32 %v861, %v875
        %v882 = vmul.f32 %v862, %v875
        %v883 = vmul.f32 %v863, %v875
        %v884 = vmul.f32 %v864, %v875
        %v885 = vmul.f32 %v865, %v875
        %v886 = vmul.f32 %v866, %v875
        %v887 = vmul.f32 %v867, %v875
        %v888 = vmul.f32 %v868, %v875
        %v889 = vmul.f32 %v869, %v875
        %v890 = vmul.f32 %v870, %v875
        %v891 = vmul.f32 %v871, %v875
        %v892 = vadd.f32 %v840, %v876
        %v893 = vadd.f32 %v841, %v877
        %v894 = vadd.f32 %v842, %v878
        %v895 = vadd.f32 %v843, %v879
        %v896 = vadd.f32 %v844, %v880
        %v897 = vadd.f32 %v845, %v881
        %v898 = vadd.f32 %v846, %v882
        %v899 = vadd.f32 %v847, %v883
        %v900 = vadd.f32 %v848, %v884
        %v901 = vadd.f32 %v849, %v885
        %v902 = vadd.f32 %v850, %v886
        %v903 = vadd.f32 %v851, %v887
        %v904 = vadd.f32 %v852, %v888
        %v905 = vadd.f32 %v853, %v889
        %v906 = vadd.f32 %v854, %v890
        %v907 = vadd.f32 %v855, %v891
        %s908 = scalar_lea.vmem [#allocation2], 32
        %v909 = vld [vmem:[%s908] sm:$0xff]
        %v910 = vld [vmem:[%s908 + $0x8] sm:$0xff]
        %v911 = vld [vmem:[%s908 + $0x10] sm:$0xff]
        %v912 = vld [vmem:[%s908 + $0x18] sm:$0xff]
        %v913 = vld [vmem:[%s908 + $0x20] sm:$0xff]
        %v914 = vld [vmem:[%s908 + $0x28] sm:$0xff]
        %v915 = vld [vmem:[%s908 + $0x30] sm:$0xff]
        %v916 = vld [vmem:[%s908 + $0x38] sm:$0xff]
        %v917 = vld [vmem:[%s908 + $0x40] sm:$0xff]
        %v918 = vld [vmem:[%s908 + $0x48] sm:$0xff]
        %v919 = vld [vmem:[%s908 + $0x50] sm:$0xff]
        %v920 = vld [vmem:[%s908 + $0x58] sm:$0xff]
        %v921 = vld [vmem:[%s908 + $0x60] sm:$0xff]
        %v922 = vld [vmem:[%s908 + $0x68] sm:$0xff]
        %v923 = vld [vmem:[%s908 + $0x70] sm:$0xff]
        %v924 = vld [vmem:[%s908 + $0x78] sm:$0xff]
        %v925 = vlaneseq
        %v926 = vshrl.u32 %v925, 7
        %v927 = vsub.s32 2, %v926
        %v928 = vrot.slane %v819, %v927
        %v929 = vmul.f32 %v909, %v928
        %v930 = vmul.f32 %v910, %v928
        %v931 = vmul.f32 %v911, %v928
        %v932 = vmul.f32 %v912, %v928
        %v933 = vmul.f32 %v913, %v928
        %v934 = vmul.f32 %v914, %v928
        %v935 = vmul.f32 %v915, %v928
        %v936 = vmul.f32 %v916, %v928
        %v937 = vmul.f32 %v917, %v928
        %v938 = vmul.f32 %v918, %v928
        %v939 = vmul.f32 %v919, %v928
        %v940 = vmul.f32 %v920, %v928
        %v941 = vmul.f32 %v921, %v928
        %v942 = vmul.f32 %v922, %v928
        %v943 = vmul.f32 %v923, %v928
        %v944 = vmul.f32 %v924, %v928
        %v945 = vadd.f32 %v892, %v929
        %v946 = vadd.f32 %v893, %v930
        %v947 = vadd.f32 %v894, %v931
        %v948 = vadd.f32 %v895, %v932
        %v949 = vadd.f32 %v896, %v933
        %v950 = vadd.f32 %v897, %v934
        %v951 = vadd.f32 %v898, %v935
        %v952 = vadd.f32 %v899, %v936
        %v953 = vadd.f32 %v900, %v937
        %v954 = vadd.f32 %v901, %v938
        %v955 = vadd.f32 %v902, %v939
        %v956 = vadd.f32 %v903, %v940
        %v957 = vadd.f32 %v904, %v941
        %v958 = vadd.f32 %v905, %v942
        %v959 = vadd.f32 %v906, %v943
        %v960 = vadd.f32 %v907, %v944
        %v961 = vld [vmem:[%s6] sm:$0x1]
        %v963 = vlaneseq
        %v964 = vshrl.u32 %v963, 7
        %v965 = vsub.s32 0, %v964
        %v966 = vrot.slane %v961, %v965
        %v968 = vadd.f32 %v945, %v966
        %v969 = vadd.f32 %v946, %v966
        %v970 = vadd.f32 %v947, %v966
        %v971 = vadd.f32 %v948, %v966
        %v972 = vadd.f32 %v949, %v966
        %v973 = vadd.f32 %v950, %v966
        %v974 = vadd.f32 %v951, %v966
        %v975 = vadd.f32 %v952, %v966
        %v976 = vadd.f32 %v953, %v966
        %v977 = vadd.f32 %v954, %v966
        %v978 = vadd.f32 %v955, %v966
        %v979 = vadd.f32 %v956, %v966
        %v980 = vadd.f32 %v957, %v966
        %v981 = vadd.f32 %v958, %v966
        %v982 = vadd.f32 %v959, %v966
        %v983 = vadd.f32 %v960, %v966
        %v984 = vmul.f32 %v968, 1.702
        %v985 = vmul.f32 %v969, 1.702
        %v986 = vmul.f32 %v970, 1.702
        %v987 = vmul.f32 %v971, 1.702
        %v988 = vmul.f32 %v972, 1.702
        %v989 = vmul.f32 %v973, 1.702
        %v990 = vmul.f32 %v974, 1.702
        %v991 = vmul.f32 %v975, 1.702
        %v992 = vmul.f32 %v976, 1.702
        %v993 = vmul.f32 %v977, 1.702
        %v994 = vmul.f32 %v978, 1.702
        %v995 = vmul.f32 %v979, 1.702
        %v996 = vmul.f32 %v980, 1.702
        %v997 = vmul.f32 %v981, 1.702
        %v998 = vmul.f32 %v982, 1.702
        %v999 = vmul.f32 %v983, 1.702
        %v1000 = vxor.u32 %v984, 2147483648
        %v1001 = vxor.u32 %v985, 2147483648
        %v1002 = vxor.u32 %v986, 2147483648
        %v1003 = vxor.u32 %v987, 2147483648
        %v1004 = vxor.u32 %v988, 2147483648
        %v1005 = vxor.u32 %v989, 2147483648
        %v1006 = vxor.u32 %v990, 2147483648
        %v1007 = vxor.u32 %v991, 2147483648
        %v1008 = vxor.u32 %v992, 2147483648
        %v1009 = vxor.u32 %v993, 2147483648
        %v1010 = vxor.u32 %v994, 2147483648
        %v1011 = vxor.u32 %v995, 2147483648
        %v1012 = vxor.u32 %v996, 2147483648
        %v1013 = vxor.u32 %v997, 2147483648
        %v1014 = vxor.u32 %v998, 2147483648
        %v1015 = vxor.u32 %v999, 2147483648
        %v1016 = vmul.f32 %v1000, 1.442695
        %v1017 = vpow.pop %v1016
        %v1018 = vmul.f32 %v1001, 1.442695
        %v1019 = vpow.pop %v1018
        %v1020 = vmul.f32 %v1002, 1.442695
        %v1021 = vpow.pop %v1020
        %v1022 = vmul.f32 %v1003, 1.442695
        %v1023 = vpow.pop %v1022
        %v1024 = vmul.f32 %v1004, 1.442695
        %v1025 = vpow.pop %v1024
        %v1026 = vmul.f32 %v1005, 1.442695
        %v1027 = vpow.pop %v1026
        %v1028 = vmul.f32 %v1006, 1.442695
        %v1029 = vpow.pop %v1028
        %v1030 = vmul.f32 %v1007, 1.442695
        %v1031 = vpow.pop %v1030
        %v1032 = vmul.f32 %v1008, 1.442695
        %v1033 = vpow.pop %v1032
        %v1034 = vmul.f32 %v1009, 1.442695
        %v1035 = vpow.pop %v1034
        %v1036 = vmul.f32 %v1010, 1.442695
        %v1037 = vpow.pop %v1036
        %v1038 = vmul.f32 %v1011, 1.442695
        %v1039 = vpow.pop %v1038
        %v1040 = vmul.f32 %v1012, 1.442695
        %v1041 = vpow.pop %v1040
        %v1042 = vmul.f32 %v1013, 1.442695
        %v1043 = vpow.pop %v1042
        %v1044 = vmul.f32 %v1014, 1.442695
        %v1045 = vpow.pop %v1044
        %v1046 = vmul.f32 %v1015, 1.442695
        %v1047 = vpow.pop %v1046
        %v1048 = vadd.f32 %v1017, 1.0
        %v1049 = vadd.f32 %v1019, 1.0
        %v1050 = vadd.f32 %v1021, 1.0
        %v1051 = vadd.f32 %v1023, 1.0
        %v1052 = vadd.f32 %v1025, 1.0
        %v1053 = vadd.f32 %v1027, 1.0
        %v1054 = vadd.f32 %v1029, 1.0
        %v1055 = vadd.f32 %v1031, 1.0
        %v1056 = vadd.f32 %v1033, 1.0
        %v1057 = vadd.f32 %v1035, 1.0
        %v1058 = vadd.f32 %v1037, 1.0
        %v1059 = vadd.f32 %v1039, 1.0
        %v1060 = vadd.f32 %v1041, 1.0
        %v1061 = vadd.f32 %v1043, 1.0
        %v1062 = vadd.f32 %v1045, 1.0
        %v1063 = vadd.f32 %v1047, 1.0
        %v1064 = vrcp.pop %v1048
        %v1065 = vmul.f32 1.0, %v1064
        %v1066 = vrcp.pop %v1049
        %v1067 = vmul.f32 1.0, %v1066
        %v1068 = vrcp.pop %v1050
        %v1069 = vmul.f32 1.0, %v1068
        %v1070 = vrcp.pop %v1051
        %v1071 = vmul.f32 1.0, %v1070
        %v1072 = vrcp.pop %v1052
        %v1073 = vmul.f32 1.0, %v1072
        %v1074 = vrcp.pop %v1053
        %v1075 = vmul.f32 1.0, %v1074
        %v1076 = vrcp.pop %v1054
        %v1077 = vmul.f32 1.0, %v1076
        %v1078 = vrcp.pop %v1055
        %v1079 = vmul.f32 1.0, %v1078
        %v1080 = vrcp.pop %v1056
        %v1081 = vmul.f32 1.0, %v1080
        %v1082 = vrcp.pop %v1057
        %v1083 = vmul.f32 1.0, %v1082
        %v1084 = vrcp.pop %v1058
        %v1085 = vmul.f32 1.0, %v1084
        %v1086 = vrcp.pop %v1059
        %v1087 = vmul.f32 1.0, %v1086
        %v1088 = vrcp.pop %v1060
        %v1089 = vmul.f32 1.0, %v1088
        %v1090 = vrcp.pop %v1061
        %v1091 = vmul.f32 1.0, %v1090
        %v1092 = vrcp.pop %v1062
        %v1093 = vmul.f32 1.0, %v1092
        %v1094 = vrcp.pop %v1063
        %v1095 = vmul.f32 1.0, %v1094
        %v1096 = vmul.f32 %v968, %v1065
        %v1097 = vmul.f32 %v969, %v1067
        %v1098 = vmul.f32 %v970, %v1069
        %v1099 = vmul.f32 %v971, %v1071
        %v1100 = vmul.f32 %v972, %v1073
        %v1101 = vmul.f32 %v973, %v1075
        %v1102 = vmul.f32 %v974, %v1077
        %v1103 = vmul.f32 %v975, %v1079
        %v1104 = vmul.f32 %v976, %v1081
        %v1105 = vmul.f32 %v977, %v1083
        %v1106 = vmul.f32 %v978, %v1085
        %v1107 = vmul.f32 %v979, %v1087
        %v1108 = vmul.f32 %v980, %v1089
        %v1109 = vmul.f32 %v981, %v1091
        %v1110 = vmul.f32 %v982, %v1093
        %v1111 = vmul.f32 %v983, %v1095
        %v1112 = vld [vmem:[%s7] sm:$0xf]
        %v1113 = vld [vmem:[%s7 + $0x4] sm:$0xf]
        %v1114 = vpack.c.bf16 %v1097, %v1096
        %v1115 = vpack.c.bf16 %v1099, %v1098
        %v1116 = vpack.c.bf16 %v1101, %v1100
        %v1117 = vpack.c.bf16 %v1103, %v1102
        %v1118 = vpack.c.bf16 %v1105, %v1104
        %v1119 = vpack.c.bf16 %v1107, %v1106
        %v1120 = vpack.c.bf16 %v1109, %v1108
        %v1121 = vpack.c.bf16 %v1111, %v1110
        %v1122 = vld [vmem:[%s8] sm:$0x1]
        %v1124 = vlaneseq
        %v1125 = vshrl.u32 %v1124, 7
        %v1126 = vsub.s32 0, %v1125
        %v1127 = vrot.slane %v1122, %v1126
        %v1131 = vunpack.c.l.b16 %v1112
        %v1132 = vunpack.c.l.b16 %v1113
        %v1133 = vpack.c.b16 %v1132, %v1131
        %v1136 = vsel %vm796, %v1114, 0
        %v1139 = vsel %vm796, %v1115, 0
        %v1142 = vsel %vm796, %v1116, 0
        %v1145 = vsel %vm796, %v1117, 0
        %v1148 = vsel %vm796, %v1118, 0
        %v1151 = vsel %vm796, %v1119, 0
        %v1154 = vsel %vm796, %v1120, 0
        %v1157 = vsel %vm796, %v1121, 0
        %1159 = vmatprep.subr.bf16.mxu0 0
        %1160 = vmatpush1.bf16.msra.mxu0 0
        %1161 = vmatprep.subr.bf16.mxu0 0
        %1162 = vmatpush1.bf16.msra.mxu0 0
        %1163 = vmatprep.subr.bf16.mxu0 0
        %1164 = vmatpush1.bf16.msra.mxu0 0
        %1165 = vmatprep.subr.bf16.mxu0 0
        %1166 = vmatpush1.bf16.msra.mxu0 0
        %1167 = vmatprep.subr.bf16.mxu0 0
        %1168 = vmatpush1.bf16.msra.mxu0 0
        %1169 = vmatprep.subr.bf16.mxu0 0
        %1170 = vmatpush1.bf16.msra.mxu0 0
        %1171 = vmatprep.subr.bf16.mxu0 0
        %1172 = vmatpush1.bf16.msra.mxu0 0
        %1173 = vmatprep.subr.bf16.mxu0 0
        %1174 = vmatpush1.bf16.msra.mxu0 %v1133
        %1175 = vmatprep.subr.bf16.mxu0 0
        %1176 = vmatpush2.bf16.msra.mxu0 0
        %1177 = vmatprep.subr.bf16.mxu0 0
        %1178 = vmatpush2.bf16.msra.mxu0 0
        %1179 = vmatprep.subr.bf16.mxu0 0
        %1180 = vmatpush2.bf16.msra.mxu0 0
        %1181 = vmatprep.subr.bf16.mxu0 0
        %1182 = vmatpush2.bf16.msra.mxu0 0
        %1183 = vmatprep.subr.bf16.mxu0 0
        %1184 = vmatpush2.bf16.msra.mxu0 0
        %1185 = vmatprep.subr.bf16.mxu0 0
        %1186 = vmatpush2.bf16.msra.mxu0 0
        %1187 = vmatprep.subr.bf16.mxu0 0
        %1188 = vmatpush2.bf16.msra.mxu0 0
        %1189 = vmatprep.subr.bf16.mxu0 0
        %1190 = vmatpush2.bf16.msra.mxu0 0
        %1191 = vmatprep.mubr.bf16.mxu0 0
        %1192 = vmatmul.mubr.bf16.gmra.mxu0 %v1136
        %v1193 = vpop.f32.mrf.mxu0
        %v1194 = vadd.f32 %v1127, %v1193
        %v1195 = vpop.f32.mrf.mxu0
        %v1196 = vpop.f32.mrf.mxu0
        %v1197 = vadd.f32 %v1127, %v1196
        %v1198 = vpop.f32.mrf.mxu0
        %1199 = vmatprep.mubr.bf16.mxu0 0
        %1200 = vmatmul.mubr.bf16.gmra.mxu0 %v1139
        %v1201 = vpop.f32.mrf.mxu0
        %v1202 = vadd.f32 %v1127, %v1201
        %v1203 = vpop.f32.mrf.mxu0
        %v1204 = vpop.f32.mrf.mxu0
        %v1205 = vadd.f32 %v1127, %v1204
        %v1206 = vpop.f32.mrf.mxu0
        %1207 = vmatprep.mubr.bf16.mxu0 0
        %1208 = vmatmul.mubr.bf16.gmra.mxu0 %v1142
        %v1209 = vpop.f32.mrf.mxu0
        %v1210 = vadd.f32 %v1127, %v1209
        %v1211 = vpop.f32.mrf.mxu0
        %v1212 = vpop.f32.mrf.mxu0
        %v1213 = vadd.f32 %v1127, %v1212
        %v1214 = vpop.f32.mrf.mxu0
        %1215 = vmatprep.mubr.bf16.mxu0 0
        %1216 = vmatmul.mubr.bf16.gmra.mxu0 %v1145
        %v1217 = vpop.f32.mrf.mxu0
        %v1218 = vadd.f32 %v1127, %v1217
        %v1219 = vpop.f32.mrf.mxu0
        %v1220 = vpop.f32.mrf.mxu0
        %v1221 = vadd.f32 %v1127, %v1220
        %v1222 = vpop.f32.mrf.mxu0
        %1223 = vmatprep.mubr.bf16.mxu0 0
        %1224 = vmatmul.mubr.bf16.gmra.mxu0 %v1148
        %v1225 = vpop.f32.mrf.mxu0
        %v1226 = vadd.f32 %v1127, %v1225
        %v1227 = vpop.f32.mrf.mxu0
        %v1228 = vpop.f32.mrf.mxu0
        %v1229 = vadd.f32 %v1127, %v1228
        %v1230 = vpop.f32.mrf.mxu0
        %1231 = vmatprep.mubr.bf16.mxu0 0
        %1232 = vmatmul.mubr.bf16.gmra.mxu0 %v1151
        %v1233 = vpop.f32.mrf.mxu0
        %v1234 = vadd.f32 %v1127, %v1233
        %v1235 = vpop.f32.mrf.mxu0
        %v1236 = vpop.f32.mrf.mxu0
        %v1237 = vadd.f32 %v1127, %v1236
        %v1238 = vpop.f32.mrf.mxu0
        %1239 = vmatprep.mubr.bf16.mxu0 0
        %1240 = vmatmul.mubr.bf16.gmra.mxu0 %v1154
        %v1241 = vpop.f32.mrf.mxu0
        %v1242 = vadd.f32 %v1127, %v1241
        %v1243 = vpop.f32.mrf.mxu0
        %v1244 = vpop.f32.mrf.mxu0
        %v1245 = vadd.f32 %v1127, %v1244
        %v1246 = vpop.f32.mrf.mxu0
        %1247 = vmatprep.mubr.bf16.mxu0 0
        %1248 = vmatmul.mubr.bf16.gmra.mxu0 %v1157
        %v1249 = vpop.f32.mrf.mxu0
        %v1250 = vadd.f32 %v1127, %v1249
        %v1251 = vpop.f32.mrf.mxu0
        %v1252 = vpop.f32.mrf.mxu0
        %v1253 = vadd.f32 %v1127, %v1252
        %v1254 = vpop.f32.mrf.mxu0
        %1255 = vdwg.mxu0
        %1256 = vst.msk [vmem:[%s368] sm:$0xff] %vm388, %v1194
        %1257 = vst.msk [vmem:[%s368 + $0x8] sm:$0xff] %vm388, %v1197
        %1258 = vst.msk [vmem:[%s368 + $0x10] sm:$0xff] %vm388, %v1202
        %1259 = vst.msk [vmem:[%s368 + $0x18] sm:$0xff] %vm388, %v1205
        %1260 = vst.msk [vmem:[%s368 + $0x20] sm:$0xff] %vm388, %v1210
        %1261 = vst.msk [vmem:[%s368 + $0x28] sm:$0xff] %vm388, %v1213
        %1262 = vst.msk [vmem:[%s368 + $0x30] sm:$0xff] %vm388, %v1218
        %1263 = vst.msk [vmem:[%s368 + $0x38] sm:$0xff] %vm388, %v1221
        %1264 = vst.msk [vmem:[%s368 + $0x40] sm:$0xff] %vm388, %v1226
        %1265 = vst.msk [vmem:[%s368 + $0x48] sm:$0xff] %vm388, %v1229
        %1266 = vst.msk [vmem:[%s368 + $0x50] sm:$0xff] %vm388, %v1234
        %1267 = vst.msk [vmem:[%s368 + $0x58] sm:$0xff] %vm388, %v1237
        %1268 = vst.msk [vmem:[%s368 + $0x60] sm:$0xff] %vm388, %v1242
        %1269 = vst.msk [vmem:[%s368 + $0x68] sm:$0xff] %vm388, %v1245
        %1270 = vst.msk [vmem:[%s368 + $0x70] sm:$0xff] %vm388, %v1250
        %1271 = vst.msk [vmem:[%s368 + $0x78] sm:$0xff] %vm388, %v1253
        %s1272 = sand.u32 %s244, 1
        %s1273 = scalar_lea.sflag [#allocation5], %s1272
        %s1274 = sand.u32 %s244, 1
        %s1275 = smul.addr %s1274, 128
        %s1276 = scalar_lea.vmem [#allocation6], %s1275
        // Predicated region
        $region61: #{tpu_custom_call.1} parent=55 // pred_check
          %p1277 = pneg %p254
        $region62: #{tpu_custom_call.1} parent=55 // pred_check_branch
          %1279 = sbr.rel (%p1277) target = $region64
        $region63: #{tpu_custom_call.1} parent=55 // pred_region
          %s1280 = smul.u32 2, %s31
          %s1282 = ssub.s32 2048, 2048
          %1283 = vsyncadd %s1273, %s1282
          %s1284 = smul.addr %s30, 16
          %s1285 = sadd.s32 %s1280, %s1284
          %s1286 = smul.addr %s1285, 128
          %s1287 = scalar_lea.hbm %s9, %s1286
          %s1288 = sshll.u32 %s1276, 4
          %s1289 = int_to_ptr.vmem [resolvable:$true] %s1288
          %1294 = dma.vmem_to_hbm [thread:$0]  %s1289, 2048, %s1287, %s1273, 128, 128, 8
        $region64: #{tpu_custom_call.1} parent=55 // pred_fallthru
          _
      $region56: #{tpu_custom_call.1} parent=5 // pred_fallthru
        _
      %p1295 = scmp.le.s32.totalorder 2, %s21
      // Predicated region
      $region65: #{tpu_custom_call.1} parent=5 // pred_check
        %p1296 = pneg %p1295
      $region66: #{tpu_custom_call.1} parent=5 // pred_check_branch
        %1298 = sbr.rel (%p1296) target = $region68
      $region67: #{tpu_custom_call.1} parent=5 // pred_region
        %s1299 = ssub.s32 %s21, 2
        // Predicated region
        $region69: #{tpu_custom_call.1} parent=67 // pred_check
          %p1300 = pneg %p260
        $region70: #{tpu_custom_call.1} parent=67 // pred_check_branch
          %1302 = sbr.rel (%p1300) target = $region72
        $region71: #{tpu_custom_call.1} parent=67 // pred_region
          %s1303 = sand.u32 %s245, 1
          %s1304 = scalar_lea.sflag [#allocation5], %s1303
          %s1305 = sand.u32 %s245, 1
          %s1306 = smul.addr %s1305, 128
          %s1307 = scalar_lea.vmem [#allocation6], %s1306
          %1308 = dma.done %s1304, 2048
        $region72: #{tpu_custom_call.1} parent=67 // pred_fallthru
          _
      $region68: #{tpu_custom_call.1} parent=5 // pred_fallthru
        _
    $region6: #{tpu_custom_call.1} parent=1 // loop_footer
      %s25 = sadd.s32 1, %s21
    $region7: #{tpu_custom_call.1} parent=1 // loop_footer_branch
      %20 = sbr.rel target = $region3
    $region8: #{tpu_custom_call.1} parent=1 // loop_exit
      _
    %1309 = vsyncpa [#allocation4], 1
    %s1310 = scalar_lea.sflag [#allocation4], 1
    %1311 = vsyncpa %s1310, 1
    %1312 = vsyncpa [#allocation5], 1
    %s1313 = scalar_lea.sflag [#allocation5], 1
    %1314 = vsyncpa %s1313, 1

// kernel: tpu_custom_call.1
$region0: #{tpu_custom_call.1}
  #allocation0 [shape = 'u32[]', space=smem, size = 0x4, offset = 0x4, fixed_abs, tag = 'smem constant byte address 0x4 - core index']
  #allocation1 [shape = 'u32[144,128]{1,0:T(1,128)}', space=vmem, size = 0x12000, scoped, tag = 'internal scratch']
  #allocation2 [shape = 'f32[10,16,16]{2,1,0:T(8,128)}', space=vmem, size = 0x14000, scoped, tag = 'scratch operand']
  %s0 = inlined_call_operand.hbm [shape: f32[2,8,16,32], index: 0, kind: input, shape index: {}]
  %s1 = inlined_call_operand.vmem [shape: f32[1,32], index: 1, kind: input, shape index: {}]
  %s2 = inlined_call_operand.vmem [shape: f32[1,32], index: 2, kind: input, shape index: {}]
  %s3 = inlined_call_operand.vmem [shape: bf16[32,16], index: 3, kind: input, shape index: {}]
  %s4 = inlined_call_operand.vmem [shape: f32[1,16], index: 4, kind: input, shape index: {}]
  %s5 = inlined_call_operand.vmem [shape: f32[3,16], index: 5, kind: input, shape index: {}]
  %s6 = inlined_call_operand.vmem [shape: f32[1,16], index: 6, kind: input, shape index: {}]
  %s7 = inlined_call_operand.vmem [shape: bf16[16,32], index: 7, kind: input, shape index: {}]
  %s8 = inlined_call_operand.vmem [shape: f32[1,32], index: 8, kind: input, shape index: {}]
  %s9 = inlined_call_operand.hbm [shape: f32[2,8,16,32], index: 9, kind: output, shape index: {}]
  %s10 = sld [smem:[#allocation0]]
  $region73: #{tpu_custom_call.1} parent=0
    _
  %s12 = ssub.s32 1, %s10
  %s13 = scalar_select 0, %s12, %s10
  $region1: #{tpu_custom_call.1} parent=0
    #allocation3 [shape = 'u8[131072]{0}', space=vmem, size = 0x20000, scoped, tag = 'input window, operand 0']
    #allocation4 [shape = 's32[2]{0}', space=sflag, size = 0x8, scoped, tag = 'scoped memory for tpu_custom_call.1']
    #allocation5 [shape = 's32[2]{0}', space=sflag, size = 0x8, scoped, tag = 'scoped memory for tpu_custom_call.1']
    #allocation6 [shape = 'u8[131072]{0}', space=vmem, size = 0x20000, scoped, tag = 'output window, operand 0']
    %14 = vsyncpa [#allocation4], 0
    %s15 = scalar_lea.sflag [#allocation4], 1
    %16 = vsyncpa %s15, 0
    %17 = vsyncpa [#allocation5], 0
    %s18 = scalar_lea.sflag [#allocation5], 1
    %19 = vsyncpa %s18, 0
    loop: start=0, step=1, limit=4
    $region2: #{tpu_custom_call.1} parent=1 // loop_pre_header
      _
    $region3: #{tpu_custom_call.1} parent=1 // loop_header
      %s21 = sphi 0, %s25
      %p22 = scmp.ge.s32.totalorder %s21, 4
      %s28 = sphi 0, %s40
      %s29 = sphi 0, %s36
      %s30 = sphi 0, %s28
      %s31 = sphi 0, %s29
      %s32 = sphi 0, %s30
      %s33 = sphi 0, %s31
      %s45 = sphi 0, %s47
      %s48 = sphi 0, %s45
      %s49 = sphi 0, %s48
      %s65 = sphi 0, %s49
      %s69 = sphi 0, %s69
      %s71 = sphi 0, %s69
      %s72 = sphi 0, %s71
      %s86 = sphi 0, %s72
      %s90 = sphi 0, %s90
      %s92 = sphi 0, %s90
      %s93 = sphi 0, %s92
      %s107 = sphi 0, %s93
      %s111 = sphi 0, %s111
      %s113 = sphi 0, %s111
      %s114 = sphi 0, %s113
      %s128 = sphi 0, %s114
      %s132 = sphi 0, %s132
      %s134 = sphi 0, %s132
      %s135 = sphi 0, %s134
      %s149 = sphi 0, %s135
      %s153 = sphi 0, %s153
      %s155 = sphi 0, %s153
      %s156 = sphi 0, %s155
      %s170 = sphi 0, %s156
      %s174 = sphi 0, %s174
      %s176 = sphi 0, %s174
      %s177 = sphi 0, %s176
      %s191 = sphi 0, %s177
      %s195 = sphi 0, %s195
      %s197 = sphi 0, %s195
      %s198 = sphi 0, %s197
      %s212 = sphi 0, %s198
      %s216 = sphi 0, %s216
      %s218 = sphi 0, %s216
      %s219 = sphi 0, %s218
      %s233 = sphi 0, %s219
      %s241 = sphi 0, %s243
      %s244 = sphi 0, %s241
      %s245 = sphi 0, %s244
      %s261 = sphi 0, %s245
    $region4: #{tpu_custom_call.1} parent=1 // loop_header_branch
      %24 = sbr.rel (%p22) target = $region8
    $region5: #{tpu_custom_call.1} parent=1 // loop_body
      %s26 = ssub.s32 %s21, 1
      %s27 = ssub.s32 %s21, 2
      %s34 = sadd.s32 1, %s29
      %p35 = scmp.ge.s32.totalorder %s34, 1
      %s36 = scalar_select %p35, 0, %s34
      %s37 = sadd.s32 1, %s28
      %s38 = scalar_select %p35, %s37, %s28
      %p39 = scmp.ge.s32.totalorder %s38, 2
      %s40 = scalar_select %p39, 0, %s38
      %s41 = ssub.s32 %s28, %s40
      %s42 = ssub.s32 %s29, %s36
      %s43 = sor.u32 %s41, %s42
      %p44 = scmp.eq.s32.totalorder %s43, 0
      %s46 = sadd.s32 %s45, 1
      %s47 = scalar_select %p44, %s45, %s46
      %p50 = pneg %p44
      %p51 = scmp.eq.s32.totalorder %s21, 1
      %p52 = por %p50, %p51
      %p53 = scmp.ne.s32.totalorder %s45, %s48
      %p54 = scmp.eq.s32.totalorder %s21, 0
      %p55 = por %p53, %p54
      %p56 = scmp.ne.s32.totalorder %s45, %s48
      %p57 = scmp.eq.s32.totalorder %s26, 1
      %p58 = por %p56, %p57
      %p59 = scmp.ne.s32.totalorder %s48, %s49
      %p60 = scmp.eq.s32.totalorder %s26, 0
      %p61 = por %p59, %p60
      %p62 = scmp.ne.s32.totalorder %s48, %s49
      %p63 = scmp.eq.s32.totalorder %s27, 1
      %p64 = por %p62, %p63
      %p66 = scmp.ne.s32.totalorder %s49, %s65
      %p67 = scmp.eq.s32.totalorder %s27, 0
      %p68 = por %p66, %p67
      %s70 = sadd.s32 %s69, 1
      %p73 = scmp.eq.s32.totalorder %s21, 1
      %p74 = scmp.ne.s32.totalorder %s69, %s71
      %p75 = scmp.eq.s32.totalorder %s21, 0
      %p76 = por %p74, %p75
      %p77 = scmp.ne.s32.totalorder %s69, %s71
      %p78 = scmp.eq.s32.totalorder %s26, 1
      %p79 = por %p77, %p78
      %p80 = scmp.ne.s32.totalorder %s71, %s72
      %p81 = scmp.eq.s32.totalorder %s26, 0
      %p82 = por %p80, %p81
      %p83 = scmp.ne.s32.totalorder %s71, %s72
      %p84 = scmp.eq.s32.totalorder %s27, 1
      %p85 = por %p83, %p84
      %p87 = scmp.ne.s32.totalorder %s72, %s86
      %p88 = scmp.eq.s32.totalorder %s27, 0
      %p89 = por %p87, %p88
      %s91 = sadd.s32 %s90, 1
      %p94 = scmp.eq.s32.totalorder %s21, 1
      %p95 = scmp.ne.s32.totalorder %s90, %s92
      %p96 = scmp.eq.s32.totalorder %s21, 0
      %p97 = por %p95, %p96
      %p98 = scmp.ne.s32.totalorder %s90, %s92
      %p99 = scmp.eq.s32.totalorder %s26, 1
      %p100 = por %p98, %p99
      %p101 = scmp.ne.s32.totalorder %s92, %s93
      %p102 = scmp.eq.s32.totalorder %s26, 0
      %p103 = por %p101, %p102
      %p104 = scmp.ne.s32.totalorder %s92, %s93
      %p105 = scmp.eq.s32.totalorder %s27, 1
      %p106 = por %p104, %p105
      %p108 = scmp.ne.s32.totalorder %s93, %s107
      %p109 = scmp.eq.s32.totalorder %s27, 0
      %p110 = por %p108, %p109
      %s112 = sadd.s32 %s111, 1
      %p115 = scmp.eq.s32.totalorder %s21, 1
      %p116 = scmp.ne.s32.totalorder %s111, %s113
      %p117 = scmp.eq.s32.totalorder %s21, 0
      %p118 = por %p116, %p117
      %p119 = scmp.ne.s32.totalorder %s111, %s113
      %p120 = scmp.eq.s32.totalorder %s26, 1
      %p121 = por %p119, %p120
      %p122 = scmp.ne.s32.totalorder %s113, %s114
      %p123 = scmp.eq.s32.totalorder %s26, 0
      %p124 = por %p122, %p123
      %p125 = scmp.ne.s32.totalorder %s113, %s114
      %p126 = scmp.eq.s32.totalorder %s27, 1
      %p127 = por %p125, %p126
      %p129 = scmp.ne.s32.totalorder %s114, %s128
      %p130 = scmp.eq.s32.totalorder %s27, 0
      %p131 = por %p129, %p130
      %s133 = sadd.s32 %s132, 1
      %p136 = scmp.eq.s32.totalorder %s21, 1
      %p137 = scmp.ne.s32.totalorder %s132, %s134
      %p138 = scmp.eq.s32.totalorder %s21, 0
      %p139 = por %p137, %p138
      %p140 = scmp.ne.s32.totalorder %s132, %s134
      %p141 = scmp.eq.s32.totalorder %s26, 1
      %p142 = por %p140, %p141
      %p143 = scmp.ne.s32.totalorder %s134, %s135
      %p144 = scmp.eq.s32.totalorder %s26, 0
      %p145 = por %p143, %p144
      %p146 = scmp.ne.s32.totalorder %s134, %s135
      %p147 = scmp.eq.s32.totalorder %s27, 1
      %p148 = por %p146, %p147
      %p150 = scmp.ne.s32.totalorder %s135, %s149
      %p151 = scmp.eq.s32.totalorder %s27, 0
      %p152 = por %p150, %p151
      %s154 = sadd.s32 %s153, 1
      %p157 = scmp.eq.s32.totalorder %s21, 1
      %p158 = scmp.ne.s32.totalorder %s153, %s155
      %p159 = scmp.eq.s32.totalorder %s21, 0
      %p160 = por %p158, %p159
      %p161 = scmp.ne.s32.totalorder %s153, %s155
      %p162 = scmp.eq.s32.totalorder %s26, 1
      %p163 = por %p161, %p162
      %p164 = scmp.ne.s32.totalorder %s155, %s156
      %p165 = scmp.eq.s32.totalorder %s26, 0
      %p166 = por %p164, %p165
      %p167 = scmp.ne.s32.totalorder %s155, %s156
      %p168 = scmp.eq.s32.totalorder %s27, 1
      %p169 = por %p167, %p168
      %p171 = scmp.ne.s32.totalorder %s156, %s170
      %p172 = scmp.eq.s32.totalorder %s27, 0
      %p173 = por %p171, %p172
      %s175 = sadd.s32 %s174, 1
      %p178 = scmp.eq.s32.totalorder %s21, 1
      %p179 = scmp.ne.s32.totalorder %s174, %s176
      %p180 = scmp.eq.s32.totalorder %s21, 0
      %p181 = por %p179, %p180
      %p182 = scmp.ne.s32.totalorder %s174, %s176
      %p183 = scmp.eq.s32.totalorder %s26, 1
      %p184 = por %p182, %p183
      %p185 = scmp.ne.s32.totalorder %s176, %s177
      %p186 = scmp.eq.s32.totalorder %s26, 0
      %p187 = por %p185, %p186
      %p188 = scmp.ne.s32.totalorder %s176, %s177
      %p189 = scmp.eq.s32.totalorder %s27, 1
      %p190 = por %p188, %p189
      %p192 = scmp.ne.s32.totalorder %s177, %s191
      %p193 = scmp.eq.s32.totalorder %s27, 0
      %p194 = por %p192, %p193
      %s196 = sadd.s32 %s195, 1
      %p199 = scmp.eq.s32.totalorder %s21, 1
      %p200 = scmp.ne.s32.totalorder %s195, %s197
      %p201 = scmp.eq.s32.totalorder %s21, 0
      %p202 = por %p200, %p201
      %p203 = scmp.ne.s32.totalorder %s195, %s197
      %p204 = scmp.eq.s32.totalorder %s26, 1
      %p205 = por %p203, %p204
      %p206 = scmp.ne.s32.totalorder %s197, %s198
      %p207 = scmp.eq.s32.totalorder %s26, 0
      %p208 = por %p206, %p207
      %p209 = scmp.ne.s32.totalorder %s197, %s198
      %p210 = scmp.eq.s32.totalorder %s27, 1
      %p211 = por %p209, %p210
      %p213 = scmp.ne.s32.totalorder %s198, %s212
      %p214 = scmp.eq.s32.totalorder %s27, 0
      %p215 = por %p213, %p214
      %s217 = sadd.s32 %s216, 1
      %p220 = scmp.eq.s32.totalorder %s21, 1
      %p221 = scmp.ne.s32.totalorder %s216, %s218
      %p222 = scmp.eq.s32.totalorder %s21, 0
      %p223 = por %p221, %p222
      %p224 = scmp.ne.s32.totalorder %s216, %s218
      %p225 = scmp.eq.s32.totalorder %s26, 1
      %p226 = por %p224, %p225
      %p227 = scmp.ne.s32.totalorder %s218, %s219
      %p228 = scmp.eq.s32.totalorder %s26, 0
      %p229 = por %p227, %p228
      %p230 = scmp.ne.s32.totalorder %s218, %s219
      %p231 = scmp.eq.s32.totalorder %s27, 1
      %p232 = por %p230, %p231
      %p234 = scmp.ne.s32.totalorder %s219, %s233
      %p235 = scmp.eq.s32.totalorder %s27, 0
      %p236 = por %p234, %p235
      %s237 = ssub.s32 %s28, %s40
      %s238 = ssub.s32 %s29, %s36
      %s239 = sor.u32 %s237, %s238
      %p240 = scmp.eq.s32.totalorder %s239, 0
      %s242 = sadd.s32 %s241, 1
      %s243 = scalar_select %p240, %s241, %s242
      %p246 = pneg %p240
      %p247 = scmp.eq.s32.totalorder %s21, 1
      %p248 = por %p246, %p247
      %p249 = scmp.ne.s32.totalorder %s241, %s244
      %p250 = scmp.eq.s32.totalorder %s21, 0
      %p251 = por %p249, %p250
      %p252 = scmp.ne.s32.totalorder %s241, %s244
      %p253 = scmp.eq.s32.totalorder %s26, 1
      %p254 = por %p252, %p253
      %p255 = scmp.ne.s32.totalorder %s244, %s245
      %p256 = scmp.eq.s32.totalorder %s26, 0
      %p257 = por %p255, %p256
      %p258 = scmp.ne.s32.totalorder %s244, %s245
      %p259 = scmp.eq.s32.totalorder %s27, 1
      %p260 = por %p258, %p259
      %p262 = scmp.ne.s32.totalorder %s245, %s261
      %p263 = scmp.eq.s32.totalorder %s27, 0
      %p264 = por %p262, %p263
      %p265 = scmp.le.s32.totalorder 1, %s21
      %p266 = scmp.lt.s32.totalorder %s21, 3
      %p267 = pnand %p265, %p266
      %p268 = pneg %p267
      // Predicated region
      $region9: #{tpu_custom_call.1} parent=5 // pred_check
        _
      $region10: #{tpu_custom_call.1} parent=5 // pred_check_branch
        %270 = sbr.rel (%p267) target = $region12
      $region11: #{tpu_custom_call.1} parent=5 // pred_region
        %s271 = ssub.s32 %s21, 1
        // Predicated region
        $region13: #{tpu_custom_call.1} parent=11 // pred_check
          %p272 = pneg %p82
        $region14: #{tpu_custom_call.1} parent=11 // pred_check_branch
          %274 = sbr.rel (%p272) target = $region16
        $region15: #{tpu_custom_call.1} parent=11 // pred_region
          _
        $region16: #{tpu_custom_call.1} parent=11 // pred_fallthru
          _
        // Predicated region
        $region17: #{tpu_custom_call.1} parent=11 // pred_check
          %p275 = pneg %p103
        $region18: #{tpu_custom_call.1} parent=11 // pred_check_branch
          %277 = sbr.rel (%p275) target = $region20
        $region19: #{tpu_custom_call.1} parent=11 // pred_region
          _
        $region20: #{tpu_custom_call.1} parent=11 // pred_fallthru
          _
        // Predicated region
        $region21: #{tpu_custom_call.1} parent=11 // pred_check
          %p278 = pneg %p124
        $region22: #{tpu_custom_call.1} parent=11 // pred_check_branch
          %280 = sbr.rel (%p278) target = $region24
        $region23: #{tpu_custom_call.1} parent=11 // pred_region
          _
        $region24: #{tpu_custom_call.1} parent=11 // pred_fallthru
          _
        // Predicated region
        $region25: #{tpu_custom_call.1} parent=11 // pred_check
          %p281 = pneg %p145
        $region26: #{tpu_custom_call.1} parent=11 // pred_check_branch
          %283 = sbr.rel (%p281) target = $region28
        $region27: #{tpu_custom_call.1} parent=11 // pred_region
          _
        $region28: #{tpu_custom_call.1} parent=11 // pred_fallthru
          _
        // Predicated region
        $region29: #{tpu_custom_call.1} parent=11 // pred_check
          %p284 = pneg %p166
        $region30: #{tpu_custom_call.1} parent=11 // pred_check_branch
          %286 = sbr.rel (%p284) target = $region32
        $region31: #{tpu_custom_call.1} parent=11 // pred_region
          _
        $region32: #{tpu_custom_call.1} parent=11 // pred_fallthru
          _
        // Predicated region
        $region33: #{tpu_custom_call.1} parent=11 // pred_check
          %p287 = pneg %p187
        $region34: #{tpu_custom_call.1} parent=11 // pred_check_branch
          %289 = sbr.rel (%p287) target = $region36
        $region35: #{tpu_custom_call.1} parent=11 // pred_region
          _
        $region36: #{tpu_custom_call.1} parent=11 // pred_fallthru
          _
        // Predicated region
        $region37: #{tpu_custom_call.1} parent=11 // pred_check
          %p290 = pneg %p208
        $region38: #{tpu_custom_call.1} parent=11 // pred_check_branch
          %292 = sbr.rel (%p290) target = $region40
        $region39: #{tpu_custom_call.1} parent=11 // pred_region
          _
        $region40: #{tpu_custom_call.1} parent=11 // pred_fallthru
          _
        // Predicated region
        $region41: #{tpu_custom_call.1} parent=11 // pred_check
          %p293 = pneg %p229
        $region42: #{tpu_custom_call.1} parent=11 // pred_check_branch
          %295 = sbr.rel (%p293) target = $region44
        $region43: #{tpu_custom_call.1} parent=11 // pred_region
          _
        $region44: #{tpu_custom_call.1} parent=11 // pred_fallthru
          _
      $region12: #{tpu_custom_call.1} parent=5 // pred_fallthru
        _
      %p296 = scmp.lt.s32.totalorder %s21, 2
      // Predicated region
      $region45: #{tpu_custom_call.1} parent=5 // pred_check
        %p297 = pneg %p296
      $region46: #{tpu_custom_call.1} parent=5 // pred_check_branch
        %299 = sbr.rel (%p297) target = $region48
      $region47: #{tpu_custom_call.1} parent=5 // pred_region
        // Predicated region
        $region49: #{tpu_custom_call.1} parent=47 // pred_check
          %p300 = pneg %p55
        $region50: #{tpu_custom_call.1} parent=47 // pred_check_branch
          %302 = sbr.rel (%p300) target = $region52
        $region51: #{tpu_custom_call.1} parent=47 // pred_region
          %s303 = sand.u32 %s45, 1
          %s304 = scalar_lea.sflag [#allocation4], %s303
          %s305 = sand.u32 %s45, 1
          %s306 = smul.addr %s305, 128
          %s307 = scalar_lea.vmem [#allocation3], %s306
          %s308 = smul.u32 2, %s29
          %s310 = ssub.s32 2048, 2048
          %311 = vsyncadd %s304, %s310
          %s312 = smul.addr %s28, 16
          %s313 = sadd.s32 %s308, %s312
          %s314 = smul.addr %s313, 128
          %s315 = scalar_lea.hbm %s0, %s314
          %s316 = sshll.u32 %s307, 4
          %s317 = int_to_ptr.vmem [resolvable:$true] %s316
          %322 = dma.hbm_to_vmem [thread:$0]  %s315, 2048, %s317, %s304, 128, 128, 8
        $region52: #{tpu_custom_call.1} parent=47 // pred_fallthru
          _
      $region48: #{tpu_custom_call.1} parent=5 // pred_fallthru
        _
      %p323 = scmp.le.s32.totalorder 1, %s21
      %p324 = scmp.lt.s32.totalorder %s21, 3
      %p325 = pnand %p323, %p324
      %p326 = pneg %p325
      // Predicated region
      $region53: #{tpu_custom_call.1} parent=5 // pred_check
        _
      $region54: #{tpu_custom_call.1} parent=5 // pred_check_branch
        %328 = sbr.rel (%p325) target = $region56
      $region55: #{tpu_custom_call.1} parent=5 // pred_region
        %s329 = ssub.s32 %s21, 1
        %s330 = sand.u32 %s48, 1
        %s331 = scalar_lea.sflag [#allocation4], %s330
        %s332 = sand.u32 %s48, 1
        %s333 = smul.addr %s332, 128
        %s334 = scalar_lea.vmem [#allocation3], %s333
        // Predicated region
        $region57: #{tpu_custom_call.1} parent=55 // pred_check
          %p335 = pneg %p61
        $region58: #{tpu_custom_call.1} parent=55 // pred_check_branch
          %337 = sbr.rel (%p335) target = $region60
        $region59: #{tpu_custom_call.1} parent=55 // pred_region
          %338 = dma.done %s331, 2048
        $region60: #{tpu_custom_call.1} parent=55 // pred_fallthru
          _
        %s339 = sand.u32 %s48, 1
        %s340 = scalar_lea.sflag [#allocation4], %s339
        %s341 = sand.u32 %s48, 1
        %s342 = smul.addr %s341, 128
        %s343 = scalar_lea.vmem [#allocation3], %s342
        %p344 = pneg %p61
        %p345 = pneg %p58
        %p346 = pneg %p82
        %p347 = pneg %p79
        %p348 = pneg %p103
        %p349 = pneg %p100
        %p350 = pneg %p124
        %p351 = pneg %p121
        %p352 = pneg %p145
        %p353 = pneg %p142
        %p354 = pneg %p166
        %p355 = pneg %p163
        %p356 = pneg %p187
        %p357 = pneg %p184
        %p358 = pneg %p208
        %p359 = pneg %p205
        %p360 = pneg %p229
        %p361 = pneg %p226
        %p362 = pneg %p257
        %p363 = pneg %p254
        %s364 = sand.u32 %s244, 1
        %s365 = scalar_lea.sflag [#allocation5], %s364
        %s366 = sand.u32 %s244, 1
        %s367 = smul.addr %s366, 128
        %s368 = scalar_lea.vmem [#allocation6], %s367
        %s369 = smul.u32 2, %s31
        %s370 = smul.u32 2, %s31
        %v372 = vld [vmem:[%s334] sm:$0xff]
        %v373 = vld [vmem:[%s334 + $0x8] sm:$0xff]
        %v374 = vld [vmem:[%s334 + $0x10] sm:$0xff]
        %v375 = vld [vmem:[%s334 + $0x18] sm:$0xff]
        %v376 = vld [vmem:[%s334 + $0x20] sm:$0xff]
        %v377 = vld [vmem:[%s334 + $0x28] sm:$0xff]
        %v378 = vld [vmem:[%s334 + $0x30] sm:$0xff]
        %v379 = vld [vmem:[%s334 + $0x38] sm:$0xff]
        %v380 = vld [vmem:[%s334 + $0x40] sm:$0xff]
        %v381 = vld [vmem:[%s334 + $0x48] sm:$0xff]
        %v382 = vld [vmem:[%s334 + $0x50] sm:$0xff]
        %v383 = vld [vmem:[%s334 + $0x58] sm:$0xff]
        %v384 = vld [vmem:[%s334 + $0x60] sm:$0xff]
        %v385 = vld [vmem:[%s334 + $0x68] sm:$0xff]
        %v386 = vld [vmem:[%s334 + $0x70] sm:$0xff]
        %v387 = vld [vmem:[%s334 + $0x78] sm:$0xff]
        %vm388 = vcmask 261120
        %v389 = vsel %vm388, %v372, 0.0
        %390 = vadd.xlane.f32.xlu0 %v389
        %v391 = vpop.xlane.xlu0 %390
        %v392 = vsel %vm388, %v373, 0.0
        %393 = vadd.xlane.f32.xlu0 %v392
        %v394 = vpop.xlane.xlu0 %393
        %v395 = vsel %vm388, %v374, 0.0
        %396 = vadd.xlane.f32.xlu0 %v395
        %v397 = vpop.xlane.xlu0 %396
        %v398 = vsel %vm388, %v375, 0.0
        %399 = vadd.xlane.f32.xlu0 %v398
        %v400 = vpop.xlane.xlu0 %399
        %v401 = vsel %vm388, %v376, 0.0
        %402 = vadd.xlane.f32.xlu0 %v401
        %v403 = vpop.xlane.xlu0 %402
        %v404 = vsel %vm388, %v377, 0.0
        %405 = vadd.xlane.f32.xlu0 %v404
        %v406 = vpop.xlane.xlu0 %405
        %v407 = vsel %vm388, %v378, 0.0
        %408 = vadd.xlane.f32.xlu0 %v407
        %v409 = vpop.xlane.xlu0 %408
        %v410 = vsel %vm388, %v379, 0.0
        %411 = vadd.xlane.f32.xlu0 %v410
        %v412 = vpop.xlane.xlu0 %411
        %v413 = vsel %vm388, %v380, 0.0
        %414 = vadd.xlane.f32.xlu0 %v413
        %v415 = vpop.xlane.xlu0 %414
        %v416 = vsel %vm388, %v381, 0.0
        %417 = vadd.xlane.f32.xlu0 %v416
        %v418 = vpop.xlane.xlu0 %417
        %v419 = vsel %vm388, %v382, 0.0
        %420 = vadd.xlane.f32.xlu0 %v419
        %v421 = vpop.xlane.xlu0 %420
        %v422 = vsel %vm388, %v383, 0.0
        %423 = vadd.xlane.f32.xlu0 %v422
        %v424 = vpop.xlane.xlu0 %423
        %v425 = vsel %vm388, %v384, 0.0
        %426 = vadd.xlane.f32.xlu0 %v425
        %v427 = vpop.xlane.xlu0 %426
        %v428 = vsel %vm388, %v385, 0.0
        %429 = vadd.xlane.f32.xlu0 %v428
        %v430 = vpop.xlane.xlu0 %429
        %v431 = vsel %vm388, %v386, 0.0
        %432 = vadd.xlane.f32.xlu0 %v431
        %v433 = vpop.xlane.xlu0 %432
        %v434 = vsel %vm388, %v387, 0.0
        %435 = vadd.xlane.f32.xlu0 %v434
        %v436 = vpop.xlane.xlu0 %435
        %v437 = vrcp.pop 32.0
        %v438 = vmul.f32 %v391, %v437
        %v439 = vmul.f32 %v394, %v437
        %v440 = vmul.f32 %v397, %v437
        %v441 = vmul.f32 %v400, %v437
        %v442 = vmul.f32 %v403, %v437
        %v443 = vmul.f32 %v406, %v437
        %v444 = vmul.f32 %v409, %v437
        %v445 = vmul.f32 %v412, %v437
        %v446 = vmul.f32 %v415, %v437
        %v447 = vmul.f32 %v418, %v437
        %v448 = vmul.f32 %v421, %v437
        %v449 = vmul.f32 %v424, %v437
        %v450 = vmul.f32 %v427, %v437
        %v451 = vmul.f32 %v430, %v437
        %v452 = vmul.f32 %v433, %v437
        %v453 = vmul.f32 %v436, %v437
        %v454 = vsub.f32 %v372, %v438
        %v455 = vsub.f32 %v373, %v439
        %v456 = vsub.f32 %v374, %v440
        %v457 = vsub.f32 %v375, %v441
        %v458 = vsub.f32 %v376, %v442
        %v459 = vsub.f32 %v377, %v443
        %v460 = vsub.f32 %v378, %v444
        %v461 = vsub.f32 %v379, %v445
        %v462 = vsub.f32 %v380, %v446
        %v463 = vsub.f32 %v381, %v447
        %v464 = vsub.f32 %v382, %v448
        %v465 = vsub.f32 %v383, %v449
        %v466 = vsub.f32 %v384, %v450
        %v467 = vsub.f32 %v385, %v451
        %v468 = vsub.f32 %v386, %v452
        %v469 = vsub.f32 %v387, %v453
        %v470 = vmul.f32 %v454, %v454
        %v471 = vmul.f32 %v455, %v455
        %v472 = vmul.f32 %v456, %v456
        %v473 = vmul.f32 %v457, %v457
        %v474 = vmul.f32 %v458, %v458
        %v475 = vmul.f32 %v459, %v459
        %v476 = vmul.f32 %v460, %v460
        %v477 = vmul.f32 %v461, %v461
        %v478 = vmul.f32 %v462, %v462
        %v479 = vmul.f32 %v463, %v463
        %v480 = vmul.f32 %v464, %v464
        %v481 = vmul.f32 %v465, %v465
        %v482 = vmul.f32 %v466, %v466
        %v483 = vmul.f32 %v467, %v467
        %v484 = vmul.f32 %v468, %v468
        %v485 = vmul.f32 %v469, %v469
        %v486 = vsel %vm388, %v470, 0.0
        %487 = vadd.xlane.f32.xlu0 %v486
        %v488 = vpop.xlane.xlu0 %487
        %v489 = vsel %vm388, %v471, 0.0
        %490 = vadd.xlane.f32.xlu0 %v489
        %v491 = vpop.xlane.xlu0 %490
        %v492 = vsel %vm388, %v472, 0.0
        %493 = vadd.xlane.f32.xlu0 %v492
        %v494 = vpop.xlane.xlu0 %493
        %v495 = vsel %vm388, %v473, 0.0
        %496 = vadd.xlane.f32.xlu0 %v495
        %v497 = vpop.xlane.xlu0 %496
        %v498 = vsel %vm388, %v474, 0.0
        %499 = vadd.xlane.f32.xlu0 %v498
        %v500 = vpop.xlane.xlu0 %499
        %v501 = vsel %vm388, %v475, 0.0
        %502 = vadd.xlane.f32.xlu0 %v501
        %v503 = vpop.xlane.xlu0 %502
        %v504 = vsel %vm388, %v476, 0.0
        %505 = vadd.xlane.f32.xlu0 %v504
        %v506 = vpop.xlane.xlu0 %505
        %v507 = vsel %vm388, %v477, 0.0
        %508 = vadd.xlane.f32.xlu0 %v507
        %v509 = vpop.xlane.xlu0 %508
        %v510 = vsel %vm388, %v478, 0.0
        %511 = vadd.xlane.f32.xlu0 %v510
        %v512 = vpop.xlane.xlu0 %511
        %v513 = vsel %vm388, %v479, 0.0
        %514 = vadd.xlane.f32.xlu0 %v513
        %v515 = vpop.xlane.xlu0 %514
        %v516 = vsel %vm388, %v480, 0.0
        %517 = vadd.xlane.f32.xlu0 %v516
        %v518 = vpop.xlane.xlu0 %517
        %v519 = vsel %vm388, %v481, 0.0
        %520 = vadd.xlane.f32.xlu0 %v519
        %v521 = vpop.xlane.xlu0 %520
        %v522 = vsel %vm388, %v482, 0.0
        %523 = vadd.xlane.f32.xlu0 %v522
        %v524 = vpop.xlane.xlu0 %523
        %v525 = vsel %vm388, %v483, 0.0
        %526 = vadd.xlane.f32.xlu0 %v525
        %v527 = vpop.xlane.xlu0 %526
        %v528 = vsel %vm388, %v484, 0.0
        %529 = vadd.xlane.f32.xlu0 %v528
        %v530 = vpop.xlane.xlu0 %529
        %v531 = vsel %vm388, %v485, 0.0
        %532 = vadd.xlane.f32.xlu0 %v531
        %v533 = vpop.xlane.xlu0 %532
        %v534 = vmul.f32 %v488, %v437
        %v535 = vmul.f32 %v491, %v437
        %v536 = vmul.f32 %v494, %v437
        %v537 = vmul.f32 %v497, %v437
        %v538 = vmul.f32 %v500, %v437
        %v539 = vmul.f32 %v503, %v437
        %v540 = vmul.f32 %v506, %v437
        %v541 = vmul.f32 %v509, %v437
        %v542 = vmul.f32 %v512, %v437
        %v543 = vmul.f32 %v515, %v437
        %v544 = vmul.f32 %v518, %v437
        %v545 = vmul.f32 %v521, %v437
        %v546 = vmul.f32 %v524, %v437
        %v547 = vmul.f32 %v527, %v437
        %v548 = vmul.f32 %v530, %v437
        %v549 = vmul.f32 %v533, %v437
        %v550 = vadd.f32 %v534, 1e-05
        %v551 = vadd.f32 %v535, 1e-05
        %v552 = vadd.f32 %v536, 1e-05
        %v553 = vadd.f32 %v537, 1e-05
        %v554 = vadd.f32 %v538, 1e-05
        %v555 = vadd.f32 %v539, 1e-05
        %v556 = vadd.f32 %v540, 1e-05
        %v557 = vadd.f32 %v541, 1e-05
        %v558 = vadd.f32 %v542, 1e-05
        %v559 = vadd.f32 %v543, 1e-05
        %v560 = vadd.f32 %v544, 1e-05
        %v561 = vadd.f32 %v545, 1e-05
        %v562 = vadd.f32 %v546, 1e-05
        %v563 = vadd.f32 %v547, 1e-05
        %v564 = vadd.f32 %v548, 1e-05
        %v565 = vadd.f32 %v549, 1e-05
        %v566 = vrsqrt.pop %v550
        %v567 = vrsqrt.pop %v551
        %v568 = vrsqrt.pop %v552
        %v569 = vrsqrt.pop %v553
        %v570 = vrsqrt.pop %v554
        %v571 = vrsqrt.pop %v555
        %v572 = vrsqrt.pop %v556
        %v573 = vrsqrt.pop %v557
        %v574 = vrsqrt.pop %v558
        %v575 = vrsqrt.pop %v559
        %v576 = vrsqrt.pop %v560
        %v577 = vrsqrt.pop %v561
        %v578 = vrsqrt.pop %v562
        %v579 = vrsqrt.pop %v563
        %v580 = vrsqrt.pop %v564
        %v581 = vrsqrt.pop %v565
        %v582 = vmul.f32 %v454, %v566
        %v583 = vmul.f32 %v455, %v567
        %v584 = vmul.f32 %v456, %v568
        %v585 = vmul.f32 %v457, %v569
        %v586 = vmul.f32 %v458, %v570
        %v587 = vmul.f32 %v459, %v571
        %v588 = vmul.f32 %v460, %v572
        %v589 = vmul.f32 %v461, %v573
        %v590 = vmul.f32 %v462, %v574
        %v591 = vmul.f32 %v463, %v575
        %v592 = vmul.f32 %v464, %v576
        %v593 = vmul.f32 %v465, %v577
        %v594 = vmul.f32 %v466, %v578
        %v595 = vmul.f32 %v467, %v579
        %v596 = vmul.f32 %v468, %v580
        %v597 = vmul.f32 %v469, %v581
        %v598 = vld [vmem:[%s1] sm:$0x1]
        %v600 = vlaneseq
        %v601 = vshrl.u32 %v600, 7
        %v602 = vsub.s32 0, %v601
        %v603 = vrot.slane %v598, %v602
        %v605 = vmul.f32 %v582, %v603
        %v606 = vmul.f32 %v583, %v603
        %v607 = vmul.f32 %v584, %v603
        %v608 = vmul.f32 %v585, %v603
        %v609 = vmul.f32 %v586, %v603
        %v610 = vmul.f32 %v587, %v603
        %v611 = vmul.f32 %v588, %v603
        %v612 = vmul.f32 %v589, %v603
        %v613 = vmul.f32 %v590, %v603
        %v614 = vmul.f32 %v591, %v603
        %v615 = vmul.f32 %v592, %v603
        %v616 = vmul.f32 %v593, %v603
        %v617 = vmul.f32 %v594, %v603
        %v618 = vmul.f32 %v595, %v603
        %v619 = vmul.f32 %v596, %v603
        %v620 = vmul.f32 %v597, %v603
        %v621 = vld [vmem:[%s2] sm:$0x1]
        %v623 = vlaneseq
        %v624 = vshrl.u32 %v623, 7
        %v625 = vsub.s32 0, %v624
        %v626 = vrot.slane %v621, %v625
        %v628 = vadd.f32 %v605, %v626
        %v629 = vadd.f32 %v606, %v626
        %v630 = vadd.f32 %v607, %v626
        %v631 = vadd.f32 %v608, %v626
        %v632 = vadd.f32 %v609, %v626
        %v633 = vadd.f32 %v610, %v626
        %v634 = vadd.f32 %v611, %v626
        %v635 = vadd.f32 %v612, %v626
        %v636 = vadd.f32 %v613, %v626
        %v637 = vadd.f32 %v614, %v626
        %v638 = vadd.f32 %v615, %v626
        %v639 = vadd.f32 %v616, %v626
        %v640 = vadd.f32 %v617, %v626
        %v641 = vadd.f32 %v618, %v626
        %v642 = vadd.f32 %v619, %v626
        %v643 = vadd.f32 %v620, %v626
        %v644 = vld [vmem:[%s3] sm:$0xf]
        %v645 = vld [vmem:[%s3 + $0x4] sm:$0xf]
        %v646 = vld [vmem:[%s3 + $0x8] sm:$0xf]
        %v647 = vld [vmem:[%s3 + $0xc] sm:$0xf]
        %v648 = vpack.c.bf16 %v629, %v628
        %v649 = vpack.c.bf16 %v631, %v630
        %v650 = vpack.c.bf16 %v633, %v632
        %v651 = vpack.c.bf16 %v635, %v634
        %v652 = vpack.c.bf16 %v637, %v636
        %v653 = vpack.c.bf16 %v639, %v638
        %v654 = vpack.c.bf16 %v641, %v640
        %v655 = vpack.c.bf16 %v643, %v642
        %v656 = vld [vmem:[%s4] sm:$0x1]
        %v658 = vlaneseq
        %v659 = vshrl.u32 %v658, 7
        %v660 = vsub.s32 0, %v659
        %v661 = vrot.slane %v656, %v660
        %v667 = vunpack.c.l.b16 %v644
        %v668 = vunpack.c.l.b16 %v645
        %v669 = vunpack.c.l.b16 %v646
        %v670 = vunpack.c.l.b16 %v647
        %v671 = vpack.c.b16 %v668, %v667
        %v672 = vpack.c.b16 %v670, %v669
        %v676 = vsel %vm388, %v648, 0
        %v679 = vsel %vm388, %v649, 0
        %v682 = vsel %vm388, %v650, 0
        %v685 = vsel %vm388, %v651, 0
        %v688 = vsel %vm388, %v652, 0
        %v691 = vsel %vm388, %v653, 0
        %v694 = vsel %vm388, %v654, 0
        %v697 = vsel %vm388, %v655, 0
        %699 = vmatprep.subr.bf16.mxu0 0
        %700 = vmatpush1.bf16.msra.mxu0 0
        %701 = vmatprep.subr.bf16.mxu0 0
        %702 = vmatpush1.bf16.msra.mxu0 0
        %703 = vmatprep.subr.bf16.mxu0 0
        %704 = vmatpush1.bf16.msra.mxu0 0
        %705 = vmatprep.subr.bf16.mxu0 0
        %706 = vmatpush1.bf16.msra.mxu0 0
        %707 = vmatprep.subr.bf16.mxu0 0
        %708 = vmatpush1.bf16.msra.mxu0 0
        %709 = vmatprep.subr.bf16.mxu0 0
        %710 = vmatpush1.bf16.msra.mxu0 0
        %711 = vmatprep.subr.bf16.mxu0 0
        %712 = vmatpush1.bf16.msra.mxu0 %v672
        %713 = vmatprep.subr.bf16.mxu0 0
        %714 = vmatpush1.bf16.msra.mxu0 %v671
        %715 = vmatprep.subr.bf16.mxu0 0
        %716 = vmatpush2.bf16.msra.mxu0 0
        %717 = vmatprep.subr.bf16.mxu0 0
        %718 = vmatpush2.bf16.msra.mxu0 0
        %719 = vmatprep.subr.bf16.mxu0 0
        %720 = vmatpush2.bf16.msra.mxu0 0
        %721 = vmatprep.subr.bf16.mxu0 0
        %722 = vmatpush2.bf16.msra.mxu0 0
        %723 = vmatprep.subr.bf16.mxu0 0
        %724 = vmatpush2.bf16.msra.mxu0 0
        %725 = vmatprep.subr.bf16.mxu0 0
        %726 = vmatpush2.bf16.msra.mxu0 0
        %727 = vmatprep.subr.bf16.mxu0 0
        %728 = vmatpush2.bf16.msra.mxu0 0
        %729 = vmatprep.subr.bf16.mxu0 0
        %730 = vmatpush2.bf16.msra.mxu0 0
        %731 = vmatprep.mubr.bf16.mxu0 0
        %732 = vmatmul.mubr.bf16.gmra.mxu0 %v676
        %v733 = vpop.f32.mrf.mxu0
        %v734 = vadd.f32 %v661, %v733
        %v735 = vpop.f32.mrf.mxu0
        %v736 = vpop.f32.mrf.mxu0
        %v737 = vadd.f32 %v661, %v736
        %v738 = vpop.f32.mrf.mxu0
        %739 = vmatprep.mubr.bf16.mxu0 0
        %740 = vmatmul.mubr.bf16.gmra.mxu0 %v679
        %v741 = vpop.f32.mrf.mxu0
        %v742 = vadd.f32 %v661, %v741
        %v743 = vpop.f32.mrf.mxu0
        %v744 = vpop.f32.mrf.mxu0
        %v745 = vadd.f32 %v661, %v744
        %v746 = vpop.f32.mrf.mxu0
        %747 = vmatprep.mubr.bf16.mxu0 0
        %748 = vmatmul.mubr.bf16.gmra.mxu0 %v682
        %v749 = vpop.f32.mrf.mxu0
        %v750 = vadd.f32 %v661, %v749
        %v751 = vpop.f32.mrf.mxu0
        %v752 = vpop.f32.mrf.mxu0
        %v753 = vadd.f32 %v661, %v752
        %v754 = vpop.f32.mrf.mxu0
        %755 = vmatprep.mubr.bf16.mxu0 0
        %756 = vmatmul.mubr.bf16.gmra.mxu0 %v685
        %v757 = vpop.f32.mrf.mxu0
        %v758 = vadd.f32 %v661, %v757
        %v759 = vpop.f32.mrf.mxu0
        %v760 = vpop.f32.mrf.mxu0
        %v761 = vadd.f32 %v661, %v760
        %v762 = vpop.f32.mrf.mxu0
        %763 = vmatprep.mubr.bf16.mxu0 0
        %764 = vmatmul.mubr.bf16.gmra.mxu0 %v688
        %v765 = vpop.f32.mrf.mxu0
        %v766 = vadd.f32 %v661, %v765
        %v767 = vpop.f32.mrf.mxu0
        %v768 = vpop.f32.mrf.mxu0
        %v769 = vadd.f32 %v661, %v768
        %v770 = vpop.f32.mrf.mxu0
        %771 = vmatprep.mubr.bf16.mxu0 0
        %772 = vmatmul.mubr.bf16.gmra.mxu0 %v691
        %v773 = vpop.f32.mrf.mxu0
        %v774 = vadd.f32 %v661, %v773
        %v775 = vpop.f32.mrf.mxu0
        %v776 = vpop.f32.mrf.mxu0
        %v777 = vadd.f32 %v661, %v776
        %v778 = vpop.f32.mrf.mxu0
        %779 = vmatprep.mubr.bf16.mxu0 0
        %780 = vmatmul.mubr.bf16.gmra.mxu0 %v694
        %v781 = vpop.f32.mrf.mxu0
        %v782 = vadd.f32 %v661, %v781
        %v783 = vpop.f32.mrf.mxu0
        %v784 = vpop.f32.mrf.mxu0
        %v785 = vadd.f32 %v661, %v784
        %v786 = vpop.f32.mrf.mxu0
        %787 = vmatprep.mubr.bf16.mxu0 0
        %788 = vmatmul.mubr.bf16.gmra.mxu0 %v697
        %v789 = vpop.f32.mrf.mxu0
        %v790 = vadd.f32 %v661, %v789
        %v791 = vpop.f32.mrf.mxu0
        %v792 = vpop.f32.mrf.mxu0
        %v793 = vadd.f32 %v661, %v792
        %v794 = vpop.f32.mrf.mxu0
        %795 = vdwg.mxu0
        %vm796 = vcmask 130048
        %797 = vst.msk [vmem:[#allocation2] sm:$0xff] %vm796, 0.0
        %798 = vst.msk [vmem:[#allocation2 + $0x8] sm:$0xff] %vm796, 0.0
        %s799 = scalar_lea.vmem [#allocation2], 144
        %800 = vst.msk [vmem:[%s799] sm:$0xff] %vm796, 0.0
        %801 = vst.msk [vmem:[%s799 + $0x8] sm:$0xff] %vm796, 0.0
        %s802 = scalar_lea.vmem [#allocation2], 16
        %803 = vst.msk [vmem:[%s802] sm:$0xff] %vm796, %v734
        %804 = vst.msk [vmem:[%s802 + $0x8] sm:$0xff] %vm796, %v737
        %805 = vst.msk [vmem:[%s802 + $0x10] sm:$0xff] %vm796, %v742
        %806 = vst.msk [vmem:[%s802 + $0x18] sm:$0xff] %vm796, %v745
        %807 = vst.msk [vmem:[%s802 + $0x20] sm:$0xff] %vm796, %v750
        %808 = vst.msk [vmem:[%s802 + $0x28] sm:$0xff] %vm796, %v753
        %809 = vst.msk [vmem:[%s802 + $0x30] sm:$0xff] %vm796, %v758
        %810 = vst.msk [vmem:[%s802 + $0x38] sm:$0xff] %vm796, %v761
        %811 = vst.msk [vmem:[%s802 + $0x40] sm:$0xff] %vm796, %v766
        %812 = vst.msk [vmem:[%s802 + $0x48] sm:$0xff] %vm796, %v769
        %813 = vst.msk [vmem:[%s802 + $0x50] sm:$0xff] %vm796, %v774
        %814 = vst.msk [vmem:[%s802 + $0x58] sm:$0xff] %vm796, %v777
        %815 = vst.msk [vmem:[%s802 + $0x60] sm:$0xff] %vm796, %v782
        %816 = vst.msk [vmem:[%s802 + $0x68] sm:$0xff] %vm796, %v785
        %817 = vst.msk [vmem:[%s802 + $0x70] sm:$0xff] %vm796, %v790
        %818 = vst.msk [vmem:[%s802 + $0x78] sm:$0xff] %vm796, %v793
        %v819 = vld [vmem:[%s5] sm:$0x7]
        %v820 = vld [vmem:[#allocation2] sm:$0xff]
        %v821 = vld [vmem:[#allocation2 + $0x8] sm:$0xff]
        %v822 = vld [vmem:[#allocation2 + $0x10] sm:$0xff]
        %v823 = vld [vmem:[#allocation2 + $0x18] sm:$0xff]
        %v824 = vld [vmem:[#allocation2 + $0x20] sm:$0xff]
        %v825 = vld [vmem:[#allocation2 + $0x28] sm:$0xff]
        %v826 = vld [vmem:[#allocation2 + $0x30] sm:$0xff]
        %v827 = vld [vmem:[#allocation2 + $0x38] sm:$0xff]
        %v828 = vld [vmem:[#allocation2 + $0x40] sm:$0xff]
        %v829 = vld [vmem:[#allocation2 + $0x48] sm:$0xff]
        %v830 = vld [vmem:[#allocation2 + $0x50] sm:$0xff]
        %v831 = vld [vmem:[#allocation2 + $0x58] sm:$0xff]
        %v832 = vld [vmem:[#allocation2 + $0x60] sm:$0xff]
        %v833 = vld [vmem:[#allocation2 + $0x68] sm:$0xff]
        %v834 = vld [vmem:[#allocation2 + $0x70] sm:$0xff]
        %v835 = vld [vmem:[#allocation2 + $0x78] sm:$0xff]
        %v836 = vlaneseq
        %v837 = vshrl.u32 %v836, 7
        %v838 = vsub.s32 0, %v837
        %v839 = vrot.slane %v819, %v838
        %v840 = vmul.f32 %v820, %v839
        %v841 = vmul.f32 %v821, %v839
        %v842 = vmul.f32 %v822, %v839
        %v843 = vmul.f32 %v823, %v839
        %v844 = vmul.f32 %v824, %v839
        %v845 = vmul.f32 %v825, %v839
        %v846 = vmul.f32 %v826, %v839
        %v847 = vmul.f32 %v827, %v839
        %v848 = vmul.f32 %v828, %v839
        %v849 = vmul.f32 %v829, %v839
        %v850 = vmul.f32 %v830, %v839
        %v851 = vmul.f32 %v831, %v839
        %v852 = vmul.f32 %v832, %v839
        %v853 = vmul.f32 %v833, %v839
        %v854 = vmul.f32 %v834, %v839
        %v855 = vmul.f32 %v835, %v839
        %v856 = vld [vmem:[%s802] sm:$0xff]
        %v857 = vld [vmem:[%s802 + $0x8] sm:$0xff]
        %v858 = vld [vmem:[%s802 + $0x10] sm:$0xff]
        %v859 = vld [vmem:[%s802 + $0x18] sm:$0xff]
        %v860 = vld [vmem:[%s802 + $0x20] sm:$0xff]
        %v861 = vld [vmem:[%s802 + $0x28] sm:$0xff]
        %v862 = vld [vmem:[%s802 + $0x30] sm:$0xff]
        %v863 = vld [vmem:[%s802 + $0x38] sm:$0xff]
        %v864 = vld [vmem:[%s802 + $0x40] sm:$0xff]
        %v865 = vld [vmem:[%s802 + $0x48] sm:$0xff]
        %v866 = vld [vmem:[%s802 + $0x50] sm:$0xff]
        %v867 = vld [vmem:[%s802 + $0x58] sm:$0xff]
        %v868 = vld [vmem:[%s802 + $0x60] sm:$0xff]
        %v869 = vld [vmem:[%s802 + $0x68] sm:$0xff]
        %v870 = vld [vmem:[%s802 + $0x70] sm:$0xff]
        %v871 = vld [vmem:[%s802 + $0x78] sm:$0xff]
        %v872 = vlaneseq
        %v873 = vshrl.u32 %v872, 7
        %v874 = vsub.s32 1, %v873
        %v875 = vrot.slane %v819, %v874
        %v876 = vmul.f32 %v856, %v875
        %v877 = vmul.f32 %v857, %v875
        %v878 = vmul.f32 %v858, %v875
        %v879 = vmul.f32 %v859, %v875
        %v880 = vmul.f32 %v860, %v875
        %v881 = vmul.f32 %v861, %v875
        %v882 = vmul.f32 %v862, %v875
        %v883 = vmul.f32 %v863, %v875
        %v884 = vmul.f32 %v864, %v875
        %v885 = vmul.f32 %v865, %v875
        %v886 = vmul.f32 %v866, %v875
        %v887 = vmul.f32 %v867, %v875
        %v888 = vmul.f32 %v868, %v875
        %v889 = vmul.f32 %v869, %v875
        %v890 = vmul.f32 %v870, %v875
        %v891 = vmul.f32 %v871, %v875
        %v892 = vadd.f32 %v840, %v876
        %v893 = vadd.f32 %v841, %v877
        %v894 = vadd.f32 %v842, %v878
        %v895 = vadd.f32 %v843, %v879
        %v896 = vadd.f32 %v844, %v880
        %v897 = vadd.f32 %v845, %v881
        %v898 = vadd.f32 %v846, %v882
        %v899 = vadd.f32 %v847, %v883
        %v900 = vadd.f32 %v848, %v884
        %v901 = vadd.f32 %v849, %v885
        %v902 = vadd.f32 %v850, %v886
        %v903 = vadd.f32 %v851, %v887
        %v904 = vadd.f32 %v852, %v888
        %v905 = vadd.f32 %v853, %v889
        %v906 = vadd.f32 %v854, %v890
        %v907 = vadd.f32 %v855, %v891
        %s908 = scalar_lea.vmem [#allocation2], 32
        %v909 = vld [vmem:[%s908] sm:$0xff]
        %v910 = vld [vmem:[%s908 + $0x8] sm:$0xff]
        %v911 = vld [vmem:[%s908 + $0x10] sm:$0xff]
        %v912 = vld [vmem:[%s908 + $0x18] sm:$0xff]
        %v913 = vld [vmem:[%s908 + $0x20] sm:$0xff]
        %v914 = vld [vmem:[%s908 + $0x28] sm:$0xff]
        %v915 = vld [vmem:[%s908 + $0x30] sm:$0xff]
        %v916 = vld [vmem:[%s908 + $0x38] sm:$0xff]
        %v917 = vld [vmem:[%s908 + $0x40] sm:$0xff]
        %v918 = vld [vmem:[%s908 + $0x48] sm:$0xff]
        %v919 = vld [vmem:[%s908 + $0x50] sm:$0xff]
        %v920 = vld [vmem:[%s908 + $0x58] sm:$0xff]
        %v921 = vld [vmem:[%s908 + $0x60] sm:$0xff]
        %v922 = vld [vmem:[%s908 + $0x68] sm:$0xff]
        %v923 = vld [vmem:[%s908 + $0x70] sm:$0xff]
        %v924 = vld [vmem:[%s908 + $0x78] sm:$0xff]
        %v925 = vlaneseq
        %v926 = vshrl.u32 %v925, 7
        %v927 = vsub.s32 2, %v926
        %v928 = vrot.slane %v819, %v927
        %v929 = vmul.f32 %v909, %v928
        %v930 = vmul.f32 %v910, %v928
        %v931 = vmul.f32 %v911, %v928
        %v932 = vmul.f32 %v912, %v928
        %v933 = vmul.f32 %v913, %v928
        %v934 = vmul.f32 %v914, %v928
        %v935 = vmul.f32 %v915, %v928
        %v936 = vmul.f32 %v916, %v928
        %v937 = vmul.f32 %v917, %v928
        %v938 = vmul.f32 %v918, %v928
        %v939 = vmul.f32 %v919, %v928
        %v940 = vmul.f32 %v920, %v928
        %v941 = vmul.f32 %v921, %v928
        %v942 = vmul.f32 %v922, %v928
        %v943 = vmul.f32 %v923, %v928
        %v944 = vmul.f32 %v924, %v928
        %v945 = vadd.f32 %v892, %v929
        %v946 = vadd.f32 %v893, %v930
        %v947 = vadd.f32 %v894, %v931
        %v948 = vadd.f32 %v895, %v932
        %v949 = vadd.f32 %v896, %v933
        %v950 = vadd.f32 %v897, %v934
        %v951 = vadd.f32 %v898, %v935
        %v952 = vadd.f32 %v899, %v936
        %v953 = vadd.f32 %v900, %v937
        %v954 = vadd.f32 %v901, %v938
        %v955 = vadd.f32 %v902, %v939
        %v956 = vadd.f32 %v903, %v940
        %v957 = vadd.f32 %v904, %v941
        %v958 = vadd.f32 %v905, %v942
        %v959 = vadd.f32 %v906, %v943
        %v960 = vadd.f32 %v907, %v944
        %v961 = vld [vmem:[%s6] sm:$0x1]
        %v963 = vlaneseq
        %v964 = vshrl.u32 %v963, 7
        %v965 = vsub.s32 0, %v964
        %v966 = vrot.slane %v961, %v965
        %v968 = vadd.f32 %v945, %v966
        %v969 = vadd.f32 %v946, %v966
        %v970 = vadd.f32 %v947, %v966
        %v971 = vadd.f32 %v948, %v966
        %v972 = vadd.f32 %v949, %v966
        %v973 = vadd.f32 %v950, %v966
        %v974 = vadd.f32 %v951, %v966
        %v975 = vadd.f32 %v952, %v966
        %v976 = vadd.f32 %v953, %v966
        %v977 = vadd.f32 %v954, %v966
        %v978 = vadd.f32 %v955, %v966
        %v979 = vadd.f32 %v956, %v966
        %v980 = vadd.f32 %v957, %v966
        %v981 = vadd.f32 %v958, %v966
        %v982 = vadd.f32 %v959, %v966
        %v983 = vadd.f32 %v960, %v966
        %v984 = vmul.f32 %v968, 1.702
        %v985 = vmul.f32 %v969, 1.702
        %v986 = vmul.f32 %v970, 1.702
        %v987 = vmul.f32 %v971, 1.702
        %v988 = vmul.f32 %v972, 1.702
        %v989 = vmul.f32 %v973, 1.702
        %v990 = vmul.f32 %v974, 1.702
        %v991 = vmul.f32 %v975, 1.702
        %v992 = vmul.f32 %v976, 1.702
        %v993 = vmul.f32 %v977, 1.702
        %v994 = vmul.f32 %v978, 1.702
        %v995 = vmul.f32 %v979, 1.702
        %v996 = vmul.f32 %v980, 1.702
        %v997 = vmul.f32 %v981, 1.702
        %v998 = vmul.f32 %v982, 1.702
        %v999 = vmul.f32 %v983, 1.702
        %v1000 = vxor.u32 %v984, 2147483648
        %v1001 = vxor.u32 %v985, 2147483648
        %v1002 = vxor.u32 %v986, 2147483648
        %v1003 = vxor.u32 %v987, 2147483648
        %v1004 = vxor.u32 %v988, 2147483648
        %v1005 = vxor.u32 %v989, 2147483648
        %v1006 = vxor.u32 %v990, 2147483648
        %v1007 = vxor.u32 %v991, 2147483648
        %v1008 = vxor.u32 %v992, 2147483648
        %v1009 = vxor.u32 %v993, 2147483648
        %v1010 = vxor.u32 %v994, 2147483648
        %v1011 = vxor.u32 %v995, 2147483648
        %v1012 = vxor.u32 %v996, 2147483648
        %v1013 = vxor.u32 %v997, 2147483648
        %v1014 = vxor.u32 %v998, 2147483648
        %v1015 = vxor.u32 %v999, 2147483648
        %v1016 = vmul.f32 %v1000, 1.442695
        %v1017 = vpow.pop %v1016
        %v1018 = vmul.f32 %v1001, 1.442695
        %v1019 = vpow.pop %v1018
        %v1020 = vmul.f32 %v1002, 1.442695
        %v1021 = vpow.pop %v1020
        %v1022 = vmul.f32 %v1003, 1.442695
        %v1023 = vpow.pop %v1022
        %v1024 = vmul.f32 %v1004, 1.442695
        %v1025 = vpow.pop %v1024
        %v1026 = vmul.f32 %v1005, 1.442695
        %v1027 = vpow.pop %v1026
        %v1028 = vmul.f32 %v1006, 1.442695
        %v1029 = vpow.pop %v1028
        %v1030 = vmul.f32 %v1007, 1.442695
        %v1031 = vpow.pop %v1030
        %v1032 = vmul.f32 %v1008, 1.442695
        %v1033 = vpow.pop %v1032
        %v1034 = vmul.f32 %v1009, 1.442695
        %v1035 = vpow.pop %v1034
        %v1036 = vmul.f32 %v1010, 1.442695
        %v1037 = vpow.pop %v1036
        %v1038 = vmul.f32 %v1011, 1.442695
        %v1039 = vpow.pop %v1038
        %v1040 = vmul.f32 %v1012, 1.442695
        %v1041 = vpow.pop %v1040
        %v1042 = vmul.f32 %v1013, 1.442695
        %v1043 = vpow.pop %v1042
        %v1044 = vmul.f32 %v1014, 1.442695
        %v1045 = vpow.pop %v1044
        %v1046 = vmul.f32 %v1015, 1.442695
        %v1047 = vpow.pop %v1046
        %v1048 = vadd.f32 %v1017, 1.0
        %v1049 = vadd.f32 %v1019, 1.0
        %v1050 = vadd.f32 %v1021, 1.0
        %v1051 = vadd.f32 %v1023, 1.0
        %v1052 = vadd.f32 %v1025, 1.0
        %v1053 = vadd.f32 %v1027, 1.0
        %v1054 = vadd.f32 %v1029, 1.0
        %v1055 = vadd.f32 %v1031, 1.0
        %v1056 = vadd.f32 %v1033, 1.0
        %v1057 = vadd.f32 %v1035, 1.0
        %v1058 = vadd.f32 %v1037, 1.0
        %v1059 = vadd.f32 %v1039, 1.0
        %v1060 = vadd.f32 %v1041, 1.0
        %v1061 = vadd.f32 %v1043, 1.0
        %v1062 = vadd.f32 %v1045, 1.0
        %v1063 = vadd.f32 %v1047, 1.0
        %v1064 = vrcp.pop %v1048
        %v1065 = vmul.f32 1.0, %v1064
        %v1066 = vrcp.pop %v1049
        %v1067 = vmul.f32 1.0, %v1066
        %v1068 = vrcp.pop %v1050
        %v1069 = vmul.f32 1.0, %v1068
        %v1070 = vrcp.pop %v1051
        %v1071 = vmul.f32 1.0, %v1070
        %v1072 = vrcp.pop %v1052
        %v1073 = vmul.f32 1.0, %v1072
        %v1074 = vrcp.pop %v1053
        %v1075 = vmul.f32 1.0, %v1074
        %v1076 = vrcp.pop %v1054
        %v1077 = vmul.f32 1.0, %v1076
        %v1078 = vrcp.pop %v1055
        %v1079 = vmul.f32 1.0, %v1078
        %v1080 = vrcp.pop %v1056
        %v1081 = vmul.f32 1.0, %v1080
        %v1082 = vrcp.pop %v1057
        %v1083 = vmul.f32 1.0, %v1082
        %v1084 = vrcp.pop %v1058
        %v1085 = vmul.f32 1.0, %v1084
        %v1086 = vrcp.pop %v1059
        %v1087 = vmul.f32 1.0, %v1086
        %v1088 = vrcp.pop %v1060
        %v1089 = vmul.f32 1.0, %v1088
        %v1090 = vrcp.pop %v1061
        %v1091 = vmul.f32 1.0, %v1090
        %v1092 = vrcp.pop %v1062
        %v1093 = vmul.f32 1.0, %v1092
        %v1094 = vrcp.pop %v1063
        %v1095 = vmul.f32 1.0, %v1094
        %v1096 = vmul.f32 %v968, %v1065
        %v1097 = vmul.f32 %v969, %v1067
        %v1098 = vmul.f32 %v970, %v1069
        %v1099 = vmul.f32 %v971, %v1071
        %v1100 = vmul.f32 %v972, %v1073
        %v1101 = vmul.f32 %v973, %v1075
        %v1102 = vmul.f32 %v974, %v1077
        %v1103 = vmul.f32 %v975, %v1079
        %v1104 = vmul.f32 %v976, %v1081
        %v1105 = vmul.f32 %v977, %v1083
        %v1106 = vmul.f32 %v978, %v1085
        %v1107 = vmul.f32 %v979, %v1087
        %v1108 = vmul.f32 %v980, %v1089
        %v1109 = vmul.f32 %v981, %v1091
        %v1110 = vmul.f32 %v982, %v1093
        %v1111 = vmul.f32 %v983, %v1095
        %v1112 = vld [vmem:[%s7] sm:$0xf]
        %v1113 = vld [vmem:[%s7 + $0x4] sm:$0xf]
        %v1114 = vpack.c.bf16 %v1097, %v1096
        %v1115 = vpack.c.bf16 %v1099, %v1098
        %v1116 = vpack.c.bf16 %v1101, %v1100
        %v1117 = vpack.c.bf16 %v1103, %v1102
        %v1118 = vpack.c.bf16 %v1105, %v1104
        %v1119 = vpack.c.bf16 %v1107, %v1106
        %v1120 = vpack.c.bf16 %v1109, %v1108
        %v1121 = vpack.c.bf16 %v1111, %v1110
        %v1122 = vld [vmem:[%s8] sm:$0x1]
        %v1124 = vlaneseq
        %v1125 = vshrl.u32 %v1124, 7
        %v1126 = vsub.s32 0, %v1125
        %v1127 = vrot.slane %v1122, %v1126
        %v1131 = vunpack.c.l.b16 %v1112
        %v1132 = vunpack.c.l.b16 %v1113
        %v1133 = vpack.c.b16 %v1132, %v1131
        %v1136 = vsel %vm796, %v1114, 0
        %v1139 = vsel %vm796, %v1115, 0
        %v1142 = vsel %vm796, %v1116, 0
        %v1145 = vsel %vm796, %v1117, 0
        %v1148 = vsel %vm796, %v1118, 0
        %v1151 = vsel %vm796, %v1119, 0
        %v1154 = vsel %vm796, %v1120, 0
        %v1157 = vsel %vm796, %v1121, 0
        %1159 = vmatprep.subr.bf16.mxu0 0
        %1160 = vmatpush1.bf16.msra.mxu0 0
        %1161 = vmatprep.subr.bf16.mxu0 0
        %1162 = vmatpush1.bf16.msra.mxu0 0
        %1163 = vmatprep.subr.bf16.mxu0 0
        %1164 = vmatpush1.bf16.msra.mxu0 0
        %1165 = vmatprep.subr.bf16.mxu0 0
        %1166 = vmatpush1.bf16.msra.mxu0 0
        %1167 = vmatprep.subr.bf16.mxu0 0
        %1168 = vmatpush1.bf16.msra.mxu0 0
        %1169 = vmatprep.subr.bf16.mxu0 0
        %1170 = vmatpush1.bf16.msra.mxu0 0
        %1171 = vmatprep.subr.bf16.mxu0 0
        %1172 = vmatpush1.bf16.msra.mxu0 0
        %1173 = vmatprep.subr.bf16.mxu0 0
        %1174 = vmatpush1.bf16.msra.mxu0 %v1133
        %1175 = vmatprep.subr.bf16.mxu0 0
        %1176 = vmatpush2.bf16.msra.mxu0 0
        %1177 = vmatprep.subr.bf16.mxu0 0
        %1178 = vmatpush2.bf16.msra.mxu0 0
        %1179 = vmatprep.subr.bf16.mxu0 0
        %1180 = vmatpush2.bf16.msra.mxu0 0
        %1181 = vmatprep.subr.bf16.mxu0 0
        %1182 = vmatpush2.bf16.msra.mxu0 0
        %1183 = vmatprep.subr.bf16.mxu0 0
        %1184 = vmatpush2.bf16.msra.mxu0 0
        %1185 = vmatprep.subr.bf16.mxu0 0
        %1186 = vmatpush2.bf16.msra.mxu0 0
        %1187 = vmatprep.subr.bf16.mxu0 0
        %1188 = vmatpush2.bf16.msra.mxu0 0
        %1189 = vmatprep.subr.bf16.mxu0 0
        %1190 = vmatpush2.bf16.msra.mxu0 0
        %1191 = vmatprep.mubr.bf16.mxu0 0
        %1192 = vmatmul.mubr.bf16.gmra.mxu0 %v1136
        %v1193 = vpop.f32.mrf.mxu0
        %v1194 = vadd.f32 %v1127, %v1193
        %v1195 = vpop.f32.mrf.mxu0
        %v1196 = vpop.f32.mrf.mxu0
        %v1197 = vadd.f32 %v1127, %v1196
        %v1198 = vpop.f32.mrf.mxu0
        %1199 = vmatprep.mubr.bf16.mxu0 0
        %1200 = vmatmul.mubr.bf16.gmra.mxu0 %v1139
        %v1201 = vpop.f32.mrf.mxu0
        %v1202 = vadd.f32 %v1127, %v1201
        %v1203 = vpop.f32.mrf.mxu0
        %v1204 = vpop.f32.mrf.mxu0
        %v1205 = vadd.f32 %v1127, %v1204
        %v1206 = vpop.f32.mrf.mxu0
        %1207 = vmatprep.mubr.bf16.mxu0 0
        %1208 = vmatmul.mubr.bf16.gmra.mxu0 %v1142
        %v1209 = vpop.f32.mrf.mxu0
        %v1210 = vadd.f32 %v1127, %v1209
        %v1211 = vpop.f32.mrf.mxu0
        %v1212 = vpop.f32.mrf.mxu0
        %v1213 = vadd.f32 %v1127, %v1212
        %v1214 = vpop.f32.mrf.mxu0
        %1215 = vmatprep.mubr.bf16.mxu0 0
        %1216 = vmatmul.mubr.bf16.gmra.mxu0 %v1145
        %v1217 = vpop.f32.mrf.mxu0
        %v1218 = vadd.f32 %v1127, %v1217
        %v1219 = vpop.f32.mrf.mxu0
        %v1220 = vpop.f32.mrf.mxu0
        %v1221 = vadd.f32 %v1127, %v1220
        %v1222 = vpop.f32.mrf.mxu0
        %1223 = vmatprep.mubr.bf16.mxu0 0
        %1224 = vmatmul.mubr.bf16.gmra.mxu0 %v1148
        %v1225 = vpop.f32.mrf.mxu0
        %v1226 = vadd.f32 %v1127, %v1225
        %v1227 = vpop.f32.mrf.mxu0
        %v1228 = vpop.f32.mrf.mxu0
        %v1229 = vadd.f32 %v1127, %v1228
        %v1230 = vpop.f32.mrf.mxu0
        %1231 = vmatprep.mubr.bf16.mxu0 0
        %1232 = vmatmul.mubr.bf16.gmra.mxu0 %v1151
        %v1233 = vpop.f32.mrf.mxu0
        %v1234 = vadd.f32 %v1127, %v1233
        %v1235 = vpop.f32.mrf.mxu0
        %v1236 = vpop.f32.mrf.mxu0
        %v1237 = vadd.f32 %v1127, %v1236
        %v1238 = vpop.f32.mrf.mxu0
        %1239 = vmatprep.mubr.bf16.mxu0 0
        %1240 = vmatmul.mubr.bf16.gmra.mxu0 %v1154
        %v1241 = vpop.f32.mrf.mxu0
        %v1242 = vadd.f32 %v1127, %v1241
        %v1243 = vpop.f32.mrf.mxu0
        %v1244 = vpop.f32.mrf.mxu0
        %v1245 = vadd.f32 %v1127, %v1244
        %v1246 = vpop.f32.mrf.mxu0
        %1247 = vmatprep.mubr.bf16.mxu0 0
        %1248 = vmatmul.mubr.bf16.gmra.mxu0 %v1157
        %v1249 = vpop.f32.mrf.mxu0
        %v1250 = vadd.f32 %v1127, %v1249
        %v1251 = vpop.f32.mrf.mxu0
        %v1252 = vpop.f32.mrf.mxu0
        %v1253 = vadd.f32 %v1127, %v1252
        %v1254 = vpop.f32.mrf.mxu0
        %1255 = vdwg.mxu0
        %1256 = vst.msk [vmem:[%s368] sm:$0xff] %vm388, %v1194
        %1257 = vst.msk [vmem:[%s368 + $0x8] sm:$0xff] %vm388, %v1197
        %1258 = vst.msk [vmem:[%s368 + $0x10] sm:$0xff] %vm388, %v1202
        %1259 = vst.msk [vmem:[%s368 + $0x18] sm:$0xff] %vm388, %v1205
        %1260 = vst.msk [vmem:[%s368 + $0x20] sm:$0xff] %vm388, %v1210
        %1261 = vst.msk [vmem:[%s368 + $0x28] sm:$0xff] %vm388, %v1213
        %1262 = vst.msk [vmem:[%s368 + $0x30] sm:$0xff] %vm388, %v1218
        %1263 = vst.msk [vmem:[%s368 + $0x38] sm:$0xff] %vm388, %v1221
        %1264 = vst.msk [vmem:[%s368 + $0x40] sm:$0xff] %vm388, %v1226
        %1265 = vst.msk [vmem:[%s368 + $0x48] sm:$0xff] %vm388, %v1229
        %1266 = vst.msk [vmem:[%s368 + $0x50] sm:$0xff] %vm388, %v1234
        %1267 = vst.msk [vmem:[%s368 + $0x58] sm:$0xff] %vm388, %v1237
        %1268 = vst.msk [vmem:[%s368 + $0x60] sm:$0xff] %vm388, %v1242
        %1269 = vst.msk [vmem:[%s368 + $0x68] sm:$0xff] %vm388, %v1245
        %1270 = vst.msk [vmem:[%s368 + $0x70] sm:$0xff] %vm388, %v1250
        %1271 = vst.msk [vmem:[%s368 + $0x78] sm:$0xff] %vm388, %v1253
        %s1272 = sand.u32 %s244, 1
        %s1273 = scalar_lea.sflag [#allocation5], %s1272
        %s1274 = sand.u32 %s244, 1
        %s1275 = smul.addr %s1274, 128
        %s1276 = scalar_lea.vmem [#allocation6], %s1275
        // Predicated region
        $region61: #{tpu_custom_call.1} parent=55 // pred_check
          %p1277 = pneg %p254
        $region62: #{tpu_custom_call.1} parent=55 // pred_check_branch
          %1279 = sbr.rel (%p1277) target = $region64
        $region63: #{tpu_custom_call.1} parent=55 // pred_region
          %s1280 = smul.u32 2, %s31
          %s1282 = ssub.s32 2048, 2048
          %1283 = vsyncadd %s1273, %s1282
          %s1284 = smul.addr %s30, 16
          %s1285 = sadd.s32 %s1280, %s1284
          %s1286 = smul.addr %s1285, 128
          %s1287 = scalar_lea.hbm %s9, %s1286
          %s1288 = sshll.u32 %s1276, 4
          %s1289 = int_to_ptr.vmem [resolvable:$true] %s1288
          %1294 = dma.vmem_to_hbm [thread:$0]  %s1289, 2048, %s1287, %s1273, 128, 128, 8
        $region64: #{tpu_custom_call.1} parent=55 // pred_fallthru
          _
      $region56: #{tpu_custom_call.1} parent=5 // pred_fallthru
        _
      %p1295 = scmp.le.s32.totalorder 2, %s21
      // Predicated region
      $region65: #{tpu_custom_call.1} parent=5 // pred_check
        %p1296 = pneg %p1295
      $region66: #{tpu_custom_call.1} parent=5 // pred_check_branch
        %1298 = sbr.rel (%p1296) target = $region68
      $region67: #{tpu_custom_call.1} parent=5 // pred_region
        %s1299 = ssub.s32 %s21, 2
        // Predicated region
        $region69: #{tpu_custom_call.1} parent=67 // pred_check
          %p1300 = pneg %p260
        $region70: #{tpu_custom_call.1} parent=67 // pred_check_branch
          %1302 = sbr.rel (%p1300) target = $region72
        $region71: #{tpu_custom_call.1} parent=67 // pred_region
          %s1303 = sand.u32 %s245, 1
          %s1304 = scalar_lea.sflag [#allocation5], %s1303
          %s1305 = sand.u32 %s245, 1
          %s1306 = smul.addr %s1305, 128
          %s1307 = scalar_lea.vmem [#allocation6], %s1306
          %1308 = dma.done %s1304, 2048
        $region72: #{tpu_custom_call.1} parent=67 // pred_fallthru
          _
      $region68: #{tpu_custom_call.1} parent=5 // pred_fallthru
        _
    $region6: #{tpu_custom_call.1} parent=1 // loop_footer
      %s25 = sadd.s32 1, %s21
    $region7: #{tpu_custom_call.1} parent=1 // loop_footer_branch
      %20 = sbr.rel target = $region3
    $region8: #{tpu_custom_call.1} parent=1 // loop_exit
      _
    %1309 = vsyncpa [#allocation4], 1
    %s1310 = scalar_lea.sflag [#allocation4], 1
    %1311 = vsyncpa %s1310, 1
    %1312 = vsyncpa [#allocation5], 1
    %s1313 = scalar_lea.sflag [#allocation5], 1
    %1314 = vsyncpa %s1313, 1

</llo_original>
